<compile_context>
chip_gen: v5e
topology: v5e:2x2
jax: 0.10.0
libtpu: 0.0.40
codegen_flags: <defaults>
</compile_context>

<pallas_src>
import jax
import jax.numpy as jnp
from jax.experimental import pallas as pl
from jax.experimental.pallas import tpu as pltpu

CLIP_RESOLUTION = (768, 768)  # hard-coded in SED.__init__

# Deterministic buffer values (standard detectron2 / CLIP pixel stats).
PIXEL_MEAN      = (123.675, 116.28, 103.53)
PIXEL_STD       = (58.395, 57.12, 57.375)
CLIP_PIXEL_MEAN = (122.7709383, 116.7460125, 104.09373615)
CLIP_PIXEL_STD  = (68.5005327, 66.6321579, 70.32316305)

_MIB = 1024 * 1024


def _vmem_capacity_bytes():
    """Physical VMEM per TensorCore; conservative 64 MiB (v7x) fallback."""
    try:
        return int(pltpu.get_tpu_info().vmem_capacity_bytes)
    except Exception:
        return 64 * _MIB


def _pick_tile(n, pref):
    """Largest divisor of n that is <= pref and a multiple of 16 (else n)."""
    for t in range(min(n, pref), 0, -1):
        if n % t == 0 and (t % 16 == 0 or t == n):
            return t
    return n


def _interp_matrix(out_size, in_size):
    """(out_size, in_size) row-stochastic matrix reproducing PyTorch's
    F.interpolate(mode='bilinear', align_corners=False) along one axis."""
    i = jnp.arange(out_size, dtype=jnp.float32)
    src = (i + 0.5) * (in_size / out_size) - 0.5
    src = jnp.maximum(src, 0.0)                       # PyTorch clamps src >= 0
    i0 = jnp.clip(jnp.floor(src).astype(jnp.int32), 0, in_size - 1)
    i1 = jnp.minimum(i0 + 1, in_size - 1)
    w1 = src - i0.astype(jnp.float32)
    w0 = 1.0 - w1
    eye = jnp.eye(in_size, dtype=jnp.float32)
    return eye[i0] * w0[:, None] + eye[i1] * w1[:, None]


# ---------------------------------------------------------------------------
# Kernel 1: bilinear resize (separable bf16 MXU matmuls, f32 accumulate) with
# CLIP normalization applied in the output epilogue:
#     out[c] = (Wh_tile @ x[c] @ Ww^T - clip_mean[c]) * clip_inv_std[c]
# ---------------------------------------------------------------------------
def _resize_norm_kernel(x_ref, wh_ref, wwt_ref, cm_ref, cinv_ref, o_ref):
    # x_ref:   (1, C, Hin, Win) bf16  raw image block (index constant over h
    #                                 ⇒ fetched once per image)
    # wh_ref:  (TH, Hin)        bf16  row-interpolation tile
    # wwt_ref: (Win, Wout)      bf16  column-interpolation matrix (constant)
    # cm_ref, cinv_ref: (C,)    f32   SMEM scalar tables (mean, 1/std)
    # o_ref:   (1, C, TH, Wout)
    C = x_ref.shape[1]
    wh = wh_ref[...]                       # hoisted out of the channel loop
    wwt = wwt_ref[...]
    for c in range(C):                     # C small & static -> unrolled
        # Both matmuls run native bf16 on the MXU with f32 accumulation.
        tmp = jnp.dot(wh, x_ref[0, c], preferred_element_type=jnp.float32)
        res = jnp.dot(tmp.astype(jnp.bfloat16), wwt,
                      preferred_element_type=jnp.float32)
        # Output-side normalization: exact because both interpolation matrices
        # are row-stochastic; touches only TH*Wout elements once per tile.
        o_ref[0, c] = ((res - cm_ref[c]) * cinv_ref[c]).astype(o_ref.dtype)


def clip_normalize_and_resize(x, clip_mean, clip_inv_std, out_hw, *,
                              th=None, out_dtype=jnp.float32):
    B, C, Hin, Win = x.shape
    Hout, Wout = out_hw
    cap = _vmem_capacity_bytes()

    # bf16 operands: ~3x MXU throughput on v6e/v7x, halved input HBM traffic,
    # halved full-image VMEM buffer.  Accumulation stays f32 in-kernel.
    x_bf = x.astype(jnp.bfloat16)
    wh = _interp_matrix(Hout, Hin).astype(jnp.bfloat16)        # (Hout, Hin)
    wwt = _interp_matrix(Wout, Win).T.astype(jnp.bfloat16)     # (Win, Wout)
    clip_mean = jnp.asarray(clip_mean, jnp.float32).reshape(C)
    clip_inv_std = jnp.asarray(clip_inv_std, jnp.float32).reshape(C)

    if th is None:
        # Bigger h-tiles on 128 MiB parts (v5e/v6e), 256 on 64 MiB v7x.
        th = _pick_tile(Hout, 256 if cap <= 96 * _MIB else 384)
    grid = (B, Hout // th)

    out_bytes = jnp.dtype(out_dtype).itemsize
    # Per-step working set: double-buffered blocks + in-kernel temporaries.
    vmem_est = (
        2 * 2 * C * Hin * Win              # x block (bf16, 2 bufs)
        + 2 * 2 * th * Hin                 # wh tile (bf16, 2 bufs)
        + 2 * 2 * Win * Wout               # wwt     (bf16, 2 bufs)
        + 2 * out_bytes * C * th * Wout    # output block (2 bufs)
        + 4 * th * (Win + Wout) * 2        # tmp / res f32 + bf16 temporaries
        + 4 * _MIB)                        # compiler-internal scratch slack
    vmem_limit = int(min(max(vmem_est, 32 * _MIB), cap - 12 * _MIB))

    smem_spec = pl.BlockSpec(memory_space=pltpu.MemorySpace.SMEM)
    return pl.pallas_call(
        _resize_norm_kernel,
        out_shape=jax.ShapeDtypeStruct((B, C, Hout, Wout), out_dtype),
        grid_spec=pltpu.PrefetchScalarGridSpec(
            num_scalar_prefetch=0,
            grid=grid,
            in_specs=[
                # Block index depends only on b -> fetched once per image.
                pl.BlockSpec((1, C, Hin, Win), lambda b, h: (b, 0, 0, 0)),
                pl.BlockSpec((th, Hin),        lambda b, h: (h, 0)),
                # Constant index_map -> DMA'd only once across the whole grid.
                pl.BlockSpec((Win, Wout),      lambda b, h: (0, 0)),
                smem_spec, smem_spec,
            ],
            out_specs=pl.BlockSpec((1, C, th, Wout),
                                   lambda b, h: (b, 0, h, 0)),
        ),
        compiler_params=pltpu.CompilerParams(
            # h axis "arbitrary" so a v7x megacore split shards the batch axis
            # and both cores don't re-DMA the same full image.
            dimension_semantics=("parallel", "arbitrary"),
            vmem_limit_bytes=vmem_limit),
    )(x_bf, wh, wwt, clip_mean, clip_inv_std)


# ---------------------------------------------------------------------------
# Kernel 2: standalone per-channel normalization (H-tiled, SMEM scalar params).
# The reference forward computes this with pixel_mean/pixel_std but never
# consumes the result, so sed_forward only runs it on request.
# ---------------------------------------------------------------------------
def _normalize_kernel(x_ref, mean_ref, inv_ref, o_ref):
    # x_ref/o_ref: (1, C, TH, W) f32; mean_ref/inv_ref: (C,) f32 in SMEM.
    C = x_ref.shape[1]
    for c in range(C):                     # C small & static -> unrolled
        o_ref[0, c] = (x_ref[0, c] - mean_ref[c]) * inv_ref[c]


def normalize_images(x, mean, inv_std, *, th=None):
    B, C, H, W = x.shape
    cap = _vmem_capacity_bytes()
    # Keep 2 input + 2 output double-buffered f32 blocks within ~24 MiB so the
    # kernel also fits comfortably on v5e for wide images.
    budget = 24 * _MIB
    max_th = max(8, budget // (16 * C * W))
    if th is None:
        th = _pick_tile(H, int(min(512, max_th)))
    grid = (B, H // th)
    mean = jnp.asarray(mean, jnp.float32).reshape(C)
    inv_std = jnp.asarray(inv_std, jnp.float32).reshape(C)

    vmem_est = 16 * C * th * W + 4 * _MIB      # 4 buffers * 4 bytes + slack
    vmem_limit = int(min(max(vmem_est, 16 * _MIB), cap - 12 * _MIB))

    img_spec = pl.BlockSpec((1, C, th, W), lambda b, h: (b, 0, h, 0))
    smem_spec = pl.BlockSpec(memory_space=pltpu.MemorySpace.SMEM)
    return pl.pallas_call(
        _normalize_kernel,
        out_shape=jax.ShapeDtypeStruct((B, C, H, W), jnp.float32),
        grid_spec=pltpu.PrefetchScalarGridSpec(
            num_scalar_prefetch=0,
            grid=grid,
            in_specs=[img_spec, smem_spec, smem_spec],
            out_specs=img_spec,
        ),
        compiler_params=pltpu.CompilerParams(
            dimension_semantics=("parallel", "parallel"),
            vmem_limit_bytes=vmem_limit),
    )(x, mean, inv_std)


# ---------------------------------------------------------------------------
# SED.forward
# ---------------------------------------------------------------------------
def sed_forward(images, *, compute_pixel_normalized=False,
                clip_features_dtype=jnp.float32):
    """images: (B, C, H, W) float32 stack of same-size images (NCHW).
    Returns (processed_results, clip_features) like SED.forward."""
    clip_mean = jnp.asarray(CLIP_PIXEL_MEAN, dtype=jnp.float32)
    clip_inv_std = 1.0 / jnp.asarray(CLIP_PIXEL_STD, dtype=jnp.float32)

    # F.interpolate((x - clip_mean)/clip_std, size=(768, 768), mode='bilinear',
    #               align_corners=False) — normalization fused (output epilogue).
    clip_images = clip_normalize_and_resize(
        images, clip_mean, clip_inv_std, CLIP_RESOLUTION,
        out_dtype=clip_features_dtype)

    if compute_pixel_normalized:
        # The reference forward materializes (x - pixel_mean)/pixel_std but
        # never uses it; dead work is skipped by default.
        pix_mean = jnp.asarray(PIXEL_MEAN, dtype=jnp.float32)
        pix_inv_std = 1.0 / jnp.asarray(PIXEL_STD, dtype=jnp.float32)
        _ = normalize_images(images, pix_mean, pix_inv_std)

    # TODO(synk): clip_features = sem_seg_head.predictor.clip_model.encode_image(
    #     clip_images, dense=True)  — external CLIP ViT, not part of this module.
    clip_features = clip_images

    processed_results = []
    return processed_results, clip_features


if __name__ == "__main__":
    key = jax.random.PRNGKey(0)
    B, C, H, W = 2, 3, 16, 16
    images = jax.random.uniform(
        key, (B, C, H, W), dtype=jnp.float32, minval=0.0, maxval=255.0)

    processed_results, clip_features = sed_forward(images)
    clip_features = jax.block_until_ready(clip_features)

    assert processed_results == []
    assert clip_features.shape == (B, C, CLIP_RESOLUTION[0], CLIP_RESOLUTION[1])
    assert clip_features.dtype == jnp.float32
    assert bool(jnp.all(jnp.isfinite(clip_features)))

    # Pure-JAX f32 reference for normalize + separable bilinear resize.
    # Tolerance loosened for the bf16 MXU operands (f32 accumulation).
    wh_ref = _interp_matrix(CLIP_RESOLUTION[0], H)
    wwt_ref = _interp_matrix(CLIP_RESOLUTION[1], W).T
    cm = jnp.asarray(CLIP_PIXEL_MEAN, jnp.float32).reshape(1, C, 1, 1)
    cs = jnp.asarray(CLIP_PIXEL_STD, jnp.float32).reshape(1, C, 1, 1)
    ref = jnp.einsum('oh,bchw,wt->bcot', wh_ref, (images - cm) / cs, wwt_ref,
                     precision=jax.lax.Precision.HIGHEST)
    assert bool(jnp.allclose(clip_features, ref, atol=1e-1, rtol=1e-2))

    # Exercise the (reference-dead, optional) pixel-stats normalize kernel once.
    pix_norm = normalize_images(
        images,
        jnp.asarray(PIXEL_MEAN, jnp.float32),
        1.0 / jnp.asarray(PIXEL_STD, jnp.float32))
    pix_norm = jax.block_until_ready(pix_norm)
    pix_ref = (images - jnp.asarray(PIXEL_MEAN, jnp.float32).reshape(1, C, 1, 1)) \
        / jnp.asarray(PIXEL_STD, jnp.float32).reshape(1, C, 1, 1)
    assert bool(jnp.allclose(pix_norm, pix_ref, atol=1e-4, rtol=1e-5))

    print("KERNEL_OK")
</pallas_src>

<mosaic_0001>
module attributes {stable_mosaic.version = 11 : i64} {
  func.func @_resize_norm_kernel(%arg0: i32, %arg1: i32, %arg2: memref<1x3x16x16xbf16, #tpu.memory_space<vmem>>, %arg3: memref<256x16xbf16, #tpu.memory_space<vmem>>, %arg4: memref<16x768xbf16, #tpu.memory_space<vmem>>, %arg5: memref<3xf32, #tpu.memory_space<smem>>, %arg6: memref<3xf32, #tpu.memory_space<smem>>, %arg7: memref<1x3x256x768xf32, #tpu.memory_space<vmem>>) attributes {dimension_semantics = [#tpu.dimension_semantics<parallel>, #tpu.dimension_semantics<arbitrary>], iteration_bounds = array<i64: 2, 3>, scalar_prefetch = 0 : i64, scratch_operands = 0 : i64, tpu.core_type = #tpu.core_type<tc>, window_params = [{transform_indices = @transform_0, window_bounds = array<i64: 1, 3, 16, 16>}, {transform_indices = @transform_1, window_bounds = array<i64: 256, 16>}, {pipeline_mode = #tpu.pipeline_mode<synchronous>, transform_indices = @transform_2, window_bounds = array<i64: 16, 768>}, {transform_indices = @transform_3, window_bounds = array<i64: 3>}, {transform_indices = @transform_4, window_bounds = array<i64: 3>}, {transform_indices = @transform_5, window_bounds = array<i64: 1, 3, 256, 768>}]} {
    %c0 = arith.constant 0 : index
    %c0_0 = arith.constant 0 : index
    %0 = vector.load %arg3[%c0, %c0_0] : memref<256x16xbf16, #tpu.memory_space<vmem>>, vector<256x16xbf16>
    %c0_1 = arith.constant 0 : index
    %c0_2 = arith.constant 0 : index
    %1 = vector.load %arg4[%c0_1, %c0_2] : memref<16x768xbf16, #tpu.memory_space<vmem>>, vector<16x768xbf16>
    %c0_3 = arith.constant 0 : index
    %c0_4 = arith.constant 0 : index
    %c0_5 = arith.constant 0 : index
    %c0_6 = arith.constant 0 : index
    %2 = vector.load %arg2[%c0_3, %c0_4, %c0_5, %c0_6] : memref<1x3x16x16xbf16, #tpu.memory_space<vmem>>, vector<1x1x16x16xbf16>
    %3 = vector.shape_cast %2 : vector<1x1x16x16xbf16> to vector<16x16xbf16>
    %cst = arith.constant dense<0.000000e+00> : vector<256x16xf32>
    %4 = tpu.matmul %0, %3, %cst {dimension_numbers = #tpu.dot_dimension_numbers<[1], [0], [0], [1], [0, 0, 1, 1], [], []>} : vector<256x16xbf16>, vector<16x16xbf16>, vector<256x16xf32> -> vector<256x16xf32>
    %5 = arith.truncf %4 : vector<256x16xf32> to vector<256x16xbf16>
    %cst_7 = arith.constant dense<0.000000e+00> : vector<256x768xf32>
    %6 = tpu.matmul %5, %1, %cst_7 {dimension_numbers = #tpu.dot_dimension_numbers<[1], [0], [0], [1], [0, 0, 1, 1], [], []>} : vector<256x16xbf16>, vector<16x768xbf16>, vector<256x768xf32> -> vector<256x768xf32>
    %c0_8 = arith.constant 0 : index
    %7 = memref.load %arg5[%c0_8] : memref<3xf32, #tpu.memory_space<smem>>
    %8 = vector.broadcast %7 : f32 to vector<256x768xf32>
    %9 = arith.subf %6, %8 : vector<256x768xf32>
    %c0_9 = arith.constant 0 : index
    %10 = memref.load %arg6[%c0_9] : memref<3xf32, #tpu.memory_space<smem>>
    %11 = vector.broadcast %10 : f32 to vector<256x768xf32>
    %12 = arith.mulf %9, %11 : vector<256x768xf32>
    %c0_10 = arith.constant 0 : index
    %c0_11 = arith.constant 0 : index
    %c0_12 = arith.constant 0 : index
    %c0_13 = arith.constant 0 : index
    %13 = vector.load %arg7[%c0_10, %c0_11, %c0_12, %c0_13] : memref<1x3x256x768xf32, #tpu.memory_space<vmem>>, vector<1x1x256x768xf32>
    %14 = vector.shape_cast %13 : vector<1x1x256x768xf32> to vector<256x768xf32>
    %15 = vector.shape_cast %12 : vector<256x768xf32> to vector<1x1x256x768xf32>
    tpu.vector_store %arg7[%c0_10, %c0_11, %c0_12, %c0_13], %15 {strides = array<i32>} : memref<1x3x256x768xf32, #tpu.memory_space<vmem>>, vector<1x1x256x768xf32>,
    %c0_14 = arith.constant 0 : index
    %c1 = arith.constant 1 : index
    %c0_15 = arith.constant 0 : index
    %c0_16 = arith.constant 0 : index
    %16 = vector.load %arg2[%c0_14, %c1, %c0_15, %c0_16] : memref<1x3x16x16xbf16, #tpu.memory_space<vmem>>, vector<1x1x16x16xbf16>
    %17 = vector.shape_cast %16 : vector<1x1x16x16xbf16> to vector<16x16xbf16>
    %cst_17 = arith.constant dense<0.000000e+00> : vector<256x16xf32>
    %18 = tpu.matmul %0, %17, %cst_17 {dimension_numbers = #tpu.dot_dimension_numbers<[1], [0], [0], [1], [0, 0, 1, 1], [], []>} : vector<256x16xbf16>, vector<16x16xbf16>, vector<256x16xf32> -> vector<256x16xf32>
    %19 = arith.truncf %18 : vector<256x16xf32> to vector<256x16xbf16>
    %cst_18 = arith.constant dense<0.000000e+00> : vector<256x768xf32>
    %20 = tpu.matmul %19, %1, %cst_18 {dimension_numbers = #tpu.dot_dimension_numbers<[1], [0], [0], [1], [0, 0, 1, 1], [], []>} : vector<256x16xbf16>, vector<16x768xbf16>, vector<256x768xf32> -> vector<256x768xf32>
    %c1_19 = arith.constant 1 : index
    %21 = memref.load %arg5[%c1_19] : memref<3xf32, #tpu.memory_space<smem>>
    %22 = vector.broadcast %21 : f32 to vector<256x768xf32>
    %23 = arith.subf %20, %22 : vector<256x768xf32>
    %c1_20 = arith.constant 1 : index
    %24 = memref.load %arg6[%c1_20] : memref<3xf32, #tpu.memory_space<smem>>
    %25 = vector.broadcast %24 : f32 to vector<256x768xf32>
    %26 = arith.mulf %23, %25 : vector<256x768xf32>
    %c0_21 = arith.constant 0 : index
    %c1_22 = arith.constant 1 : index
    %c0_23 = arith.constant 0 : index
    %c0_24 = arith.constant 0 : index
    %27 = vector.load %arg7[%c0_21, %c1_22, %c0_23, %c0_24] : memref<1x3x256x768xf32, #tpu.memory_space<vmem>>, vector<1x1x256x768xf32>
    %28 = vector.shape_cast %27 : vector<1x1x256x768xf32> to vector<256x768xf32>
    %29 = vector.shape_cast %26 : vector<256x768xf32> to vector<1x1x256x768xf32>
    tpu.vector_store %arg7[%c0_21, %c1_22, %c0_23, %c0_24], %29 {strides = array<i32>} : memref<1x3x256x768xf32, #tpu.memory_space<vmem>>, vector<1x1x256x768xf32>,
    %c0_25 = arith.constant 0 : index
    %c2 = arith.constant 2 : index
    %c0_26 = arith.constant 0 : index
    %c0_27 = arith.constant 0 : index
    %30 = vector.load %arg2[%c0_25, %c2, %c0_26, %c0_27] : memref<1x3x16x16xbf16, #tpu.memory_space<vmem>>, vector<1x1x16x16xbf16>
    %31 = vector.shape_cast %30 : vector<1x1x16x16xbf16> to vector<16x16xbf16>
    %cst_28 = arith.constant dense<0.000000e+00> : vector<256x16xf32>
    %32 = tpu.matmul %0, %31, %cst_28 {dimension_numbers = #tpu.dot_dimension_numbers<[1], [0], [0], [1], [0, 0, 1, 1], [], []>} : vector<256x16xbf16>, vector<16x16xbf16>, vector<256x16xf32> -> vector<256x16xf32>
    %33 = arith.truncf %32 : vector<256x16xf32> to vector<256x16xbf16>
    %cst_29 = arith.constant dense<0.000000e+00> : vector<256x768xf32>
    %34 = tpu.matmul %33, %1, %cst_29 {dimension_numbers = #tpu.dot_dimension_numbers<[1], [0], [0], [1], [0, 0, 1, 1], [], []>} : vector<256x16xbf16>, vector<16x768xbf16>, vector<256x768xf32> -> vector<256x768xf32>
    %c2_30 = arith.constant 2 : index
    %35 = memref.load %arg5[%c2_30] : memref<3xf32, #tpu.memory_space<smem>>
    %36 = vector.broadcast %35 : f32 to vector<256x768xf32>
    %37 = arith.subf %34, %36 : vector<256x768xf32>
    %c2_31 = arith.constant 2 : index
    %38 = memref.load %arg6[%c2_31] : memref<3xf32, #tpu.memory_space<smem>>
    %39 = vector.broadcast %38 : f32 to vector<256x768xf32>
    %40 = arith.mulf %37, %39 : vector<256x768xf32>
    %c0_32 = arith.constant 0 : index
    %c2_33 = arith.constant 2 : index
    %c0_34 = arith.constant 0 : index
    %c0_35 = arith.constant 0 : index
    %41 = vector.load %arg7[%c0_32, %c2_33, %c0_34, %c0_35] : memref<1x3x256x768xf32, #tpu.memory_space<vmem>>, vector<1x1x256x768xf32>
    %42 = vector.shape_cast %41 : vector<1x1x256x768xf32> to vector<256x768xf32>
    %43 = vector.shape_cast %40 : vector<256x768xf32> to vector<1x1x256x768xf32>
    tpu.vector_store %arg7[%c0_32, %c2_33, %c0_34, %c0_35], %43 {strides = array<i32>} : memref<1x3x256x768xf32, #tpu.memory_space<vmem>>, vector<1x1x256x768xf32>,
    return
  }
  func.func @transform_0(%arg0: i32, %arg1: i32) -> (i32, i32, i32, i32) {
    %c0_i32 = arith.constant 0 : i32
    %c0_i32_0 = arith.constant 0 : i32
    %c0_i32_1 = arith.constant 0 : i32
    %c0_i32_2 = arith.constant 0 : i32
    return %arg0, %c0_i32, %c0_i32_0, %c0_i32_1 : i32, i32, i32, i32
  }
  func.func @transform_1(%arg0: i32, %arg1: i32) -> (i32, i32) {
    %c0_i32 = arith.constant 0 : i32
    %c0_i32_0 = arith.constant 0 : i32
    return %arg1, %c0_i32 : i32, i32
  }
  func.func @transform_2(%arg0: i32, %arg1: i32) -> (i32, i32) {
    %c0_i32 = arith.constant 0 : i32
    %c0_i32_0 = arith.constant 0 : i32
    %c0_i32_1 = arith.constant 0 : i32
    return %c0_i32, %c0_i32_0 : i32, i32
  }
  func.func @transform_3(%arg0: i32, %arg1: i32) -> i32 {
    %c0_i32 = arith.constant 0 : i32
    %c0_i32_0 = arith.constant 0 : i32
    return %c0_i32 : i32
  }
  func.func @transform_4(%arg0: i32, %arg1: i32) -> i32 {
    %c0_i32 = arith.constant 0 : i32
    %c0_i32_0 = arith.constant 0 : i32
    return %c0_i32 : i32
  }
  func.func @transform_5(%arg0: i32, %arg1: i32) -> (i32, i32, i32, i32) {
    %c0_i32 = arith.constant 0 : i32
    %c0_i32_0 = arith.constant 0 : i32
    %c0_i32_1 = arith.constant 0 : i32
    return %arg0, %c0_i32, %arg1, %c0_i32_0 : i32, i32, i32, i32
  }
}

</mosaic_0001>

<llo_original>
// kernel: tpu_custom_call.1
$region0: #{tpu_custom_call.1}
  #allocation0 [shape = 'u32[]', space=smem, size = 0x4, offset = 0x4, fixed_abs, tag = 'smem constant byte address 0x4 - core index']
  #allocation1 [shape = 'u32[72,128]{1,0:T(1,128)}', space=vmem, size = 0x9000, scoped, tag = 'internal scratch']
  #allocation12 [shape = 's32[]', space=sflag, size = 0x4, offset = 0, fixed_abs, tag = 'sflag constant byte address 0x0 - dummy sync flag']
  %s0 = inlined_call_operand.hbm [shape: bf16[2,3,16,16], index: 0, kind: input, shape index: {}]
  %s1 = inlined_call_operand.vmem [shape: bf16[768,16], index: 1, kind: input, shape index: {}]
  %s2 = inlined_call_operand.hbm [shape: bf16[16,768], index: 2, kind: input, shape index: {}]
  %s3 = inlined_call_operand.hbm [shape: f32[3], index: 3, kind: input, shape index: {}]
  %s4 = inlined_call_operand.hbm [shape: f32[3], index: 4, kind: input, shape index: {}]
  %s5 = inlined_call_operand.hbm [shape: f32[2,3,768,768], index: 5, kind: output, shape index: {}]
  %s6 = sld [smem:[#allocation0]]
  $region69: #{tpu_custom_call.1} parent=0
    _
  %s8 = ssub.s32 1, %s6
  %s9 = scalar_select 0, %s8, %s6
  $region1: #{tpu_custom_call.1} parent=0
    #allocation2 [shape = 'u8[24576]{0}', space=vmem, size = 0x6000, scoped, tag = 'input window, operand 0']
    #allocation3 [shape = 's32[2]{0}', space=sflag, size = 0x8, scoped, tag = 'scoped memory for tpu_custom_call.1']
    #allocation4 [shape = 's32[2]{0}', space=sflag, size = 0x8, scoped, tag = 'scoped memory for tpu_custom_call.1']
    #allocation5 [shape = 's32[2]{0}', space=sflag, size = 0x8, scoped, tag = 'scoped memory for tpu_custom_call.1']
    #allocation6 [shape = 'u8[24576]{0}', space=vmem, size = 0x6000, scoped, tag = 'input window, operand 2, single buffered']
    #allocation7 [shape = 's32[1]{0}', space=sflag, size = 0x4, scoped, tag = 'scoped memory for tpu_custom_call.1']
    #allocation8 [shape = 'u8[512]{0}', space=smem, size = 0x200, scoped, tag = 'input window, operand 3, single buffered']
    #allocation9 [shape = 'u8[512]{0}', space=smem, size = 0x200, scoped, tag = 'input window, operand 4, single buffered']
    #allocation10 [shape = 's32[1]{0}', space=sflag, size = 0x4, scoped, tag = 'scoped memory for tpu_custom_call.1']
    #allocation11 [shape = 'u8[4718592]{0}', space=vmem, size = 0x480000, scoped, tag = 'output window, operand 0']
    %10 = vsyncpa [#allocation3], 0
    %s11 = scalar_lea.sflag [#allocation3], 1
    %12 = vsyncpa %s11, 0
    %13 = vsyncpa [#allocation7], 0
    %14 = vsyncpa [#allocation5], 0
    %15 = vsyncpa [#allocation10], 0
    %16 = vsyncpa [#allocation4], 0
    %s17 = scalar_lea.sflag [#allocation4], 1
    %18 = vsyncpa %s17, 0
    loop: start=0, step=1, limit=8
    $region2: #{tpu_custom_call.1} parent=1 // loop_pre_header
      _
    $region3: #{tpu_custom_call.1} parent=1 // loop_header
      %s20 = sphi 0, %s24
      %p21 = scmp.ge.s32.totalorder %s20, 8
      %s27 = sphi 0, %s39
      %s28 = sphi 0, %s35
      %s29 = sphi 0, %s27
      %s30 = sphi 0, %s28
      %s31 = sphi 0, %s29
      %s32 = sphi 0, %s30
      %s42 = sphi 0, %s44
      %s45 = sphi 0, %s42
      %s46 = sphi 0, %s45
      %s62 = sphi 0, %s46
      %s68 = sphi 0, %s70
      %s71 = sphi 0, %s68
      %s72 = sphi 0, %s71
      %s88 = sphi 0, %s72
      %s92 = sphi 0, %s92
      %s94 = sphi 0, %s92
      %s95 = sphi 0, %s94
      %s109 = sphi 0, %s95
      %s113 = sphi 0, %s113
      %s115 = sphi 0, %s113
      %s116 = sphi 0, %s115
      %s130 = sphi 0, %s116
      %s134 = sphi 0, %s134
      %s136 = sphi 0, %s134
      %s137 = sphi 0, %s136
      %s151 = sphi 0, %s137
      %s159 = sphi 0, %s161
      %s162 = sphi 0, %s159
      %s163 = sphi 0, %s162
      %s179 = sphi 0, %s163
    $region4: #{tpu_custom_call.1} parent=1 // loop_header_branch
      %23 = sbr.rel (%p21) target = $region8
    $region5: #{tpu_custom_call.1} parent=1 // loop_body
      %s25 = ssub.s32 %s20, 1
      %s26 = ssub.s32 %s20, 2
      %s33 = sadd.s32 1, %s28
      %p34 = scmp.ge.s32.totalorder %s33, 3
      %s35 = scalar_select %p34, 0, %s33
      %s36 = sadd.s32 1, %s27
      %s37 = scalar_select %p34, %s36, %s27
      %p38 = scmp.ge.s32.totalorder %s37, 2
      %s39 = scalar_select %p38, 0, %s37
      %s40 = ssub.s32 %s27, %s39
      %p41 = scmp.eq.s32.totalorder %s40, 0
      %s43 = sadd.s32 %s42, 1
      %s44 = scalar_select %p41, %s42, %s43
      %p47 = pneg %p41
      %p48 = scmp.eq.s32.totalorder %s20, 5
      %p49 = por %p47, %p48
      %p50 = scmp.ne.s32.totalorder %s42, %s45
      %p51 = scmp.eq.s32.totalorder %s20, 0
      %p52 = por %p50, %p51
      %p53 = scmp.ne.s32.totalorder %s42, %s45
      %p54 = scmp.eq.s32.totalorder %s25, 5
      %p55 = por %p53, %p54
      %p56 = scmp.ne.s32.totalorder %s45, %s46
      %p57 = scmp.eq.s32.totalorder %s25, 0
      %p58 = por %p56, %p57
      %p59 = scmp.ne.s32.totalorder %s45, %s46
      %p60 = scmp.eq.s32.totalorder %s26, 5
      %p61 = por %p59, %p60
      %p63 = scmp.ne.s32.totalorder %s46, %s62
      %p64 = scmp.eq.s32.totalorder %s26, 0
      %p65 = por %p63, %p64
      %s66 = ssub.s32 %s28, %s35
      %p67 = scmp.eq.s32.totalorder %s66, 0
      %s69 = sadd.s32 %s68, 1
      %s70 = scalar_select %p67, %s68, %s69
      %p73 = pneg %p67
      %p74 = scmp.eq.s32.totalorder %s20, 5
      %p75 = por %p73, %p74
      %p76 = scmp.ne.s32.totalorder %s68, %s71
      %p77 = scmp.eq.s32.totalorder %s20, 0
      %p78 = por %p76, %p77
      %p79 = scmp.ne.s32.totalorder %s68, %s71
      %p80 = scmp.eq.s32.totalorder %s25, 5
      %p81 = por %p79, %p80
      %p82 = scmp.ne.s32.totalorder %s71, %s72
      %p83 = scmp.eq.s32.totalorder %s25, 0
      %p84 = por %p82, %p83
      %p85 = scmp.ne.s32.totalorder %s71, %s72
      %p86 = scmp.eq.s32.totalorder %s26, 5
      %p87 = por %p85, %p86
      %p89 = scmp.ne.s32.totalorder %s72, %s88
      %p90 = scmp.eq.s32.totalorder %s26, 0
      %p91 = por %p89, %p90
      %s93 = sadd.s32 %s92, 1
      %p96 = scmp.eq.s32.totalorder %s20, 5
      %p97 = scmp.ne.s32.totalorder %s92, %s94
      %p98 = scmp.eq.s32.totalorder %s20, 0
      %p99 = por %p97, %p98
      %p100 = scmp.ne.s32.totalorder %s92, %s94
      %p101 = scmp.eq.s32.totalorder %s25, 5
      %p102 = por %p100, %p101
      %p103 = scmp.ne.s32.totalorder %s94, %s95
      %p104 = scmp.eq.s32.totalorder %s25, 0
      %p105 = por %p103, %p104
      %p106 = scmp.ne.s32.totalorder %s94, %s95
      %p107 = scmp.eq.s32.totalorder %s26, 5
      %p108 = por %p106, %p107
      %p110 = scmp.ne.s32.totalorder %s95, %s109
      %p111 = scmp.eq.s32.totalorder %s26, 0
      %p112 = por %p110, %p111
      %s114 = sadd.s32 %s113, 1
      %p117 = scmp.eq.s32.totalorder %s20, 5
      %p118 = scmp.ne.s32.totalorder %s113, %s115
      %p119 = scmp.eq.s32.totalorder %s20, 0
      %p120 = por %p118, %p119
      %p121 = scmp.ne.s32.totalorder %s113, %s115
      %p122 = scmp.eq.s32.totalorder %s25, 5
      %p123 = por %p121, %p122
      %p124 = scmp.ne.s32.totalorder %s115, %s116
      %p125 = scmp.eq.s32.totalorder %s25, 0
      %p126 = por %p124, %p125
      %p127 = scmp.ne.s32.totalorder %s115, %s116
      %p128 = scmp.eq.s32.totalorder %s26, 5
      %p129 = por %p127, %p128
      %p131 = scmp.ne.s32.totalorder %s116, %s130
      %p132 = scmp.eq.s32.totalorder %s26, 0
      %p133 = por %p131, %p132
      %s135 = sadd.s32 %s134, 1
      %p138 = scmp.eq.s32.totalorder %s20, 5
      %p139 = scmp.ne.s32.totalorder %s134, %s136
      %p140 = scmp.eq.s32.totalorder %s20, 0
      %p141 = por %p139, %p140
      %p142 = scmp.ne.s32.totalorder %s134, %s136
      %p143 = scmp.eq.s32.totalorder %s25, 5
      %p144 = por %p142, %p143
      %p145 = scmp.ne.s32.totalorder %s136, %s137
      %p146 = scmp.eq.s32.totalorder %s25, 0
      %p147 = por %p145, %p146
      %p148 = scmp.ne.s32.totalorder %s136, %s137
      %p149 = scmp.eq.s32.totalorder %s26, 5
      %p150 = por %p148, %p149
      %p152 = scmp.ne.s32.totalorder %s137, %s151
      %p153 = scmp.eq.s32.totalorder %s26, 0
      %p154 = por %p152, %p153
      %s155 = ssub.s32 %s27, %s39
      %s156 = ssub.s32 %s28, %s35
      %s157 = sor.u32 %s155, %s156
      %p158 = scmp.eq.s32.totalorder %s157, 0
      %s160 = sadd.s32 %s159, 1
      %s161 = scalar_select %p158, %s159, %s160
      %p164 = pneg %p158
      %p165 = scmp.eq.s32.totalorder %s20, 5
      %p166 = por %p164, %p165
      %p167 = scmp.ne.s32.totalorder %s159, %s162
      %p168 = scmp.eq.s32.totalorder %s20, 0
      %p169 = por %p167, %p168
      %p170 = scmp.ne.s32.totalorder %s159, %s162
      %p171 = scmp.eq.s32.totalorder %s25, 5
      %p172 = por %p170, %p171
      %p173 = scmp.ne.s32.totalorder %s162, %s163
      %p174 = scmp.eq.s32.totalorder %s25, 0
      %p175 = por %p173, %p174
      %p176 = scmp.ne.s32.totalorder %s162, %s163
      %p177 = scmp.eq.s32.totalorder %s26, 5
      %p178 = por %p176, %p177
      %p180 = scmp.ne.s32.totalorder %s163, %s179
      %p181 = scmp.eq.s32.totalorder %s26, 0
      %p182 = por %p180, %p181
      %p183 = scmp.le.s32.totalorder 1, %s20
      %p184 = scmp.lt.s32.totalorder %s20, 7
      %p185 = pnand %p183, %p184
      %p186 = pneg %p185
      // Predicated region
      $region9: #{tpu_custom_call.1} parent=5 // pred_check
        _
      $region10: #{tpu_custom_call.1} parent=5 // pred_check_branch
        %188 = sbr.rel (%p185) target = $region12
      $region11: #{tpu_custom_call.1} parent=5 // pred_region
        %s189 = ssub.s32 %s20, 1
        // Predicated region
        $region13: #{tpu_custom_call.1} parent=11 // pred_check
          %p190 = pneg %p105
        $region14: #{tpu_custom_call.1} parent=11 // pred_check_branch
          %192 = sbr.rel (%p190) target = $region16
        $region15: #{tpu_custom_call.1} parent=11 // pred_region
          %194 = vsyncadd [#allocation7], 0
          %s195 = sshll.u32 %s2, 4
          %s196 = int_to_ptr.hbm [resolvable:$true] %s195
          %s197 = sshll.u32 [#allocation6], 4
          %s198 = int_to_ptr.vmem [resolvable:$true] %s197
          %203 = dma.hbm_to_vmem [thread:$0]  %s196, 768, %s198, [#allocation7], 384, 384, 24
        $region16: #{tpu_custom_call.1} parent=11 // pred_fallthru
          _
        // Predicated region
        $region17: #{tpu_custom_call.1} parent=11 // pred_check
          %p204 = pneg %p126
        $region18: #{tpu_custom_call.1} parent=11 // pred_check_branch
          %206 = sbr.rel (%p204) target = $region20
        $region19: #{tpu_custom_call.1} parent=11 // pred_region
          %208 = vsyncadd [#allocation5], 0
          %s210 = sshll.u32 %s3, 4
          %s211 = int_to_ptr.hbm [resolvable:$true] %s210
          %213 = dma.hbm_to_smem %s211, 16, [#allocation8], [#allocation5]
        $region20: #{tpu_custom_call.1} parent=11 // pred_fallthru
          _
        // Predicated region
        $region21: #{tpu_custom_call.1} parent=11 // pred_check
          %p214 = pneg %p147
        $region22: #{tpu_custom_call.1} parent=11 // pred_check_branch
          %216 = sbr.rel (%p214) target = $region24
        $region23: #{tpu_custom_call.1} parent=11 // pred_region
          %218 = vsyncadd [#allocation10], 0
          %s220 = sshll.u32 %s4, 4
          %s221 = int_to_ptr.hbm [resolvable:$true] %s220
          %223 = dma.hbm_to_smem %s221, 16, [#allocation9], [#allocation10]
        $region24: #{tpu_custom_call.1} parent=11 // pred_fallthru
          _
      $region12: #{tpu_custom_call.1} parent=5 // pred_fallthru
        _
      %p224 = scmp.lt.s32.totalorder %s20, 6
      // Predicated region
      $region25: #{tpu_custom_call.1} parent=5 // pred_check
        %p225 = pneg %p224
      $region26: #{tpu_custom_call.1} parent=5 // pred_check_branch
        %227 = sbr.rel (%p225) target = $region28
      $region27: #{tpu_custom_call.1} parent=5 // pred_region
        // Predicated region
        $region29: #{tpu_custom_call.1} parent=27 // pred_check
          %p228 = pneg %p52
        $region30: #{tpu_custom_call.1} parent=27 // pred_check_branch
          %230 = sbr.rel (%p228) target = $region32
        $region31: #{tpu_custom_call.1} parent=27 // pred_region
          %s231 = sand.u32 %s42, 1
          %s232 = scalar_lea.sflag [#allocation3], %s231
          %s233 = sand.u32 %s42, 1
          %s234 = smul.addr %s233, 24
          %s235 = scalar_lea.vmem [#allocation2], %s234
          %237 = vsyncadd %s232, 0
          %s238 = smul.addr %s27, 6
          %s239 = smul.addr %s238, 4
          %s240 = scalar_lea.hbm %s0, %s239
          %s241 = sshll.u32 %s240, 4
          %s242 = int_to_ptr.hbm [resolvable:$true] %s241
          %s243 = sshll.u32 %s235, 4
          %s244 = int_to_ptr.vmem [resolvable:$true] %s243
          %249 = dma.hbm_to_vmem [thread:$0]  %s242, 384, %s244, %s232, 64, 64, 4
        $region32: #{tpu_custom_call.1} parent=27 // pred_fallthru
          _
        // Predicated region
        $region33: #{tpu_custom_call.1} parent=27 // pred_check
          %p250 = pneg %p78
        $region34: #{tpu_custom_call.1} parent=27 // pred_check_branch
          %252 = sbr.rel (%p250) target = $region36
        $region35: #{tpu_custom_call.1} parent=27 // pred_region
          %s253 = smul.u32 32, %s28
          %p254 = scmp.lt.s32.totalorder %s253, 95
          %s255 = scalar_select %p254, %s253, 95
          %s256 = smul.addr %s255, 4
          %s257 = scalar_lea.vmem %s1, %s256
          %s258 = smul.u32 32, %s28
        $region36: #{tpu_custom_call.1} parent=27 // pred_fallthru
          _
      $region28: #{tpu_custom_call.1} parent=5 // pred_fallthru
        _
      %p259 = scmp.le.s32.totalorder 1, %s20
      %p260 = scmp.lt.s32.totalorder %s20, 7
      %p261 = pnand %p259, %p260
      %p262 = pneg %p261
      // Predicated region
      $region37: #{tpu_custom_call.1} parent=5 // pred_check
        _
      $region38: #{tpu_custom_call.1} parent=5 // pred_check_branch
        %264 = sbr.rel (%p261) target = $region40
      $region39: #{tpu_custom_call.1} parent=5 // pred_region
        %s265 = ssub.s32 %s20, 1
        %s266 = sand.u32 %s45, 1
        %s267 = scalar_lea.sflag [#allocation3], %s266
        %s268 = sand.u32 %s45, 1
        %s269 = smul.addr %s268, 24
        %s270 = scalar_lea.vmem [#allocation2], %s269
        // Predicated region
        $region41: #{tpu_custom_call.1} parent=39 // pred_check
          %p271 = pneg %p58
        $region42: #{tpu_custom_call.1} parent=39 // pred_check_branch
          %273 = sbr.rel (%p271) target = $region44
        $region43: #{tpu_custom_call.1} parent=39 // pred_region
          %275 = dma.done %s267, 384
        $region44: #{tpu_custom_call.1} parent=39 // pred_fallthru
          _
        // Predicated region
        $region45: #{tpu_custom_call.1} parent=39 // pred_check
          %p276 = pneg %p105
        $region46: #{tpu_custom_call.1} parent=39 // pred_check_branch
          %278 = sbr.rel (%p276) target = $region48
        $region47: #{tpu_custom_call.1} parent=39 // pred_region
          %280 = dma.done [#allocation7], 768
        $region48: #{tpu_custom_call.1} parent=39 // pred_fallthru
          _
        // Predicated region
        $region49: #{tpu_custom_call.1} parent=39 // pred_check
          %p281 = pneg %p126
        $region50: #{tpu_custom_call.1} parent=39 // pred_check_branch
          %283 = sbr.rel (%p281) target = $region52
        $region51: #{tpu_custom_call.1} parent=39 // pred_region
          %285 = dma.done [#allocation5], 16
        $region52: #{tpu_custom_call.1} parent=39 // pred_fallthru
          _
        // Predicated region
        $region53: #{tpu_custom_call.1} parent=39 // pred_check
          %p286 = pneg %p147
        $region54: #{tpu_custom_call.1} parent=39 // pred_check_branch
          %288 = sbr.rel (%p286) target = $region56
        $region55: #{tpu_custom_call.1} parent=39 // pred_region
          %290 = dma.done [#allocation10], 16
        $region56: #{tpu_custom_call.1} parent=39 // pred_fallthru
          _
        %291 = sfence
        %s292 = sand.u32 %s45, 1
        %s293 = scalar_lea.sflag [#allocation3], %s292
        %s294 = sand.u32 %s45, 1
        %s295 = smul.addr %s294, 24
        %s296 = scalar_lea.vmem [#allocation2], %s295
        %p297 = pneg %p58
        %p298 = pneg %p55
        %s299 = smul.u32 32, %s30
        %p300 = scmp.lt.s32.totalorder %s299, 95
        %s301 = scalar_select %p300, %s299, 95
        %s302 = smul.addr %s301, 4
        %s303 = scalar_lea.vmem %s1, %s302
        %p304 = pneg %p84
        %p305 = pneg %p81
        %p306 = pneg %p105
        %p307 = pneg %p102
        %p308 = pneg %p126
        %p309 = pneg %p123
        %p310 = pneg %p147
        %p311 = pneg %p144
        %p312 = pneg %p175
        %p313 = pneg %p172
        %s314 = sand.u32 %s162, 1
        %s315 = scalar_lea.sflag [#allocation4], %s314
        %s316 = sand.u32 %s162, 1
        %s317 = smul.addr %s316, 4608
        %s318 = scalar_lea.vmem [#allocation11], %s317
        %s319 = smul.u32 32, %s30
        %p320 = scmp.lt.s32.totalorder %s319, 95
        %s321 = scalar_select %p320, %s319, 95
        %s322 = smul.addr %s321, 4
        %s323 = scalar_lea.vmem %s1, %s322
        %s324 = smul.u32 32, %s30
        %s325 = smul.u32 32, %s30
        %v327 = vld [vmem:[%s323] sm:$0xf]
        %v328 = vld [vmem:[%s323 + $0x4] sm:$0xf]
        %v329 = vld [vmem:[%s323 + $0x8] sm:$0xf]
        %v330 = vld [vmem:[%s323 + $0xc] sm:$0xf]
        %v331 = vld [vmem:[%s323 + $0x10] sm:$0xf]
        %v332 = vld [vmem:[%s323 + $0x14] sm:$0xf]
        %v333 = vld [vmem:[%s323 + $0x18] sm:$0xf]
        %v334 = vld [vmem:[%s323 + $0x1c] sm:$0xf]
        %v335 = vld [vmem:[%s323 + $0x20] sm:$0xf]
        %v336 = vld [vmem:[%s323 + $0x24] sm:$0xf]
        %v337 = vld [vmem:[%s323 + $0x28] sm:$0xf]
        %v338 = vld [vmem:[%s323 + $0x2c] sm:$0xf]
        %v339 = vld [vmem:[%s323 + $0x30] sm:$0xf]
        %v340 = vld [vmem:[%s323 + $0x34] sm:$0xf]
        %v341 = vld [vmem:[%s323 + $0x38] sm:$0xf]
        %v342 = vld [vmem:[%s323 + $0x3c] sm:$0xf]
        %v343 = vld [vmem:[%s323 + $0x40] sm:$0xf]
        %v344 = vld [vmem:[%s323 + $0x44] sm:$0xf]
        %v345 = vld [vmem:[%s323 + $0x48] sm:$0xf]
        %v346 = vld [vmem:[%s323 + $0x4c] sm:$0xf]
        %v347 = vld [vmem:[%s323 + $0x50] sm:$0xf]
        %v348 = vld [vmem:[%s323 + $0x54] sm:$0xf]
        %v349 = vld [vmem:[%s323 + $0x58] sm:$0xf]
        %v350 = vld [vmem:[%s323 + $0x5c] sm:$0xf]
        %v351 = vld [vmem:[%s323 + $0x60] sm:$0xf]
        %v352 = vld [vmem:[%s323 + $0x64] sm:$0xf]
        %v353 = vld [vmem:[%s323 + $0x68] sm:$0xf]
        %v354 = vld [vmem:[%s323 + $0x6c] sm:$0xf]
        %v355 = vld [vmem:[%s323 + $0x70] sm:$0xf]
        %v356 = vld [vmem:[%s323 + $0x74] sm:$0xf]
        %v357 = vld [vmem:[%s323 + $0x78] sm:$0xf]
        %v358 = vld [vmem:[%s323 + $0x7c] sm:$0xf]
        %v359 = vld [vmem:[#allocation6] sm:$0xff]
        %v360 = vld [vmem:[#allocation6 + $0x8] sm:$0xff]
        %v361 = vld [vmem:[#allocation6 + $0x10] sm:$0xff]
        %v362 = vld [vmem:[#allocation6 + $0x18] sm:$0xff]
        %v363 = vld [vmem:[#allocation6 + $0x20] sm:$0xff]
        %v364 = vld [vmem:[#allocation6 + $0x28] sm:$0xff]
        %v365 = vld [vmem:[%s270] sm:$0xf]
        %v366 = vld [vmem:[%s270 + $0x4] sm:$0xf]
        %v399 = vunpack.c.l.b16 %v327
        %v400 = vunpack.c.l.b16 %v328
        %v401 = vunpack.c.l.b16 %v329
        %v402 = vunpack.c.l.b16 %v330
        %v403 = vunpack.c.l.b16 %v331
        %v404 = vunpack.c.l.b16 %v332
        %v405 = vunpack.c.l.b16 %v333
        %v406 = vunpack.c.l.b16 %v334
        %v407 = vunpack.c.l.b16 %v335
        %v408 = vunpack.c.l.b16 %v336
        %v409 = vunpack.c.l.b16 %v337
        %v410 = vunpack.c.l.b16 %v338
        %v411 = vunpack.c.l.b16 %v339
        %v412 = vunpack.c.l.b16 %v340
        %v413 = vunpack.c.l.b16 %v341
        %v414 = vunpack.c.l.b16 %v342
        %v415 = vunpack.c.l.b16 %v343
        %v416 = vunpack.c.l.b16 %v344
        %v417 = vunpack.c.l.b16 %v345
        %v418 = vunpack.c.l.b16 %v346
        %v419 = vunpack.c.l.b16 %v347
        %v420 = vunpack.c.l.b16 %v348
        %v421 = vunpack.c.l.b16 %v349
        %v422 = vunpack.c.l.b16 %v350
        %v423 = vunpack.c.l.b16 %v351
        %v424 = vunpack.c.l.b16 %v352
        %v425 = vunpack.c.l.b16 %v353
        %v426 = vunpack.c.l.b16 %v354
        %v427 = vunpack.c.l.b16 %v355
        %v428 = vunpack.c.l.b16 %v356
        %v429 = vunpack.c.l.b16 %v357
        %v430 = vunpack.c.l.b16 %v358
        %v431 = vpack.c.b16 %v400, %v399
        %v432 = vpack.c.b16 %v402, %v401
        %v433 = vpack.c.b16 %v404, %v403
        %v434 = vpack.c.b16 %v406, %v405
        %v435 = vpack.c.b16 %v408, %v407
        %v436 = vpack.c.b16 %v410, %v409
        %v437 = vpack.c.b16 %v412, %v411
        %v438 = vpack.c.b16 %v414, %v413
        %v439 = vpack.c.b16 %v416, %v415
        %v440 = vpack.c.b16 %v418, %v417
        %v441 = vpack.c.b16 %v420, %v419
        %v442 = vpack.c.b16 %v422, %v421
        %v443 = vpack.c.b16 %v424, %v423
        %v444 = vpack.c.b16 %v426, %v425
        %v445 = vpack.c.b16 %v428, %v427
        %v446 = vpack.c.b16 %v430, %v429
        %v449 = vunpack.c.l.b16 %v365
        %v450 = vunpack.c.l.b16 %v366
        %v451 = vpack.c.b16 %v450, %v449
        %vm453 = vcmask 130048
        %v455 = vsel %vm453, %v431, 0
        %v458 = vsel %vm453, %v432, 0
        %v461 = vsel %vm453, %v433, 0
        %v464 = vsel %vm453, %v434, 0
        %v467 = vsel %vm453, %v435, 0
        %v470 = vsel %vm453, %v436, 0
        %v473 = vsel %vm453, %v437, 0
        %v476 = vsel %vm453, %v438, 0
        %v479 = vsel %vm453, %v439, 0
        %v482 = vsel %vm453, %v440, 0
        %v485 = vsel %vm453, %v441, 0
        %v488 = vsel %vm453, %v442, 0
        %v491 = vsel %vm453, %v443, 0
        %v494 = vsel %vm453, %v444, 0
        %v497 = vsel %vm453, %v445, 0
        %v500 = vsel %vm453, %v446, 0
        %502 = vmatpush.bf16.msra.mxu0 0
        %503 = vmatpush.bf16.msra.mxu0 0
        %504 = vmatpush.bf16.msra.mxu0 0
        %505 = vmatpush.bf16.msra.mxu0 0
        %506 = vmatpush.bf16.msra.mxu0 0
        %507 = vmatpush.bf16.msra.mxu0 0
        %508 = vmatpush.bf16.msra.mxu0 0
        %509 = vmatpush.bf16.msra.mxu0 %v451
        %510 = vmatmul.bf16.gmra.mxu0 %v455
        %v511 = vpop.f32.mrf.mxu0
        %v512 = vadd.f32 0.0, %v511
        %v513 = vpop.f32.mrf.mxu0
        %v514 = vadd.f32 0.0, %v513
        %515 = vmatmul.bf16.gmra.mxu0 %v458
        %v516 = vpop.f32.mrf.mxu0
        %v517 = vadd.f32 0.0, %v516
        %v518 = vpop.f32.mrf.mxu0
        %v519 = vadd.f32 0.0, %v518
        %520 = vmatmul.bf16.gmra.mxu0 %v461
        %v521 = vpop.f32.mrf.mxu0
        %v522 = vadd.f32 0.0, %v521
        %v523 = vpop.f32.mrf.mxu0
        %v524 = vadd.f32 0.0, %v523
        %525 = vmatmul.bf16.gmra.mxu0 %v464
        %v526 = vpop.f32.mrf.mxu0
        %v527 = vadd.f32 0.0, %v526
        %v528 = vpop.f32.mrf.mxu0
        %v529 = vadd.f32 0.0, %v528
        %530 = vmatmul.bf16.gmra.mxu0 %v467
        %v531 = vpop.f32.mrf.mxu0
        %v532 = vadd.f32 0.0, %v531
        %v533 = vpop.f32.mrf.mxu0
        %v534 = vadd.f32 0.0, %v533
        %535 = vmatmul.bf16.gmra.mxu0 %v470
        %v536 = vpop.f32.mrf.mxu0
        %v537 = vadd.f32 0.0, %v536
        %v538 = vpop.f32.mrf.mxu0
        %v539 = vadd.f32 0.0, %v538
        %540 = vmatmul.bf16.gmra.mxu0 %v473
        %v541 = vpop.f32.mrf.mxu0
        %v542 = vadd.f32 0.0, %v541
        %v543 = vpop.f32.mrf.mxu0
        %v544 = vadd.f32 0.0, %v543
        %545 = vmatmul.bf16.gmra.mxu0 %v476
        %v546 = vpop.f32.mrf.mxu0
        %v547 = vadd.f32 0.0, %v546
        %v548 = vpop.f32.mrf.mxu0
        %v549 = vadd.f32 0.0, %v548
        %550 = vmatmul.bf16.gmra.mxu0 %v479
        %v551 = vpop.f32.mrf.mxu0
        %v552 = vadd.f32 0.0, %v551
        %v553 = vpop.f32.mrf.mxu0
        %v554 = vadd.f32 0.0, %v553
        %555 = vmatmul.bf16.gmra.mxu0 %v482
        %v556 = vpop.f32.mrf.mxu0
        %v557 = vadd.f32 0.0, %v556
        %v558 = vpop.f32.mrf.mxu0
        %v559 = vadd.f32 0.0, %v558
        %560 = vmatmul.bf16.gmra.mxu0 %v485
        %v561 = vpop.f32.mrf.mxu0
        %v562 = vadd.f32 0.0, %v561
        %v563 = vpop.f32.mrf.mxu0
        %v564 = vadd.f32 0.0, %v563
        %565 = vmatmul.bf16.gmra.mxu0 %v488
        %v566 = vpop.f32.mrf.mxu0
        %v567 = vadd.f32 0.0, %v566
        %v568 = vpop.f32.mrf.mxu0
        %v569 = vadd.f32 0.0, %v568
        %570 = vmatmul.bf16.gmra.mxu0 %v491
        %v571 = vpop.f32.mrf.mxu0
        %v572 = vadd.f32 0.0, %v571
        %v573 = vpop.f32.mrf.mxu0
        %v574 = vadd.f32 0.0, %v573
        %575 = vmatmul.bf16.gmra.mxu0 %v494
        %v576 = vpop.f32.mrf.mxu0
        %v577 = vadd.f32 0.0, %v576
        %v578 = vpop.f32.mrf.mxu0
        %v579 = vadd.f32 0.0, %v578
        %580 = vmatmul.bf16.gmra.mxu0 %v497
        %v581 = vpop.f32.mrf.mxu0
        %v582 = vadd.f32 0.0, %v581
        %v583 = vpop.f32.mrf.mxu0
        %v584 = vadd.f32 0.0, %v583
        %585 = vmatmul.bf16.gmra.mxu0 %v500
        %v586 = vpop.f32.mrf.mxu0
        %v587 = vadd.f32 0.0, %v586
        %v588 = vpop.f32.mrf.mxu0
        %v589 = vadd.f32 0.0, %v588
        %590 = vdwg.mxu0
        %v591 = vpack.c.bf16 %v514, %v512
        %v592 = vpack.c.bf16 %v519, %v517
        %v593 = vpack.c.bf16 %v524, %v522
        %v594 = vpack.c.bf16 %v529, %v527
        %v595 = vpack.c.bf16 %v534, %v532
        %v596 = vpack.c.bf16 %v539, %v537
        %v597 = vpack.c.bf16 %v544, %v542
        %v598 = vpack.c.bf16 %v549, %v547
        %v599 = vpack.c.bf16 %v554, %v552
        %v600 = vpack.c.bf16 %v559, %v557
        %v601 = vpack.c.bf16 %v564, %v562
        %v602 = vpack.c.bf16 %v569, %v567
        %v603 = vpack.c.bf16 %v574, %v572
        %v604 = vpack.c.bf16 %v579, %v577
        %v605 = vpack.c.bf16 %v584, %v582
        %v606 = vpack.c.bf16 %v589, %v587
        %v613 = vunpack.c.l.b16 %v359
        %v614 = vunpack.c.h.b16 %v359
        %v615 = vunpack.c.l.b16 %v360
        %v616 = vunpack.c.h.b16 %v360
        %v617 = vunpack.c.l.b16 %v361
        %v618 = vunpack.c.h.b16 %v361
        %v619 = vunpack.c.l.b16 %v362
        %v620 = vunpack.c.h.b16 %v362
        %v621 = vunpack.c.l.b16 %v363
        %v622 = vunpack.c.h.b16 %v363
        %v623 = vunpack.c.l.b16 %v364
        %v624 = vunpack.c.h.b16 %v364
        %v625 = vpack.c.b16 %v619, %v613
        %v626 = vpack.c.b16 %v620, %v614
        %v627 = vpack.c.b16 %v621, %v615
        %v628 = vpack.c.b16 %v622, %v616
        %v629 = vpack.c.b16 %v623, %v617
        %v630 = vpack.c.b16 %v624, %v618
        %v638 = vsel %vm453, %v591, 0
        %v641 = vsel %vm453, %v592, 0
        %v644 = vsel %vm453, %v593, 0
        %v647 = vsel %vm453, %v594, 0
        %v650 = vsel %vm453, %v595, 0
        %v653 = vsel %vm453, %v596, 0
        %v656 = vsel %vm453, %v597, 0
        %v659 = vsel %vm453, %v598, 0
        %v662 = vsel %vm453, %v599, 0
        %v665 = vsel %vm453, %v600, 0
        %v668 = vsel %vm453, %v601, 0
        %v671 = vsel %vm453, %v602, 0
        %v674 = vsel %vm453, %v603, 0
        %v677 = vsel %vm453, %v604, 0
        %v680 = vsel %vm453, %v605, 0
        %v683 = vsel %vm453, %v606, 0
        %685 = vmatpush.bf16.msra.mxu0 0
        %686 = vmatpush.bf16.msra.mxu0 0
        %687 = vmatpush.bf16.msra.mxu0 0
        %688 = vmatpush.bf16.msra.mxu0 0
        %689 = vmatpush.bf16.msra.mxu0 0
        %690 = vmatpush.bf16.msra.mxu0 0
        %691 = vmatpush.bf16.msra.mxu0 0
        %692 = vmatpush.bf16.msra.mxu0 %v625
        %693 = vmatmul.bf16.gmra.mxu0 %v638
        %v694 = vpop.f32.mrf.mxu0
        %v695 = vadd.f32 0.0, %v694
        %v696 = vpop.f32.mrf.mxu0
        %v697 = vadd.f32 0.0, %v696
        %698 = vmatmul.bf16.gmra.mxu0 %v641
        %v699 = vpop.f32.mrf.mxu0
        %v700 = vadd.f32 0.0, %v699
        %v701 = vpop.f32.mrf.mxu0
        %v702 = vadd.f32 0.0, %v701
        %703 = vmatmul.bf16.gmra.mxu0 %v644
        %v704 = vpop.f32.mrf.mxu0
        %v705 = vadd.f32 0.0, %v704
        %v706 = vpop.f32.mrf.mxu0
        %v707 = vadd.f32 0.0, %v706
        %708 = vmatmul.bf16.gmra.mxu0 %v647
        %v709 = vpop.f32.mrf.mxu0
        %v710 = vadd.f32 0.0, %v709
        %v711 = vpop.f32.mrf.mxu0
        %v712 = vadd.f32 0.0, %v711
        %713 = vmatmul.bf16.gmra.mxu0 %v650
        %v714 = vpop.f32.mrf.mxu0
        %v715 = vadd.f32 0.0, %v714
        %v716 = vpop.f32.mrf.mxu0
        %v717 = vadd.f32 0.0, %v716
        %718 = vmatmul.bf16.gmra.mxu0 %v653
        %v719 = vpop.f32.mrf.mxu0
        %v720 = vadd.f32 0.0, %v719
        %v721 = vpop.f32.mrf.mxu0
        %v722 = vadd.f32 0.0, %v721
        %723 = vmatmul.bf16.gmra.mxu0 %v656
        %v724 = vpop.f32.mrf.mxu0
        %v725 = vadd.f32 0.0, %v724
        %v726 = vpop.f32.mrf.mxu0
        %v727 = vadd.f32 0.0, %v726
        %728 = vmatmul.bf16.gmra.mxu0 %v659
        %v729 = vpop.f32.mrf.mxu0
        %v730 = vadd.f32 0.0, %v729
        %v731 = vpop.f32.mrf.mxu0
        %v732 = vadd.f32 0.0, %v731
        %733 = vmatmul.bf16.gmra.mxu0 %v662
        %v734 = vpop.f32.mrf.mxu0
        %v735 = vadd.f32 0.0, %v734
        %v736 = vpop.f32.mrf.mxu0
        %v737 = vadd.f32 0.0, %v736
        %738 = vmatmul.bf16.gmra.mxu0 %v665
        %v739 = vpop.f32.mrf.mxu0
        %v740 = vadd.f32 0.0, %v739
        %v741 = vpop.f32.mrf.mxu0
        %v742 = vadd.f32 0.0, %v741
        %743 = vmatmul.bf16.gmra.mxu0 %v668
        %v744 = vpop.f32.mrf.mxu0
        %v745 = vadd.f32 0.0, %v744
        %v746 = vpop.f32.mrf.mxu0
        %v747 = vadd.f32 0.0, %v746
        %748 = vmatmul.bf16.gmra.mxu0 %v671
        %v749 = vpop.f32.mrf.mxu0
        %v750 = vadd.f32 0.0, %v749
        %v751 = vpop.f32.mrf.mxu0
        %v752 = vadd.f32 0.0, %v751
        %753 = vmatmul.bf16.gmra.mxu0 %v674
        %v754 = vpop.f32.mrf.mxu0
        %v755 = vadd.f32 0.0, %v754
        %v756 = vpop.f32.mrf.mxu0
        %v757 = vadd.f32 0.0, %v756
        %758 = vmatmul.bf16.gmra.mxu0 %v677
        %v759 = vpop.f32.mrf.mxu0
        %v760 = vadd.f32 0.0, %v759
        %v761 = vpop.f32.mrf.mxu0
        %v762 = vadd.f32 0.0, %v761
        %763 = vmatmul.bf16.gmra.mxu0 %v680
        %v764 = vpop.f32.mrf.mxu0
        %v765 = vadd.f32 0.0, %v764
        %v766 = vpop.f32.mrf.mxu0
        %v767 = vadd.f32 0.0, %v766
        %768 = vmatmul.bf16.gmra.mxu0 %v683
        %v769 = vpop.f32.mrf.mxu0
        %v770 = vadd.f32 0.0, %v769
        %v771 = vpop.f32.mrf.mxu0
        %v772 = vadd.f32 0.0, %v771
        %773 = vdwg.mxu0
        %774 = vmatpush.bf16.msra.mxu0 0
        %775 = vmatpush.bf16.msra.mxu0 0
        %776 = vmatpush.bf16.msra.mxu0 0
        %777 = vmatpush.bf16.msra.mxu0 0
        %778 = vmatpush.bf16.msra.mxu0 0
        %779 = vmatpush.bf16.msra.mxu0 0
        %780 = vmatpush.bf16.msra.mxu0 0
        %781 = vmatpush.bf16.msra.mxu0 %v626
        %782 = vmatmul.bf16.gmra.mxu0 %v638
        %v783 = vpop.f32.mrf.mxu0
        %v784 = vadd.f32 0.0, %v783
        %v785 = vpop.f32.mrf.mxu0
        %v786 = vadd.f32 0.0, %v785
        %787 = vmatmul.bf16.gmra.mxu0 %v641
        %v788 = vpop.f32.mrf.mxu0
        %v789 = vadd.f32 0.0, %v788
        %v790 = vpop.f32.mrf.mxu0
        %v791 = vadd.f32 0.0, %v790
        %792 = vmatmul.bf16.gmra.mxu0 %v644
        %v793 = vpop.f32.mrf.mxu0
        %v794 = vadd.f32 0.0, %v793
        %v795 = vpop.f32.mrf.mxu0
        %v796 = vadd.f32 0.0, %v795
        %797 = vmatmul.bf16.gmra.mxu0 %v647
        %v798 = vpop.f32.mrf.mxu0
        %v799 = vadd.f32 0.0, %v798
        %v800 = vpop.f32.mrf.mxu0
        %v801 = vadd.f32 0.0, %v800
        %802 = vmatmul.bf16.gmra.mxu0 %v650
        %v803 = vpop.f32.mrf.mxu0
        %v804 = vadd.f32 0.0, %v803
        %v805 = vpop.f32.mrf.mxu0
        %v806 = vadd.f32 0.0, %v805
        %807 = vmatmul.bf16.gmra.mxu0 %v653
        %v808 = vpop.f32.mrf.mxu0
        %v809 = vadd.f32 0.0, %v808
        %v810 = vpop.f32.mrf.mxu0
        %v811 = vadd.f32 0.0, %v810
        %812 = vmatmul.bf16.gmra.mxu0 %v656
        %v813 = vpop.f32.mrf.mxu0
        %v814 = vadd.f32 0.0, %v813
        %v815 = vpop.f32.mrf.mxu0
        %v816 = vadd.f32 0.0, %v815
        %817 = vmatmul.bf16.gmra.mxu0 %v659
        %v818 = vpop.f32.mrf.mxu0
        %v819 = vadd.f32 0.0, %v818
        %v820 = vpop.f32.mrf.mxu0
        %v821 = vadd.f32 0.0, %v820
        %822 = vmatmul.bf16.gmra.mxu0 %v662
        %v823 = vpop.f32.mrf.mxu0
        %v824 = vadd.f32 0.0, %v823
        %v825 = vpop.f32.mrf.mxu0
        %v826 = vadd.f32 0.0, %v825
        %827 = vmatmul.bf16.gmra.mxu0 %v665
        %v828 = vpop.f32.mrf.mxu0
        %v829 = vadd.f32 0.0, %v828
        %v830 = vpop.f32.mrf.mxu0
        %v831 = vadd.f32 0.0, %v830
        %832 = vmatmul.bf16.gmra.mxu0 %v668
        %v833 = vpop.f32.mrf.mxu0
        %v834 = vadd.f32 0.0, %v833
        %v835 = vpop.f32.mrf.mxu0
        %v836 = vadd.f32 0.0, %v835
        %837 = vmatmul.bf16.gmra.mxu0 %v671
        %v838 = vpop.f32.mrf.mxu0
        %v839 = vadd.f32 0.0, %v838
        %v840 = vpop.f32.mrf.mxu0
        %v841 = vadd.f32 0.0, %v840
        %842 = vmatmul.bf16.gmra.mxu0 %v674
        %v843 = vpop.f32.mrf.mxu0
        %v844 = vadd.f32 0.0, %v843
        %v845 = vpop.f32.mrf.mxu0
        %v846 = vadd.f32 0.0, %v845
        %847 = vmatmul.bf16.gmra.mxu0 %v677
        %v848 = vpop.f32.mrf.mxu0
        %v849 = vadd.f32 0.0, %v848
        %v850 = vpop.f32.mrf.mxu0
        %v851 = vadd.f32 0.0, %v850
        %852 = vmatmul.bf16.gmra.mxu0 %v680
        %v853 = vpop.f32.mrf.mxu0
        %v854 = vadd.f32 0.0, %v853
        %v855 = vpop.f32.mrf.mxu0
        %v856 = vadd.f32 0.0, %v855
        %857 = vmatmul.bf16.gmra.mxu0 %v683
        %v858 = vpop.f32.mrf.mxu0
        %v859 = vadd.f32 0.0, %v858
        %v860 = vpop.f32.mrf.mxu0
        %v861 = vadd.f32 0.0, %v860
        %862 = vdwg.mxu0
        %863 = vmatpush.bf16.msra.mxu0 0
        %864 = vmatpush.bf16.msra.mxu0 0
        %865 = vmatpush.bf16.msra.mxu0 0
        %866 = vmatpush.bf16.msra.mxu0 0
        %867 = vmatpush.bf16.msra.mxu0 0
        %868 = vmatpush.bf16.msra.mxu0 0
        %869 = vmatpush.bf16.msra.mxu0 0
        %870 = vmatpush.bf16.msra.mxu0 %v627
        %871 = vmatmul.bf16.gmra.mxu0 %v638
        %v872 = vpop.f32.mrf.mxu0
        %v873 = vadd.f32 0.0, %v872
        %v874 = vpop.f32.mrf.mxu0
        %v875 = vadd.f32 0.0, %v874
        %876 = vmatmul.bf16.gmra.mxu0 %v641
        %v877 = vpop.f32.mrf.mxu0
        %v878 = vadd.f32 0.0, %v877
        %v879 = vpop.f32.mrf.mxu0
        %v880 = vadd.f32 0.0, %v879
        %881 = vmatmul.bf16.gmra.mxu0 %v644
        %v882 = vpop.f32.mrf.mxu0
        %v883 = vadd.f32 0.0, %v882
        %v884 = vpop.f32.mrf.mxu0
        %v885 = vadd.f32 0.0, %v884
        %886 = vmatmul.bf16.gmra.mxu0 %v647
        %v887 = vpop.f32.mrf.mxu0
        %v888 = vadd.f32 0.0, %v887
        %v889 = vpop.f32.mrf.mxu0
        %v890 = vadd.f32 0.0, %v889
        %891 = vmatmul.bf16.gmra.mxu0 %v650
        %v892 = vpop.f32.mrf.mxu0
        %v893 = vadd.f32 0.0, %v892
        %v894 = vpop.f32.mrf.mxu0
        %v895 = vadd.f32 0.0, %v894
        %896 = vmatmul.bf16.gmra.mxu0 %v653
        %v897 = vpop.f32.mrf.mxu0
        %v898 = vadd.f32 0.0, %v897
        %v899 = vpop.f32.mrf.mxu0
        %v900 = vadd.f32 0.0, %v899
        %901 = vmatmul.bf16.gmra.mxu0 %v656
        %v902 = vpop.f32.mrf.mxu0
        %v903 = vadd.f32 0.0, %v902
        %v904 = vpop.f32.mrf.mxu0
        %v905 = vadd.f32 0.0, %v904
        %906 = vmatmul.bf16.gmra.mxu0 %v659
        %v907 = vpop.f32.mrf.mxu0
        %v908 = vadd.f32 0.0, %v907
        %v909 = vpop.f32.mrf.mxu0
        %v910 = vadd.f32 0.0, %v909
        %911 = vmatmul.bf16.gmra.mxu0 %v662
        %v912 = vpop.f32.mrf.mxu0
        %v913 = vadd.f32 0.0, %v912
        %v914 = vpop.f32.mrf.mxu0
        %v915 = vadd.f32 0.0, %v914
        %916 = vmatmul.bf16.gmra.mxu0 %v665
        %v917 = vpop.f32.mrf.mxu0
        %v918 = vadd.f32 0.0, %v917
        %v919 = vpop.f32.mrf.mxu0
        %v920 = vadd.f32 0.0, %v919
        %921 = vmatmul.bf16.gmra.mxu0 %v668
        %v922 = vpop.f32.mrf.mxu0
        %v923 = vadd.f32 0.0, %v922
        %v924 = vpop.f32.mrf.mxu0
        %v925 = vadd.f32 0.0, %v924
        %926 = vmatmul.bf16.gmra.mxu0 %v671
        %v927 = vpop.f32.mrf.mxu0
        %v928 = vadd.f32 0.0, %v927
        %v929 = vpop.f32.mrf.mxu0
        %v930 = vadd.f32 0.0, %v929
        %931 = vmatmul.bf16.gmra.mxu0 %v674
        %v932 = vpop.f32.mrf.mxu0
        %v933 = vadd.f32 0.0, %v932
        %v934 = vpop.f32.mrf.mxu0
        %v935 = vadd.f32 0.0, %v934
        %936 = vmatmul.bf16.gmra.mxu0 %v677
        %v937 = vpop.f32.mrf.mxu0
        %v938 = vadd.f32 0.0, %v937
        %v939 = vpop.f32.mrf.mxu0
        %v940 = vadd.f32 0.0, %v939
        %941 = vmatmul.bf16.gmra.mxu0 %v680
        %v942 = vpop.f32.mrf.mxu0
        %v943 = vadd.f32 0.0, %v942
        %v944 = vpop.f32.mrf.mxu0
        %v945 = vadd.f32 0.0, %v944
        %946 = vmatmul.bf16.gmra.mxu0 %v683
        %v947 = vpop.f32.mrf.mxu0
        %v948 = vadd.f32 0.0, %v947
        %v949 = vpop.f32.mrf.mxu0
        %v950 = vadd.f32 0.0, %v949
        %951 = vdwg.mxu0
        %952 = vmatpush.bf16.msra.mxu0 0
        %953 = vmatpush.bf16.msra.mxu0 0
        %954 = vmatpush.bf16.msra.mxu0 0
        %955 = vmatpush.bf16.msra.mxu0 0
        %956 = vmatpush.bf16.msra.mxu0 0
        %957 = vmatpush.bf16.msra.mxu0 0
        %958 = vmatpush.bf16.msra.mxu0 0
        %959 = vmatpush.bf16.msra.mxu0 %v628
        %960 = vmatmul.bf16.gmra.mxu0 %v638
        %v961 = vpop.f32.mrf.mxu0
        %v962 = vadd.f32 0.0, %v961
        %v963 = vpop.f32.mrf.mxu0
        %v964 = vadd.f32 0.0, %v963
        %965 = vmatmul.bf16.gmra.mxu0 %v641
        %v966 = vpop.f32.mrf.mxu0
        %v967 = vadd.f32 0.0, %v966
        %v968 = vpop.f32.mrf.mxu0
        %v969 = vadd.f32 0.0, %v968
        %970 = vmatmul.bf16.gmra.mxu0 %v644
        %v971 = vpop.f32.mrf.mxu0
        %v972 = vadd.f32 0.0, %v971
        %v973 = vpop.f32.mrf.mxu0
        %v974 = vadd.f32 0.0, %v973
        %975 = vmatmul.bf16.gmra.mxu0 %v647
        %v976 = vpop.f32.mrf.mxu0
        %v977 = vadd.f32 0.0, %v976
        %v978 = vpop.f32.mrf.mxu0
        %v979 = vadd.f32 0.0, %v978
        %980 = vmatmul.bf16.gmra.mxu0 %v650
        %v981 = vpop.f32.mrf.mxu0
        %v982 = vadd.f32 0.0, %v981
        %v983 = vpop.f32.mrf.mxu0
        %v984 = vadd.f32 0.0, %v983
        %985 = vmatmul.bf16.gmra.mxu0 %v653
        %v986 = vpop.f32.mrf.mxu0
        %v987 = vadd.f32 0.0, %v986
        %v988 = vpop.f32.mrf.mxu0
        %v989 = vadd.f32 0.0, %v988
        %990 = vmatmul.bf16.gmra.mxu0 %v656
        %v991 = vpop.f32.mrf.mxu0
        %v992 = vadd.f32 0.0, %v991
        %v993 = vpop.f32.mrf.mxu0
        %v994 = vadd.f32 0.0, %v993
        %995 = vmatmul.bf16.gmra.mxu0 %v659
        %v996 = vpop.f32.mrf.mxu0
        %v997 = vadd.f32 0.0, %v996
        %v998 = vpop.f32.mrf.mxu0
        %v999 = vadd.f32 0.0, %v998
        %1000 = vmatmul.bf16.gmra.mxu0 %v662
        %v1001 = vpop.f32.mrf.mxu0
        %v1002 = vadd.f32 0.0, %v1001
        %v1003 = vpop.f32.mrf.mxu0
        %v1004 = vadd.f32 0.0, %v1003
        %1005 = vmatmul.bf16.gmra.mxu0 %v665
        %v1006 = vpop.f32.mrf.mxu0
        %v1007 = vadd.f32 0.0, %v1006
        %v1008 = vpop.f32.mrf.mxu0
        %v1009 = vadd.f32 0.0, %v1008
        %1010 = vmatmul.bf16.gmra.mxu0 %v668
        %v1011 = vpop.f32.mrf.mxu0
        %v1012 = vadd.f32 0.0, %v1011
        %v1013 = vpop.f32.mrf.mxu0
        %v1014 = vadd.f32 0.0, %v1013
        %1015 = vmatmul.bf16.gmra.mxu0 %v671
        %v1016 = vpop.f32.mrf.mxu0
        %v1017 = vadd.f32 0.0, %v1016
        %v1018 = vpop.f32.mrf.mxu0
        %v1019 = vadd.f32 0.0, %v1018
        %1020 = vmatmul.bf16.gmra.mxu0 %v674
        %v1021 = vpop.f32.mrf.mxu0
        %v1022 = vadd.f32 0.0, %v1021
        %v1023 = vpop.f32.mrf.mxu0
        %v1024 = vadd.f32 0.0, %v1023
        %1025 = vmatmul.bf16.gmra.mxu0 %v677
        %v1026 = vpop.f32.mrf.mxu0
        %v1027 = vadd.f32 0.0, %v1026
        %v1028 = vpop.f32.mrf.mxu0
        %v1029 = vadd.f32 0.0, %v1028
        %1030 = vmatmul.bf16.gmra.mxu0 %v680
        %v1031 = vpop.f32.mrf.mxu0
        %v1032 = vadd.f32 0.0, %v1031
        %v1033 = vpop.f32.mrf.mxu0
        %v1034 = vadd.f32 0.0, %v1033
        %1035 = vmatmul.bf16.gmra.mxu0 %v683
        %v1036 = vpop.f32.mrf.mxu0
        %v1037 = vadd.f32 0.0, %v1036
        %v1038 = vpop.f32.mrf.mxu0
        %v1039 = vadd.f32 0.0, %v1038
        %1040 = vdwg.mxu0
        %1041 = vmatpush.bf16.msra.mxu0 0
        %1042 = vmatpush.bf16.msra.mxu0 0
        %1043 = vmatpush.bf16.msra.mxu0 0
        %1044 = vmatpush.bf16.msra.mxu0 0
        %1045 = vmatpush.bf16.msra.mxu0 0
        %1046 = vmatpush.bf16.msra.mxu0 0
        %1047 = vmatpush.bf16.msra.mxu0 0
        %1048 = vmatpush.bf16.msra.mxu0 %v629
        %1049 = vmatmul.bf16.gmra.mxu0 %v638
        %v1050 = vpop.f32.mrf.mxu0
        %v1051 = vadd.f32 0.0, %v1050
        %v1052 = vpop.f32.mrf.mxu0
        %v1053 = vadd.f32 0.0, %v1052
        %1054 = vmatmul.bf16.gmra.mxu0 %v641
        %v1055 = vpop.f32.mrf.mxu0
        %v1056 = vadd.f32 0.0, %v1055
        %v1057 = vpop.f32.mrf.mxu0
        %v1058 = vadd.f32 0.0, %v1057
        %1059 = vmatmul.bf16.gmra.mxu0 %v644
        %v1060 = vpop.f32.mrf.mxu0
        %v1061 = vadd.f32 0.0, %v1060
        %v1062 = vpop.f32.mrf.mxu0
        %v1063 = vadd.f32 0.0, %v1062
        %1064 = vmatmul.bf16.gmra.mxu0 %v647
        %v1065 = vpop.f32.mrf.mxu0
        %v1066 = vadd.f32 0.0, %v1065
        %v1067 = vpop.f32.mrf.mxu0
        %v1068 = vadd.f32 0.0, %v1067
        %1069 = vmatmul.bf16.gmra.mxu0 %v650
        %v1070 = vpop.f32.mrf.mxu0
        %v1071 = vadd.f32 0.0, %v1070
        %v1072 = vpop.f32.mrf.mxu0
        %v1073 = vadd.f32 0.0, %v1072
        %1074 = vmatmul.bf16.gmra.mxu0 %v653
        %v1075 = vpop.f32.mrf.mxu0
        %v1076 = vadd.f32 0.0, %v1075
        %v1077 = vpop.f32.mrf.mxu0
        %v1078 = vadd.f32 0.0, %v1077
        %1079 = vmatmul.bf16.gmra.mxu0 %v656
        %v1080 = vpop.f32.mrf.mxu0
        %v1081 = vadd.f32 0.0, %v1080
        %v1082 = vpop.f32.mrf.mxu0
        %v1083 = vadd.f32 0.0, %v1082
        %1084 = vmatmul.bf16.gmra.mxu0 %v659
        %v1085 = vpop.f32.mrf.mxu0
        %v1086 = vadd.f32 0.0, %v1085
        %v1087 = vpop.f32.mrf.mxu0
        %v1088 = vadd.f32 0.0, %v1087
        %1089 = vmatmul.bf16.gmra.mxu0 %v662
        %v1090 = vpop.f32.mrf.mxu0
        %v1091 = vadd.f32 0.0, %v1090
        %v1092 = vpop.f32.mrf.mxu0
        %v1093 = vadd.f32 0.0, %v1092
        %1094 = vmatmul.bf16.gmra.mxu0 %v665
        %v1095 = vpop.f32.mrf.mxu0
        %v1096 = vadd.f32 0.0, %v1095
        %v1097 = vpop.f32.mrf.mxu0
        %v1098 = vadd.f32 0.0, %v1097
        %1099 = vmatmul.bf16.gmra.mxu0 %v668
        %v1100 = vpop.f32.mrf.mxu0
        %v1101 = vadd.f32 0.0, %v1100
        %v1102 = vpop.f32.mrf.mxu0
        %v1103 = vadd.f32 0.0, %v1102
        %1104 = vmatmul.bf16.gmra.mxu0 %v671
        %v1105 = vpop.f32.mrf.mxu0
        %v1106 = vadd.f32 0.0, %v1105
        %v1107 = vpop.f32.mrf.mxu0
        %v1108 = vadd.f32 0.0, %v1107
        %1109 = vmatmul.bf16.gmra.mxu0 %v674
        %v1110 = vpop.f32.mrf.mxu0
        %v1111 = vadd.f32 0.0, %v1110
        %v1112 = vpop.f32.mrf.mxu0
        %v1113 = vadd.f32 0.0, %v1112
        %1114 = vmatmul.bf16.gmra.mxu0 %v677
        %v1115 = vpop.f32.mrf.mxu0
        %v1116 = vadd.f32 0.0, %v1115
        %v1117 = vpop.f32.mrf.mxu0
        %v1118 = vadd.f32 0.0, %v1117
        %1119 = vmatmul.bf16.gmra.mxu0 %v680
        %v1120 = vpop.f32.mrf.mxu0
        %v1121 = vadd.f32 0.0, %v1120
        %v1122 = vpop.f32.mrf.mxu0
        %v1123 = vadd.f32 0.0, %v1122
        %1124 = vmatmul.bf16.gmra.mxu0 %v683
        %v1125 = vpop.f32.mrf.mxu0
        %v1126 = vadd.f32 0.0, %v1125
        %v1127 = vpop.f32.mrf.mxu0
        %v1128 = vadd.f32 0.0, %v1127
        %1129 = vdwg.mxu0
        %1130 = vmatpush.bf16.msra.mxu0 0
        %1131 = vmatpush.bf16.msra.mxu0 0
        %1132 = vmatpush.bf16.msra.mxu0 0
        %1133 = vmatpush.bf16.msra.mxu0 0
        %1134 = vmatpush.bf16.msra.mxu0 0
        %1135 = vmatpush.bf16.msra.mxu0 0
        %1136 = vmatpush.bf16.msra.mxu0 0
        %1137 = vmatpush.bf16.msra.mxu0 %v630
        %1138 = vmatmul.bf16.gmra.mxu0 %v638
        %v1139 = vpop.f32.mrf.mxu0
        %v1140 = vadd.f32 0.0, %v1139
        %v1141 = vpop.f32.mrf.mxu0
        %v1142 = vadd.f32 0.0, %v1141
        %1143 = vmatmul.bf16.gmra.mxu0 %v641
        %v1144 = vpop.f32.mrf.mxu0
        %v1145 = vadd.f32 0.0, %v1144
        %v1146 = vpop.f32.mrf.mxu0
        %v1147 = vadd.f32 0.0, %v1146
        %1148 = vmatmul.bf16.gmra.mxu0 %v644
        %v1149 = vpop.f32.mrf.mxu0
        %v1150 = vadd.f32 0.0, %v1149
        %v1151 = vpop.f32.mrf.mxu0
        %v1152 = vadd.f32 0.0, %v1151
        %1153 = vmatmul.bf16.gmra.mxu0 %v647
        %v1154 = vpop.f32.mrf.mxu0
        %v1155 = vadd.f32 0.0, %v1154
        %v1156 = vpop.f32.mrf.mxu0
        %v1157 = vadd.f32 0.0, %v1156
        %1158 = vmatmul.bf16.gmra.mxu0 %v650
        %v1159 = vpop.f32.mrf.mxu0
        %v1160 = vadd.f32 0.0, %v1159
        %v1161 = vpop.f32.mrf.mxu0
        %v1162 = vadd.f32 0.0, %v1161
        %1163 = vmatmul.bf16.gmra.mxu0 %v653
        %v1164 = vpop.f32.mrf.mxu0
        %v1165 = vadd.f32 0.0, %v1164
        %v1166 = vpop.f32.mrf.mxu0
        %v1167 = vadd.f32 0.0, %v1166
        %1168 = vmatmul.bf16.gmra.mxu0 %v656
        %v1169 = vpop.f32.mrf.mxu0
        %v1170 = vadd.f32 0.0, %v1169
        %v1171 = vpop.f32.mrf.mxu0
        %v1172 = vadd.f32 0.0, %v1171
        %1173 = vmatmul.bf16.gmra.mxu0 %v659
        %v1174 = vpop.f32.mrf.mxu0
        %v1175 = vadd.f32 0.0, %v1174
        %v1176 = vpop.f32.mrf.mxu0
        %v1177 = vadd.f32 0.0, %v1176
        %1178 = vmatmul.bf16.gmra.mxu0 %v662
        %v1179 = vpop.f32.mrf.mxu0
        %v1180 = vadd.f32 0.0, %v1179
        %v1181 = vpop.f32.mrf.mxu0
        %v1182 = vadd.f32 0.0, %v1181
        %1183 = vmatmul.bf16.gmra.mxu0 %v665
        %v1184 = vpop.f32.mrf.mxu0
        %v1185 = vadd.f32 0.0, %v1184
        %v1186 = vpop.f32.mrf.mxu0
        %v1187 = vadd.f32 0.0, %v1186
        %1188 = vmatmul.bf16.gmra.mxu0 %v668
        %v1189 = vpop.f32.mrf.mxu0
        %v1190 = vadd.f32 0.0, %v1189
        %v1191 = vpop.f32.mrf.mxu0
        %v1192 = vadd.f32 0.0, %v1191
        %1193 = vmatmul.bf16.gmra.mxu0 %v671
        %v1194 = vpop.f32.mrf.mxu0
        %v1195 = vadd.f32 0.0, %v1194
        %v1196 = vpop.f32.mrf.mxu0
        %v1197 = vadd.f32 0.0, %v1196
        %1198 = vmatmul.bf16.gmra.mxu0 %v674
        %v1199 = vpop.f32.mrf.mxu0
        %v1200 = vadd.f32 0.0, %v1199
        %v1201 = vpop.f32.mrf.mxu0
        %v1202 = vadd.f32 0.0, %v1201
        %1203 = vmatmul.bf16.gmra.mxu0 %v677
        %v1204 = vpop.f32.mrf.mxu0
        %v1205 = vadd.f32 0.0, %v1204
        %v1206 = vpop.f32.mrf.mxu0
        %v1207 = vadd.f32 0.0, %v1206
        %1208 = vmatmul.bf16.gmra.mxu0 %v680
        %v1209 = vpop.f32.mrf.mxu0
        %v1210 = vadd.f32 0.0, %v1209
        %v1211 = vpop.f32.mrf.mxu0
        %v1212 = vadd.f32 0.0, %v1211
        %1213 = vmatmul.bf16.gmra.mxu0 %v683
        %v1214 = vpop.f32.mrf.mxu0
        %v1215 = vadd.f32 0.0, %v1214
        %v1216 = vpop.f32.mrf.mxu0
        %v1217 = vadd.f32 0.0, %v1216
        %1218 = vdwg.mxu0
        %s1219 = sld [smem:[#allocation8]]
        %v1220 = vstv %s1219
        %v1221 = vsub.f32 %v695, %v1220
        %v1222 = vsub.f32 %v784, %v1220
        %v1223 = vsub.f32 %v873, %v1220
        %v1224 = vsub.f32 %v962, %v1220
        %v1225 = vsub.f32 %v1051, %v1220
        %v1226 = vsub.f32 %v1140, %v1220
        %v1227 = vsub.f32 %v697, %v1220
        %v1228 = vsub.f32 %v786, %v1220
        %v1229 = vsub.f32 %v875, %v1220
        %v1230 = vsub.f32 %v964, %v1220
        %v1231 = vsub.f32 %v1053, %v1220
        %v1232 = vsub.f32 %v1142, %v1220
        %v1233 = vsub.f32 %v700, %v1220
        %v1234 = vsub.f32 %v789, %v1220
        %v1235 = vsub.f32 %v878, %v1220
        %v1236 = vsub.f32 %v967, %v1220
        %v1237 = vsub.f32 %v1056, %v1220
        %v1238 = vsub.f32 %v1145, %v1220
        %v1239 = vsub.f32 %v702, %v1220
        %v1240 = vsub.f32 %v791, %v1220
        %v1241 = vsub.f32 %v880, %v1220
        %v1242 = vsub.f32 %v969, %v1220
        %v1243 = vsub.f32 %v1058, %v1220
        %v1244 = vsub.f32 %v1147, %v1220
        %v1245 = vsub.f32 %v705, %v1220
        %v1246 = vsub.f32 %v794, %v1220
        %v1247 = vsub.f32 %v883, %v1220
        %v1248 = vsub.f32 %v972, %v1220
        %v1249 = vsub.f32 %v1061, %v1220
        %v1250 = vsub.f32 %v1150, %v1220
        %v1251 = vsub.f32 %v707, %v1220
        %v1252 = vsub.f32 %v796, %v1220
        %v1253 = vsub.f32 %v885, %v1220
        %v1254 = vsub.f32 %v974, %v1220
        %v1255 = vsub.f32 %v1063, %v1220
        %v1256 = vsub.f32 %v1152, %v1220
        %v1257 = vsub.f32 %v710, %v1220
        %v1258 = vsub.f32 %v799, %v1220
        %v1259 = vsub.f32 %v888, %v1220
        %v1260 = vsub.f32 %v977, %v1220
        %v1261 = vsub.f32 %v1066, %v1220
        %v1262 = vsub.f32 %v1155, %v1220
        %v1263 = vsub.f32 %v712, %v1220
        %v1264 = vsub.f32 %v801, %v1220
        %v1265 = vsub.f32 %v890, %v1220
        %v1266 = vsub.f32 %v979, %v1220
        %v1267 = vsub.f32 %v1068, %v1220
        %v1268 = vsub.f32 %v1157, %v1220
        %v1269 = vsub.f32 %v715, %v1220
        %v1270 = vsub.f32 %v804, %v1220
        %v1271 = vsub.f32 %v893, %v1220
        %v1272 = vsub.f32 %v982, %v1220
        %v1273 = vsub.f32 %v1071, %v1220
        %v1274 = vsub.f32 %v1160, %v1220
        %v1275 = vsub.f32 %v717, %v1220
        %v1276 = vsub.f32 %v806, %v1220
        %v1277 = vsub.f32 %v895, %v1220
        %v1278 = vsub.f32 %v984, %v1220
        %v1279 = vsub.f32 %v1073, %v1220
        %v1280 = vsub.f32 %v1162, %v1220
        %v1281 = vsub.f32 %v720, %v1220
        %v1282 = vsub.f32 %v809, %v1220
        %v1283 = vsub.f32 %v898, %v1220
        %v1284 = vsub.f32 %v987, %v1220
        %v1285 = vsub.f32 %v1076, %v1220
        %v1286 = vsub.f32 %v1165, %v1220
        %v1287 = vsub.f32 %v722, %v1220
        %v1288 = vsub.f32 %v811, %v1220
        %v1289 = vsub.f32 %v900, %v1220
        %v1290 = vsub.f32 %v989, %v1220
        %v1291 = vsub.f32 %v1078, %v1220
        %v1292 = vsub.f32 %v1167, %v1220
        %v1293 = vsub.f32 %v725, %v1220
        %v1294 = vsub.f32 %v814, %v1220
        %v1295 = vsub.f32 %v903, %v1220
        %v1296 = vsub.f32 %v992, %v1220
        %v1297 = vsub.f32 %v1081, %v1220
        %v1298 = vsub.f32 %v1170, %v1220
        %v1299 = vsub.f32 %v727, %v1220
        %v1300 = vsub.f32 %v816, %v1220
        %v1301 = vsub.f32 %v905, %v1220
        %v1302 = vsub.f32 %v994, %v1220
        %v1303 = vsub.f32 %v1083, %v1220
        %v1304 = vsub.f32 %v1172, %v1220
        %v1305 = vsub.f32 %v730, %v1220
        %v1306 = vsub.f32 %v819, %v1220
        %v1307 = vsub.f32 %v908, %v1220
        %v1308 = vsub.f32 %v997, %v1220
        %v1309 = vsub.f32 %v1086, %v1220
        %v1310 = vsub.f32 %v1175, %v1220
        %v1311 = vsub.f32 %v732, %v1220
        %v1312 = vsub.f32 %v821, %v1220
        %v1313 = vsub.f32 %v910, %v1220
        %v1314 = vsub.f32 %v999, %v1220
        %v1315 = vsub.f32 %v1088, %v1220
        %v1316 = vsub.f32 %v1177, %v1220
        %v1317 = vsub.f32 %v735, %v1220
        %v1318 = vsub.f32 %v824, %v1220
        %v1319 = vsub.f32 %v913, %v1220
        %v1320 = vsub.f32 %v1002, %v1220
        %v1321 = vsub.f32 %v1091, %v1220
        %v1322 = vsub.f32 %v1180, %v1220
        %v1323 = vsub.f32 %v737, %v1220
        %v1324 = vsub.f32 %v826, %v1220
        %v1325 = vsub.f32 %v915, %v1220
        %v1326 = vsub.f32 %v1004, %v1220
        %v1327 = vsub.f32 %v1093, %v1220
        %v1328 = vsub.f32 %v1182, %v1220
        %v1329 = vsub.f32 %v740, %v1220
        %v1330 = vsub.f32 %v829, %v1220
        %v1331 = vsub.f32 %v918, %v1220
        %v1332 = vsub.f32 %v1007, %v1220
        %v1333 = vsub.f32 %v1096, %v1220
        %v1334 = vsub.f32 %v1185, %v1220
        %v1335 = vsub.f32 %v742, %v1220
        %v1336 = vsub.f32 %v831, %v1220
        %v1337 = vsub.f32 %v920, %v1220
        %v1338 = vsub.f32 %v1009, %v1220
        %v1339 = vsub.f32 %v1098, %v1220
        %v1340 = vsub.f32 %v1187, %v1220
        %v1341 = vsub.f32 %v745, %v1220
        %v1342 = vsub.f32 %v834, %v1220
        %v1343 = vsub.f32 %v923, %v1220
        %v1344 = vsub.f32 %v1012, %v1220
        %v1345 = vsub.f32 %v1101, %v1220
        %v1346 = vsub.f32 %v1190, %v1220
        %v1347 = vsub.f32 %v747, %v1220
        %v1348 = vsub.f32 %v836, %v1220
        %v1349 = vsub.f32 %v925, %v1220
        %v1350 = vsub.f32 %v1014, %v1220
        %v1351 = vsub.f32 %v1103, %v1220
        %v1352 = vsub.f32 %v1192, %v1220
        %v1353 = vsub.f32 %v750, %v1220
        %v1354 = vsub.f32 %v839, %v1220
        %v1355 = vsub.f32 %v928, %v1220
        %v1356 = vsub.f32 %v1017, %v1220
        %v1357 = vsub.f32 %v1106, %v1220
        %v1358 = vsub.f32 %v1195, %v1220
        %v1359 = vsub.f32 %v752, %v1220
        %v1360 = vsub.f32 %v841, %v1220
        %v1361 = vsub.f32 %v930, %v1220
        %v1362 = vsub.f32 %v1019, %v1220
        %v1363 = vsub.f32 %v1108, %v1220
        %v1364 = vsub.f32 %v1197, %v1220
        %v1365 = vsub.f32 %v755, %v1220
        %v1366 = vsub.f32 %v844, %v1220
        %v1367 = vsub.f32 %v933, %v1220
        %v1368 = vsub.f32 %v1022, %v1220
        %v1369 = vsub.f32 %v1111, %v1220
        %v1370 = vsub.f32 %v1200, %v1220
        %v1371 = vsub.f32 %v757, %v1220
        %v1372 = vsub.f32 %v846, %v1220
        %v1373 = vsub.f32 %v935, %v1220
        %v1374 = vsub.f32 %v1024, %v1220
        %v1375 = vsub.f32 %v1113, %v1220
        %v1376 = vsub.f32 %v1202, %v1220
        %v1377 = vsub.f32 %v760, %v1220
        %v1378 = vsub.f32 %v849, %v1220
        %v1379 = vsub.f32 %v938, %v1220
        %v1380 = vsub.f32 %v1027, %v1220
        %v1381 = vsub.f32 %v1116, %v1220
        %v1382 = vsub.f32 %v1205, %v1220
        %v1383 = vsub.f32 %v762, %v1220
        %v1384 = vsub.f32 %v851, %v1220
        %v1385 = vsub.f32 %v940, %v1220
        %v1386 = vsub.f32 %v1029, %v1220
        %v1387 = vsub.f32 %v1118, %v1220
        %v1388 = vsub.f32 %v1207, %v1220
        %v1389 = vsub.f32 %v765, %v1220
        %v1390 = vsub.f32 %v854, %v1220
        %v1391 = vsub.f32 %v943, %v1220
        %v1392 = vsub.f32 %v1032, %v1220
        %v1393 = vsub.f32 %v1121, %v1220
        %v1394 = vsub.f32 %v1210, %v1220
        %v1395 = vsub.f32 %v767, %v1220
        %v1396 = vsub.f32 %v856, %v1220
        %v1397 = vsub.f32 %v945, %v1220
        %v1398 = vsub.f32 %v1034, %v1220
        %v1399 = vsub.f32 %v1123, %v1220
        %v1400 = vsub.f32 %v1212, %v1220
        %v1401 = vsub.f32 %v770, %v1220
        %v1402 = vsub.f32 %v859, %v1220
        %v1403 = vsub.f32 %v948, %v1220
        %v1404 = vsub.f32 %v1037, %v1220
        %v1405 = vsub.f32 %v1126, %v1220
        %v1406 = vsub.f32 %v1215, %v1220
        %v1407 = vsub.f32 %v772, %v1220
        %v1408 = vsub.f32 %v861, %v1220
        %v1409 = vsub.f32 %v950, %v1220
        %v1410 = vsub.f32 %v1039, %v1220
        %v1411 = vsub.f32 %v1128, %v1220
        %v1412 = vsub.f32 %v1217, %v1220
        %s1413 = sld [smem:[#allocation9]]
        %v1414 = vstv %s1413
        %v1415 = vmul.f32 %v1221, %v1414
        %v1416 = vmul.f32 %v1222, %v1414
        %v1417 = vmul.f32 %v1223, %v1414
        %v1418 = vmul.f32 %v1224, %v1414
        %v1419 = vmul.f32 %v1225, %v1414
        %v1420 = vmul.f32 %v1226, %v1414
        %v1421 = vmul.f32 %v1227, %v1414
        %v1422 = vmul.f32 %v1228, %v1414
        %v1423 = vmul.f32 %v1229, %v1414
        %v1424 = vmul.f32 %v1230, %v1414
        %v1425 = vmul.f32 %v1231, %v1414
        %v1426 = vmul.f32 %v1232, %v1414
        %v1427 = vmul.f32 %v1233, %v1414
        %v1428 = vmul.f32 %v1234, %v1414
        %v1429 = vmul.f32 %v1235, %v1414
        %v1430 = vmul.f32 %v1236, %v1414
        %v1431 = vmul.f32 %v1237, %v1414
        %v1432 = vmul.f32 %v1238, %v1414
        %v1433 = vmul.f32 %v1239, %v1414
        %v1434 = vmul.f32 %v1240, %v1414
        %v1435 = vmul.f32 %v1241, %v1414
        %v1436 = vmul.f32 %v1242, %v1414
        %v1437 = vmul.f32 %v1243, %v1414
        %v1438 = vmul.f32 %v1244, %v1414
        %v1439 = vmul.f32 %v1245, %v1414
        %v1440 = vmul.f32 %v1246, %v1414
        %v1441 = vmul.f32 %v1247, %v1414
        %v1442 = vmul.f32 %v1248, %v1414
        %v1443 = vmul.f32 %v1249, %v1414
        %v1444 = vmul.f32 %v1250, %v1414
        %v1445 = vmul.f32 %v1251, %v1414
        %v1446 = vmul.f32 %v1252, %v1414
        %v1447 = vmul.f32 %v1253, %v1414
        %v1448 = vmul.f32 %v1254, %v1414
        %v1449 = vmul.f32 %v1255, %v1414
        %v1450 = vmul.f32 %v1256, %v1414
        %v1451 = vmul.f32 %v1257, %v1414
        %v1452 = vmul.f32 %v1258, %v1414
        %v1453 = vmul.f32 %v1259, %v1414
        %v1454 = vmul.f32 %v1260, %v1414
        %v1455 = vmul.f32 %v1261, %v1414
        %v1456 = vmul.f32 %v1262, %v1414
        %v1457 = vmul.f32 %v1263, %v1414
        %v1458 = vmul.f32 %v1264, %v1414
        %v1459 = vmul.f32 %v1265, %v1414
        %v1460 = vmul.f32 %v1266, %v1414
        %v1461 = vmul.f32 %v1267, %v1414
        %v1462 = vmul.f32 %v1268, %v1414
        %v1463 = vmul.f32 %v1269, %v1414
        %v1464 = vmul.f32 %v1270, %v1414
        %v1465 = vmul.f32 %v1271, %v1414
        %v1466 = vmul.f32 %v1272, %v1414
        %v1467 = vmul.f32 %v1273, %v1414
        %v1468 = vmul.f32 %v1274, %v1414
        %v1469 = vmul.f32 %v1275, %v1414
        %v1470 = vmul.f32 %v1276, %v1414
        %v1471 = vmul.f32 %v1277, %v1414
        %v1472 = vmul.f32 %v1278, %v1414
        %v1473 = vmul.f32 %v1279, %v1414
        %v1474 = vmul.f32 %v1280, %v1414
        %v1475 = vmul.f32 %v1281, %v1414
        %v1476 = vmul.f32 %v1282, %v1414
        %v1477 = vmul.f32 %v1283, %v1414
        %v1478 = vmul.f32 %v1284, %v1414
        %v1479 = vmul.f32 %v1285, %v1414
        %v1480 = vmul.f32 %v1286, %v1414
        %v1481 = vmul.f32 %v1287, %v1414
        %v1482 = vmul.f32 %v1288, %v1414
        %v1483 = vmul.f32 %v1289, %v1414
        %v1484 = vmul.f32 %v1290, %v1414
        %v1485 = vmul.f32 %v1291, %v1414
        %v1486 = vmul.f32 %v1292, %v1414
        %v1487 = vmul.f32 %v1293, %v1414
        %v1488 = vmul.f32 %v1294, %v1414
        %v1489 = vmul.f32 %v1295, %v1414
        %v1490 = vmul.f32 %v1296, %v1414
        %v1491 = vmul.f32 %v1297, %v1414
        %v1492 = vmul.f32 %v1298, %v1414
        %v1493 = vmul.f32 %v1299, %v1414
        %v1494 = vmul.f32 %v1300, %v1414
        %v1495 = vmul.f32 %v1301, %v1414
        %v1496 = vmul.f32 %v1302, %v1414
        %v1497 = vmul.f32 %v1303, %v1414
        %v1498 = vmul.f32 %v1304, %v1414
        %v1499 = vmul.f32 %v1305, %v1414
        %v1500 = vmul.f32 %v1306, %v1414
        %v1501 = vmul.f32 %v1307, %v1414
        %v1502 = vmul.f32 %v1308, %v1414
        %v1503 = vmul.f32 %v1309, %v1414
        %v1504 = vmul.f32 %v1310, %v1414
        %v1505 = vmul.f32 %v1311, %v1414
        %v1506 = vmul.f32 %v1312, %v1414
        %v1507 = vmul.f32 %v1313, %v1414
        %v1508 = vmul.f32 %v1314, %v1414
        %v1509 = vmul.f32 %v1315, %v1414
        %v1510 = vmul.f32 %v1316, %v1414
        %v1511 = vmul.f32 %v1317, %v1414
        %v1512 = vmul.f32 %v1318, %v1414
        %v1513 = vmul.f32 %v1319, %v1414
        %v1514 = vmul.f32 %v1320, %v1414
        %v1515 = vmul.f32 %v1321, %v1414
        %v1516 = vmul.f32 %v1322, %v1414
        %v1517 = vmul.f32 %v1323, %v1414
        %v1518 = vmul.f32 %v1324, %v1414
        %v1519 = vmul.f32 %v1325, %v1414
        %v1520 = vmul.f32 %v1326, %v1414
        %v1521 = vmul.f32 %v1327, %v1414
        %v1522 = vmul.f32 %v1328, %v1414
        %v1523 = vmul.f32 %v1329, %v1414
        %v1524 = vmul.f32 %v1330, %v1414
        %v1525 = vmul.f32 %v1331, %v1414
        %v1526 = vmul.f32 %v1332, %v1414
        %v1527 = vmul.f32 %v1333, %v1414
        %v1528 = vmul.f32 %v1334, %v1414
        %v1529 = vmul.f32 %v1335, %v1414
        %v1530 = vmul.f32 %v1336, %v1414
        %v1531 = vmul.f32 %v1337, %v1414
        %v1532 = vmul.f32 %v1338, %v1414
        %v1533 = vmul.f32 %v1339, %v1414
        %v1534 = vmul.f32 %v1340, %v1414
        %v1535 = vmul.f32 %v1341, %v1414
        %v1536 = vmul.f32 %v1342, %v1414
        %v1537 = vmul.f32 %v1343, %v1414
        %v1538 = vmul.f32 %v1344, %v1414
        %v1539 = vmul.f32 %v1345, %v1414
        %v1540 = vmul.f32 %v1346, %v1414
        %v1541 = vmul.f32 %v1347, %v1414
        %v1542 = vmul.f32 %v1348, %v1414
        %v1543 = vmul.f32 %v1349, %v1414
        %v1544 = vmul.f32 %v1350, %v1414
        %v1545 = vmul.f32 %v1351, %v1414
        %v1546 = vmul.f32 %v1352, %v1414
        %v1547 = vmul.f32 %v1353, %v1414
        %v1548 = vmul.f32 %v1354, %v1414
        %v1549 = vmul.f32 %v1355, %v1414
        %v1550 = vmul.f32 %v1356, %v1414
        %v1551 = vmul.f32 %v1357, %v1414
        %v1552 = vmul.f32 %v1358, %v1414
        %v1553 = vmul.f32 %v1359, %v1414
        %v1554 = vmul.f32 %v1360, %v1414
        %v1555 = vmul.f32 %v1361, %v1414
        %v1556 = vmul.f32 %v1362, %v1414
        %v1557 = vmul.f32 %v1363, %v1414
        %v1558 = vmul.f32 %v1364, %v1414
        %v1559 = vmul.f32 %v1365, %v1414
        %v1560 = vmul.f32 %v1366, %v1414
        %v1561 = vmul.f32 %v1367, %v1414
        %v1562 = vmul.f32 %v1368, %v1414
        %v1563 = vmul.f32 %v1369, %v1414
        %v1564 = vmul.f32 %v1370, %v1414
        %v1565 = vmul.f32 %v1371, %v1414
        %v1566 = vmul.f32 %v1372, %v1414
        %v1567 = vmul.f32 %v1373, %v1414
        %v1568 = vmul.f32 %v1374, %v1414
        %v1569 = vmul.f32 %v1375, %v1414
        %v1570 = vmul.f32 %v1376, %v1414
        %v1571 = vmul.f32 %v1377, %v1414
        %v1572 = vmul.f32 %v1378, %v1414
        %v1573 = vmul.f32 %v1379, %v1414
        %v1574 = vmul.f32 %v1380, %v1414
        %v1575 = vmul.f32 %v1381, %v1414
        %v1576 = vmul.f32 %v1382, %v1414
        %v1577 = vmul.f32 %v1383, %v1414
        %v1578 = vmul.f32 %v1384, %v1414
        %v1579 = vmul.f32 %v1385, %v1414
        %v1580 = vmul.f32 %v1386, %v1414
        %v1581 = vmul.f32 %v1387, %v1414
        %v1582 = vmul.f32 %v1388, %v1414
        %v1583 = vmul.f32 %v1389, %v1414
        %v1584 = vmul.f32 %v1390, %v1414
        %v1585 = vmul.f32 %v1391, %v1414
        %v1586 = vmul.f32 %v1392, %v1414
        %v1587 = vmul.f32 %v1393, %v1414
        %v1588 = vmul.f32 %v1394, %v1414
        %v1589 = vmul.f32 %v1395, %v1414
        %v1590 = vmul.f32 %v1396, %v1414
        %v1591 = vmul.f32 %v1397, %v1414
        %v1592 = vmul.f32 %v1398, %v1414
        %v1593 = vmul.f32 %v1399, %v1414
        %v1594 = vmul.f32 %v1400, %v1414
        %v1595 = vmul.f32 %v1401, %v1414
        %v1596 = vmul.f32 %v1402, %v1414
        %v1597 = vmul.f32 %v1403, %v1414
        %v1598 = vmul.f32 %v1404, %v1414
        %v1599 = vmul.f32 %v1405, %v1414
        %v1600 = vmul.f32 %v1406, %v1414
        %v1601 = vmul.f32 %v1407, %v1414
        %v1602 = vmul.f32 %v1408, %v1414
        %v1603 = vmul.f32 %v1409, %v1414
        %v1604 = vmul.f32 %v1410, %v1414
        %v1605 = vmul.f32 %v1411, %v1414
        %v1606 = vmul.f32 %v1412, %v1414
        %1607 = vst [vmem:[%s318] sm:$0xff] %v1415
        %1608 = vst [vmem:[%s318 + $0x8] sm:$0xff] %v1416
        %1609 = vst [vmem:[%s318 + $0x10] sm:$0xff] %v1417
        %1610 = vst [vmem:[%s318 + $0x18] sm:$0xff] %v1418
        %1611 = vst [vmem:[%s318 + $0x20] sm:$0xff] %v1419
        %1612 = vst [vmem:[%s318 + $0x28] sm:$0xff] %v1420
        %1613 = vst [vmem:[%s318 + $0x30] sm:$0xff] %v1421
        %1614 = vst [vmem:[%s318 + $0x38] sm:$0xff] %v1422
        %1615 = vst [vmem:[%s318 + $0x40] sm:$0xff] %v1423
        %1616 = vst [vmem:[%s318 + $0x48] sm:$0xff] %v1424
        %1617 = vst [vmem:[%s318 + $0x50] sm:$0xff] %v1425
        %1618 = vst [vmem:[%s318 + $0x58] sm:$0xff] %v1426
        %1619 = vst [vmem:[%s318 + $0x60] sm:$0xff] %v1427
        %1620 = vst [vmem:[%s318 + $0x68] sm:$0xff] %v1428
        %1621 = vst [vmem:[%s318 + $0x70] sm:$0xff] %v1429
        %1622 = vst [vmem:[%s318 + $0x78] sm:$0xff] %v1430
        %1623 = vst [vmem:[%s318 + $0x80] sm:$0xff] %v1431
        %1624 = vst [vmem:[%s318 + $0x88] sm:$0xff] %v1432
        %1625 = vst [vmem:[%s318 + $0x90] sm:$0xff] %v1433
        %1626 = vst [vmem:[%s318 + $0x98] sm:$0xff] %v1434
        %1627 = vst [vmem:[%s318 + $0xa0] sm:$0xff] %v1435
        %1628 = vst [vmem:[%s318 + $0xa8] sm:$0xff] %v1436
        %1629 = vst [vmem:[%s318 + $0xb0] sm:$0xff] %v1437
        %1630 = vst [vmem:[%s318 + $0xb8] sm:$0xff] %v1438
        %1631 = vst [vmem:[%s318 + $0xc0] sm:$0xff] %v1439
        %1632 = vst [vmem:[%s318 + $0xc8] sm:$0xff] %v1440
        %1633 = vst [vmem:[%s318 + $0xd0] sm:$0xff] %v1441
        %1634 = vst [vmem:[%s318 + $0xd8] sm:$0xff] %v1442
        %1635 = vst [vmem:[%s318 + $0xe0] sm:$0xff] %v1443
        %1636 = vst [vmem:[%s318 + $0xe8] sm:$0xff] %v1444
        %1637 = vst [vmem:[%s318 + $0xf0] sm:$0xff] %v1445
        %1638 = vst [vmem:[%s318 + $0xf8] sm:$0xff] %v1446
        %1639 = vst [vmem:[%s318 + $0x100] sm:$0xff] %v1447
        %1640 = vst [vmem:[%s318 + $0x108] sm:$0xff] %v1448
        %1641 = vst [vmem:[%s318 + $0x110] sm:$0xff] %v1449
        %1642 = vst [vmem:[%s318 + $0x118] sm:$0xff] %v1450
        %1643 = vst [vmem:[%s318 + $0x120] sm:$0xff] %v1451
        %1644 = vst [vmem:[%s318 + $0x128] sm:$0xff] %v1452
        %1645 = vst [vmem:[%s318 + $0x130] sm:$0xff] %v1453
        %1646 = vst [vmem:[%s318 + $0x138] sm:$0xff] %v1454
        %1647 = vst [vmem:[%s318 + $0x140] sm:$0xff] %v1455
        %1648 = vst [vmem:[%s318 + $0x148] sm:$0xff] %v1456
        %1649 = vst [vmem:[%s318 + $0x150] sm:$0xff] %v1457
        %1650 = vst [vmem:[%s318 + $0x158] sm:$0xff] %v1458
        %1651 = vst [vmem:[%s318 + $0x160] sm:$0xff] %v1459
        %1652 = vst [vmem:[%s318 + $0x168] sm:$0xff] %v1460
        %1653 = vst [vmem:[%s318 + $0x170] sm:$0xff] %v1461
        %1654 = vst [vmem:[%s318 + $0x178] sm:$0xff] %v1462
        %1655 = vst [vmem:[%s318 + $0x180] sm:$0xff] %v1463
        %1656 = vst [vmem:[%s318 + $0x188] sm:$0xff] %v1464
        %1657 = vst [vmem:[%s318 + $0x190] sm:$0xff] %v1465
        %1658 = vst [vmem:[%s318 + $0x198] sm:$0xff] %v1466
        %1659 = vst [vmem:[%s318 + $0x1a0] sm:$0xff] %v1467
        %1660 = vst [vmem:[%s318 + $0x1a8] sm:$0xff] %v1468
        %1661 = vst [vmem:[%s318 + $0x1b0] sm:$0xff] %v1469
        %1662 = vst [vmem:[%s318 + $0x1b8] sm:$0xff] %v1470
        %1663 = vst [vmem:[%s318 + $0x1c0] sm:$0xff] %v1471
        %1664 = vst [vmem:[%s318 + $0x1c8] sm:$0xff] %v1472
        %1665 = vst [vmem:[%s318 + $0x1d0] sm:$0xff] %v1473
        %1666 = vst [vmem:[%s318 + $0x1d8] sm:$0xff] %v1474
        %1667 = vst [vmem:[%s318 + $0x1e0] sm:$0xff] %v1475
        %1668 = vst [vmem:[%s318 + $0x1e8] sm:$0xff] %v1476
        %1669 = vst [vmem:[%s318 + $0x1f0] sm:$0xff] %v1477
        %1670 = vst [vmem:[%s318 + $0x1f8] sm:$0xff] %v1478
        %1671 = vst [vmem:[%s318 + $0x200] sm:$0xff] %v1479
        %1672 = vst [vmem:[%s318 + $0x208] sm:$0xff] %v1480
        %1673 = vst [vmem:[%s318 + $0x210] sm:$0xff] %v1481
        %1674 = vst [vmem:[%s318 + $0x218] sm:$0xff] %v1482
        %1675 = vst [vmem:[%s318 + $0x220] sm:$0xff] %v1483
        %1676 = vst [vmem:[%s318 + $0x228] sm:$0xff] %v1484
        %1677 = vst [vmem:[%s318 + $0x230] sm:$0xff] %v1485
        %1678 = vst [vmem:[%s318 + $0x238] sm:$0xff] %v1486
        %1679 = vst [vmem:[%s318 + $0x240] sm:$0xff] %v1487
        %1680 = vst [vmem:[%s318 + $0x248] sm:$0xff] %v1488
        %1681 = vst [vmem:[%s318 + $0x250] sm:$0xff] %v1489
        %1682 = vst [vmem:[%s318 + $0x258] sm:$0xff] %v1490
        %1683 = vst [vmem:[%s318 + $0x260] sm:$0xff] %v1491
        %1684 = vst [vmem:[%s318 + $0x268] sm:$0xff] %v1492
        %1685 = vst [vmem:[%s318 + $0x270] sm:$0xff] %v1493
        %1686 = vst [vmem:[%s318 + $0x278] sm:$0xff] %v1494
        %1687 = vst [vmem:[%s318 + $0x280] sm:$0xff] %v1495
        %1688 = vst [vmem:[%s318 + $0x288] sm:$0xff] %v1496
        %1689 = vst [vmem:[%s318 + $0x290] sm:$0xff] %v1497
        %1690 = vst [vmem:[%s318 + $0x298] sm:$0xff] %v1498
        %1691 = vst [vmem:[%s318 + $0x2a0] sm:$0xff] %v1499
        %1692 = vst [vmem:[%s318 + $0x2a8] sm:$0xff] %v1500
        %1693 = vst [vmem:[%s318 + $0x2b0] sm:$0xff] %v1501
        %1694 = vst [vmem:[%s318 + $0x2b8] sm:$0xff] %v1502
        %1695 = vst [vmem:[%s318 + $0x2c0] sm:$0xff] %v1503
        %1696 = vst [vmem:[%s318 + $0x2c8] sm:$0xff] %v1504
        %1697 = vst [vmem:[%s318 + $0x2d0] sm:$0xff] %v1505
        %1698 = vst [vmem:[%s318 + $0x2d8] sm:$0xff] %v1506
        %1699 = vst [vmem:[%s318 + $0x2e0] sm:$0xff] %v1507
        %1700 = vst [vmem:[%s318 + $0x2e8] sm:$0xff] %v1508
        %1701 = vst [vmem:[%s318 + $0x2f0] sm:$0xff] %v1509
        %1702 = vst [vmem:[%s318 + $0x2f8] sm:$0xff] %v1510
        %1703 = vst [vmem:[%s318 + $0x300] sm:$0xff] %v1511
        %1704 = vst [vmem:[%s318 + $0x308] sm:$0xff] %v1512
        %1705 = vst [vmem:[%s318 + $0x310] sm:$0xff] %v1513
        %1706 = vst [vmem:[%s318 + $0x318] sm:$0xff] %v1514
        %1707 = vst [vmem:[%s318 + $0x320] sm:$0xff] %v1515
        %1708 = vst [vmem:[%s318 + $0x328] sm:$0xff] %v1516
        %1709 = vst [vmem:[%s318 + $0x330] sm:$0xff] %v1517
        %1710 = vst [vmem:[%s318 + $0x338] sm:$0xff] %v1518
        %1711 = vst [vmem:[%s318 + $0x340] sm:$0xff] %v1519
        %1712 = vst [vmem:[%s318 + $0x348] sm:$0xff] %v1520
        %1713 = vst [vmem:[%s318 + $0x350] sm:$0xff] %v1521
        %1714 = vst [vmem:[%s318 + $0x358] sm:$0xff] %v1522
        %1715 = vst [vmem:[%s318 + $0x360] sm:$0xff] %v1523
        %1716 = vst [vmem:[%s318 + $0x368] sm:$0xff] %v1524
        %1717 = vst [vmem:[%s318 + $0x370] sm:$0xff] %v1525
        %1718 = vst [vmem:[%s318 + $0x378] sm:$0xff] %v1526
        %1719 = vst [vmem:[%s318 + $0x380] sm:$0xff] %v1527
        %1720 = vst [vmem:[%s318 + $0x388] sm:$0xff] %v1528
        %1721 = vst [vmem:[%s318 + $0x390] sm:$0xff] %v1529
        %1722 = vst [vmem:[%s318 + $0x398] sm:$0xff] %v1530
        %1723 = vst [vmem:[%s318 + $0x3a0] sm:$0xff] %v1531
        %1724 = vst [vmem:[%s318 + $0x3a8] sm:$0xff] %v1532
        %1725 = vst [vmem:[%s318 + $0x3b0] sm:$0xff] %v1533
        %1726 = vst [vmem:[%s318 + $0x3b8] sm:$0xff] %v1534
        %1727 = vst [vmem:[%s318 + $0x3c0] sm:$0xff] %v1535
        %1728 = vst [vmem:[%s318 + $0x3c8] sm:$0xff] %v1536
        %1729 = vst [vmem:[%s318 + $0x3d0] sm:$0xff] %v1537
        %1730 = vst [vmem:[%s318 + $0x3d8] sm:$0xff] %v1538
        %1731 = vst [vmem:[%s318 + $0x3e0] sm:$0xff] %v1539
        %1732 = vst [vmem:[%s318 + $0x3e8] sm:$0xff] %v1540
        %1733 = vst [vmem:[%s318 + $0x3f0] sm:$0xff] %v1541
        %1734 = vst [vmem:[%s318 + $0x3f8] sm:$0xff] %v1542
        %1735 = vst [vmem:[%s318 + $0x400] sm:$0xff] %v1543
        %1736 = vst [vmem:[%s318 + $0x408] sm:$0xff] %v1544
        %1737 = vst [vmem:[%s318 + $0x410] sm:$0xff] %v1545
        %1738 = vst [vmem:[%s318 + $0x418] sm:$0xff] %v1546
        %1739 = vst [vmem:[%s318 + $0x420] sm:$0xff] %v1547
        %1740 = vst [vmem:[%s318 + $0x428] sm:$0xff] %v1548
        %1741 = vst [vmem:[%s318 + $0x430] sm:$0xff] %v1549
        %1742 = vst [vmem:[%s318 + $0x438] sm:$0xff] %v1550
        %1743 = vst [vmem:[%s318 + $0x440] sm:$0xff] %v1551
        %1744 = vst [vmem:[%s318 + $0x448] sm:$0xff] %v1552
        %1745 = vst [vmem:[%s318 + $0x450] sm:$0xff] %v1553
        %1746 = vst [vmem:[%s318 + $0x458] sm:$0xff] %v1554
        %1747 = vst [vmem:[%s318 + $0x460] sm:$0xff] %v1555
        %1748 = vst [vmem:[%s318 + $0x468] sm:$0xff] %v1556
        %1749 = vst [vmem:[%s318 + $0x470] sm:$0xff] %v1557
        %1750 = vst [vmem:[%s318 + $0x478] sm:$0xff] %v1558
        %1751 = vst [vmem:[%s318 + $0x480] sm:$0xff] %v1559
        %1752 = vst [vmem:[%s318 + $0x488] sm:$0xff] %v1560
        %1753 = vst [vmem:[%s318 + $0x490] sm:$0xff] %v1561
        %1754 = vst [vmem:[%s318 + $0x498] sm:$0xff] %v1562
        %1755 = vst [vmem:[%s318 + $0x4a0] sm:$0xff] %v1563
        %1756 = vst [vmem:[%s318 + $0x4a8] sm:$0xff] %v1564
        %1757 = vst [vmem:[%s318 + $0x4b0] sm:$0xff] %v1565
        %1758 = vst [vmem:[%s318 + $0x4b8] sm:$0xff] %v1566
        %1759 = vst [vmem:[%s318 + $0x4c0] sm:$0xff] %v1567
        %1760 = vst [vmem:[%s318 + $0x4c8] sm:$0xff] %v1568
        %1761 = vst [vmem:[%s318 + $0x4d0] sm:$0xff] %v1569
        %1762 = vst [vmem:[%s318 + $0x4d8] sm:$0xff] %v1570
        %1763 = vst [vmem:[%s318 + $0x4e0] sm:$0xff] %v1571
        %1764 = vst [vmem:[%s318 + $0x4e8] sm:$0xff] %v1572
        %1765 = vst [vmem:[%s318 + $0x4f0] sm:$0xff] %v1573
        %1766 = vst [vmem:[%s318 + $0x4f8] sm:$0xff] %v1574
        %1767 = vst [vmem:[%s318 + $0x500] sm:$0xff] %v1575
        %1768 = vst [vmem:[%s318 + $0x508] sm:$0xff] %v1576
        %1769 = vst [vmem:[%s318 + $0x510] sm:$0xff] %v1577
        %1770 = vst [vmem:[%s318 + $0x518] sm:$0xff] %v1578
        %1771 = vst [vmem:[%s318 + $0x520] sm:$0xff] %v1579
        %1772 = vst [vmem:[%s318 + $0x528] sm:$0xff] %v1580
        %1773 = vst [vmem:[%s318 + $0x530] sm:$0xff] %v1581
        %1774 = vst [vmem:[%s318 + $0x538] sm:$0xff] %v1582
        %1775 = vst [vmem:[%s318 + $0x540] sm:$0xff] %v1583
        %1776 = vst [vmem:[%s318 + $0x548] sm:$0xff] %v1584
        %1777 = vst [vmem:[%s318 + $0x550] sm:$0xff] %v1585
        %1778 = vst [vmem:[%s318 + $0x558] sm:$0xff] %v1586
        %1779 = vst [vmem:[%s318 + $0x560] sm:$0xff] %v1587
        %1780 = vst [vmem:[%s318 + $0x568] sm:$0xff] %v1588
        %1781 = vst [vmem:[%s318 + $0x570] sm:$0xff] %v1589
        %1782 = vst [vmem:[%s318 + $0x578] sm:$0xff] %v1590
        %1783 = vst [vmem:[%s318 + $0x580] sm:$0xff] %v1591
        %1784 = vst [vmem:[%s318 + $0x588] sm:$0xff] %v1592
        %1785 = vst [vmem:[%s318 + $0x590] sm:$0xff] %v1593
        %1786 = vst [vmem:[%s318 + $0x598] sm:$0xff] %v1594
        %1787 = vst [vmem:[%s318 + $0x5a0] sm:$0xff] %v1595
        %1788 = vst [vmem:[%s318 + $0x5a8] sm:$0xff] %v1596
        %1789 = vst [vmem:[%s318 + $0x5b0] sm:$0xff] %v1597
        %1790 = vst [vmem:[%s318 + $0x5b8] sm:$0xff] %v1598
        %1791 = vst [vmem:[%s318 + $0x5c0] sm:$0xff] %v1599
        %1792 = vst [vmem:[%s318 + $0x5c8] sm:$0xff] %v1600
        %1793 = vst [vmem:[%s318 + $0x5d0] sm:$0xff] %v1601
        %1794 = vst [vmem:[%s318 + $0x5d8] sm:$0xff] %v1602
        %1795 = vst [vmem:[%s318 + $0x5e0] sm:$0xff] %v1603
        %1796 = vst [vmem:[%s318 + $0x5e8] sm:$0xff] %v1604
        %1797 = vst [vmem:[%s318 + $0x5f0] sm:$0xff] %v1605
        %1798 = vst [vmem:[%s318 + $0x5f8] sm:$0xff] %v1606
        %s1799 = scalar_lea.vmem %s270, 8 [#allocation2]
        %v1800 = vld [vmem:[%s1799] sm:$0xf]
        %v1801 = vld [vmem:[%s1799 + $0x4] sm:$0xf]
        %v1804 = vunpack.c.l.b16 %v1800
        %v1805 = vunpack.c.l.b16 %v1801
        %v1806 = vpack.c.b16 %v1805, %v1804
        %1808 = vmatpush.bf16.msra.mxu0 0
        %1809 = vmatpush.bf16.msra.mxu0 0
        %1810 = vmatpush.bf16.msra.mxu0 0
        %1811 = vmatpush.bf16.msra.mxu0 0
        %1812 = vmatpush.bf16.msra.mxu0 0
        %1813 = vmatpush.bf16.msra.mxu0 0
        %1814 = vmatpush.bf16.msra.mxu0 0
        %1815 = vmatpush.bf16.msra.mxu0 %v1806
        %1816 = vmatmul.bf16.gmra.mxu0 %v455
        %v1817 = vpop.f32.mrf.mxu0
        %v1818 = vadd.f32 0.0, %v1817
        %v1819 = vpop.f32.mrf.mxu0
        %v1820 = vadd.f32 0.0, %v1819
        %1821 = vmatmul.bf16.gmra.mxu0 %v458
        %v1822 = vpop.f32.mrf.mxu0
        %v1823 = vadd.f32 0.0, %v1822
        %v1824 = vpop.f32.mrf.mxu0
        %v1825 = vadd.f32 0.0, %v1824
        %1826 = vmatmul.bf16.gmra.mxu0 %v461
        %v1827 = vpop.f32.mrf.mxu0
        %v1828 = vadd.f32 0.0, %v1827
        %v1829 = vpop.f32.mrf.mxu0
        %v1830 = vadd.f32 0.0, %v1829
        %1831 = vmatmul.bf16.gmra.mxu0 %v464
        %v1832 = vpop.f32.mrf.mxu0
        %v1833 = vadd.f32 0.0, %v1832
        %v1834 = vpop.f32.mrf.mxu0
        %v1835 = vadd.f32 0.0, %v1834
        %1836 = vmatmul.bf16.gmra.mxu0 %v467
        %v1837 = vpop.f32.mrf.mxu0
        %v1838 = vadd.f32 0.0, %v1837
        %v1839 = vpop.f32.mrf.mxu0
        %v1840 = vadd.f32 0.0, %v1839
        %1841 = vmatmul.bf16.gmra.mxu0 %v470
        %v1842 = vpop.f32.mrf.mxu0
        %v1843 = vadd.f32 0.0, %v1842
        %v1844 = vpop.f32.mrf.mxu0
        %v1845 = vadd.f32 0.0, %v1844
        %1846 = vmatmul.bf16.gmra.mxu0 %v473
        %v1847 = vpop.f32.mrf.mxu0
        %v1848 = vadd.f32 0.0, %v1847
        %v1849 = vpop.f32.mrf.mxu0
        %v1850 = vadd.f32 0.0, %v1849
        %1851 = vmatmul.bf16.gmra.mxu0 %v476
        %v1852 = vpop.f32.mrf.mxu0
        %v1853 = vadd.f32 0.0, %v1852
        %v1854 = vpop.f32.mrf.mxu0
        %v1855 = vadd.f32 0.0, %v1854
        %1856 = vmatmul.bf16.gmra.mxu0 %v479
        %v1857 = vpop.f32.mrf.mxu0
        %v1858 = vadd.f32 0.0, %v1857
        %v1859 = vpop.f32.mrf.mxu0
        %v1860 = vadd.f32 0.0, %v1859
        %1861 = vmatmul.bf16.gmra.mxu0 %v482
        %v1862 = vpop.f32.mrf.mxu0
        %v1863 = vadd.f32 0.0, %v1862
        %v1864 = vpop.f32.mrf.mxu0
        %v1865 = vadd.f32 0.0, %v1864
        %1866 = vmatmul.bf16.gmra.mxu0 %v485
        %v1867 = vpop.f32.mrf.mxu0
        %v1868 = vadd.f32 0.0, %v1867
        %v1869 = vpop.f32.mrf.mxu0
        %v1870 = vadd.f32 0.0, %v1869
        %1871 = vmatmul.bf16.gmra.mxu0 %v488
        %v1872 = vpop.f32.mrf.mxu0
        %v1873 = vadd.f32 0.0, %v1872
        %v1874 = vpop.f32.mrf.mxu0
        %v1875 = vadd.f32 0.0, %v1874
        %1876 = vmatmul.bf16.gmra.mxu0 %v491
        %v1877 = vpop.f32.mrf.mxu0
        %v1878 = vadd.f32 0.0, %v1877
        %v1879 = vpop.f32.mrf.mxu0
        %v1880 = vadd.f32 0.0, %v1879
        %1881 = vmatmul.bf16.gmra.mxu0 %v494
        %v1882 = vpop.f32.mrf.mxu0
        %v1883 = vadd.f32 0.0, %v1882
        %v1884 = vpop.f32.mrf.mxu0
        %v1885 = vadd.f32 0.0, %v1884
        %1886 = vmatmul.bf16.gmra.mxu0 %v497
        %v1887 = vpop.f32.mrf.mxu0
        %v1888 = vadd.f32 0.0, %v1887
        %v1889 = vpop.f32.mrf.mxu0
        %v1890 = vadd.f32 0.0, %v1889
        %1891 = vmatmul.bf16.gmra.mxu0 %v500
        %v1892 = vpop.f32.mrf.mxu0
        %v1893 = vadd.f32 0.0, %v1892
        %v1894 = vpop.f32.mrf.mxu0
        %v1895 = vadd.f32 0.0, %v1894
        %1896 = vdwg.mxu0
        %v1897 = vpack.c.bf16 %v1820, %v1818
        %v1898 = vpack.c.bf16 %v1825, %v1823
        %v1899 = vpack.c.bf16 %v1830, %v1828
        %v1900 = vpack.c.bf16 %v1835, %v1833
        %v1901 = vpack.c.bf16 %v1840, %v1838
        %v1902 = vpack.c.bf16 %v1845, %v1843
        %v1903 = vpack.c.bf16 %v1850, %v1848
        %v1904 = vpack.c.bf16 %v1855, %v1853
        %v1905 = vpack.c.bf16 %v1860, %v1858
        %v1906 = vpack.c.bf16 %v1865, %v1863
        %v1907 = vpack.c.bf16 %v1870, %v1868
        %v1908 = vpack.c.bf16 %v1875, %v1873
        %v1909 = vpack.c.bf16 %v1880, %v1878
        %v1910 = vpack.c.bf16 %v1885, %v1883
        %v1911 = vpack.c.bf16 %v1890, %v1888
        %v1912 = vpack.c.bf16 %v1895, %v1893
        %v1914 = vsel %vm453, %v1897, 0
        %v1917 = vsel %vm453, %v1898, 0
        %v1920 = vsel %vm453, %v1899, 0
        %v1923 = vsel %vm453, %v1900, 0
        %v1926 = vsel %vm453, %v1901, 0
        %v1929 = vsel %vm453, %v1902, 0
        %v1932 = vsel %vm453, %v1903, 0
        %v1935 = vsel %vm453, %v1904, 0
        %v1938 = vsel %vm453, %v1905, 0
        %v1941 = vsel %vm453, %v1906, 0
        %v1944 = vsel %vm453, %v1907, 0
        %v1947 = vsel %vm453, %v1908, 0
        %v1950 = vsel %vm453, %v1909, 0
        %v1953 = vsel %vm453, %v1910, 0
        %v1956 = vsel %vm453, %v1911, 0
        %v1959 = vsel %vm453, %v1912, 0
        %1961 = vmatpush.bf16.msra.mxu0 0
        %1962 = vmatpush.bf16.msra.mxu0 0
        %1963 = vmatpush.bf16.msra.mxu0 0
        %1964 = vmatpush.bf16.msra.mxu0 0
        %1965 = vmatpush.bf16.msra.mxu0 0
        %1966 = vmatpush.bf16.msra.mxu0 0
        %1967 = vmatpush.bf16.msra.mxu0 0
        %1968 = vmatpush.bf16.msra.mxu0 %v625
        %1969 = vmatmul.bf16.gmra.mxu0 %v1914
        %v1970 = vpop.f32.mrf.mxu0
        %v1971 = vadd.f32 0.0, %v1970
        %v1972 = vpop.f32.mrf.mxu0
        %v1973 = vadd.f32 0.0, %v1972
        %1974 = vmatmul.bf16.gmra.mxu0 %v1917
        %v1975 = vpop.f32.mrf.mxu0
        %v1976 = vadd.f32 0.0, %v1975
        %v1977 = vpop.f32.mrf.mxu0
        %v1978 = vadd.f32 0.0, %v1977
        %1979 = vmatmul.bf16.gmra.mxu0 %v1920
        %v1980 = vpop.f32.mrf.mxu0
        %v1981 = vadd.f32 0.0, %v1980
        %v1982 = vpop.f32.mrf.mxu0
        %v1983 = vadd.f32 0.0, %v1982
        %1984 = vmatmul.bf16.gmra.mxu0 %v1923
        %v1985 = vpop.f32.mrf.mxu0
        %v1986 = vadd.f32 0.0, %v1985
        %v1987 = vpop.f32.mrf.mxu0
        %v1988 = vadd.f32 0.0, %v1987
        %1989 = vmatmul.bf16.gmra.mxu0 %v1926
        %v1990 = vpop.f32.mrf.mxu0
        %v1991 = vadd.f32 0.0, %v1990
        %v1992 = vpop.f32.mrf.mxu0
        %v1993 = vadd.f32 0.0, %v1992
        %1994 = vmatmul.bf16.gmra.mxu0 %v1929
        %v1995 = vpop.f32.mrf.mxu0
        %v1996 = vadd.f32 0.0, %v1995
        %v1997 = vpop.f32.mrf.mxu0
        %v1998 = vadd.f32 0.0, %v1997
        %1999 = vmatmul.bf16.gmra.mxu0 %v1932
        %v2000 = vpop.f32.mrf.mxu0
        %v2001 = vadd.f32 0.0, %v2000
        %v2002 = vpop.f32.mrf.mxu0
        %v2003 = vadd.f32 0.0, %v2002
        %2004 = vmatmul.bf16.gmra.mxu0 %v1935
        %v2005 = vpop.f32.mrf.mxu0
        %v2006 = vadd.f32 0.0, %v2005
        %v2007 = vpop.f32.mrf.mxu0
        %v2008 = vadd.f32 0.0, %v2007
        %2009 = vmatmul.bf16.gmra.mxu0 %v1938
        %v2010 = vpop.f32.mrf.mxu0
        %v2011 = vadd.f32 0.0, %v2010
        %v2012 = vpop.f32.mrf.mxu0
        %v2013 = vadd.f32 0.0, %v2012
        %2014 = vmatmul.bf16.gmra.mxu0 %v1941
        %v2015 = vpop.f32.mrf.mxu0
        %v2016 = vadd.f32 0.0, %v2015
        %v2017 = vpop.f32.mrf.mxu0
        %v2018 = vadd.f32 0.0, %v2017
        %2019 = vmatmul.bf16.gmra.mxu0 %v1944
        %v2020 = vpop.f32.mrf.mxu0
        %v2021 = vadd.f32 0.0, %v2020
        %v2022 = vpop.f32.mrf.mxu0
        %v2023 = vadd.f32 0.0, %v2022
        %2024 = vmatmul.bf16.gmra.mxu0 %v1947
        %v2025 = vpop.f32.mrf.mxu0
        %v2026 = vadd.f32 0.0, %v2025
        %v2027 = vpop.f32.mrf.mxu0
        %v2028 = vadd.f32 0.0, %v2027
        %2029 = vmatmul.bf16.gmra.mxu0 %v1950
        %v2030 = vpop.f32.mrf.mxu0
        %v2031 = vadd.f32 0.0, %v2030
        %v2032 = vpop.f32.mrf.mxu0
        %v2033 = vadd.f32 0.0, %v2032
        %2034 = vmatmul.bf16.gmra.mxu0 %v1953
        %v2035 = vpop.f32.mrf.mxu0
        %v2036 = vadd.f32 0.0, %v2035
        %v2037 = vpop.f32.mrf.mxu0
        %v2038 = vadd.f32 0.0, %v2037
        %2039 = vmatmul.bf16.gmra.mxu0 %v1956
        %v2040 = vpop.f32.mrf.mxu0
        %v2041 = vadd.f32 0.0, %v2040
        %v2042 = vpop.f32.mrf.mxu0
        %v2043 = vadd.f32 0.0, %v2042
        %2044 = vmatmul.bf16.gmra.mxu0 %v1959
        %v2045 = vpop.f32.mrf.mxu0
        %v2046 = vadd.f32 0.0, %v2045
        %v2047 = vpop.f32.mrf.mxu0
        %v2048 = vadd.f32 0.0, %v2047
        %2049 = vdwg.mxu0
        %2050 = vmatpush.bf16.msra.mxu0 0
        %2051 = vmatpush.bf16.msra.mxu0 0
        %2052 = vmatpush.bf16.msra.mxu0 0
        %2053 = vmatpush.bf16.msra.mxu0 0
        %2054 = vmatpush.bf16.msra.mxu0 0
        %2055 = vmatpush.bf16.msra.mxu0 0
        %2056 = vmatpush.bf16.msra.mxu0 0
        %2057 = vmatpush.bf16.msra.mxu0 %v626
        %2058 = vmatmul.bf16.gmra.mxu0 %v1914
        %v2059 = vpop.f32.mrf.mxu0
        %v2060 = vadd.f32 0.0, %v2059
        %v2061 = vpop.f32.mrf.mxu0
        %v2062 = vadd.f32 0.0, %v2061
        %2063 = vmatmul.bf16.gmra.mxu0 %v1917
        %v2064 = vpop.f32.mrf.mxu0
        %v2065 = vadd.f32 0.0, %v2064
        %v2066 = vpop.f32.mrf.mxu0
        %v2067 = vadd.f32 0.0, %v2066
        %2068 = vmatmul.bf16.gmra.mxu0 %v1920
        %v2069 = vpop.f32.mrf.mxu0
        %v2070 = vadd.f32 0.0, %v2069
        %v2071 = vpop.f32.mrf.mxu0
        %v2072 = vadd.f32 0.0, %v2071
        %2073 = vmatmul.bf16.gmra.mxu0 %v1923
        %v2074 = vpop.f32.mrf.mxu0
        %v2075 = vadd.f32 0.0, %v2074
        %v2076 = vpop.f32.mrf.mxu0
        %v2077 = vadd.f32 0.0, %v2076
        %2078 = vmatmul.bf16.gmra.mxu0 %v1926
        %v2079 = vpop.f32.mrf.mxu0
        %v2080 = vadd.f32 0.0, %v2079
        %v2081 = vpop.f32.mrf.mxu0
        %v2082 = vadd.f32 0.0, %v2081
        %2083 = vmatmul.bf16.gmra.mxu0 %v1929
        %v2084 = vpop.f32.mrf.mxu0
        %v2085 = vadd.f32 0.0, %v2084
        %v2086 = vpop.f32.mrf.mxu0
        %v2087 = vadd.f32 0.0, %v2086
        %2088 = vmatmul.bf16.gmra.mxu0 %v1932
        %v2089 = vpop.f32.mrf.mxu0
        %v2090 = vadd.f32 0.0, %v2089
        %v2091 = vpop.f32.mrf.mxu0
        %v2092 = vadd.f32 0.0, %v2091
        %2093 = vmatmul.bf16.gmra.mxu0 %v1935
        %v2094 = vpop.f32.mrf.mxu0
        %v2095 = vadd.f32 0.0, %v2094
        %v2096 = vpop.f32.mrf.mxu0
        %v2097 = vadd.f32 0.0, %v2096
        %2098 = vmatmul.bf16.gmra.mxu0 %v1938
        %v2099 = vpop.f32.mrf.mxu0
        %v2100 = vadd.f32 0.0, %v2099
        %v2101 = vpop.f32.mrf.mxu0
        %v2102 = vadd.f32 0.0, %v2101
        %2103 = vmatmul.bf16.gmra.mxu0 %v1941
        %v2104 = vpop.f32.mrf.mxu0
        %v2105 = vadd.f32 0.0, %v2104
        %v2106 = vpop.f32.mrf.mxu0
        %v2107 = vadd.f32 0.0, %v2106
        %2108 = vmatmul.bf16.gmra.mxu0 %v1944
        %v2109 = vpop.f32.mrf.mxu0
        %v2110 = vadd.f32 0.0, %v2109
        %v2111 = vpop.f32.mrf.mxu0
        %v2112 = vadd.f32 0.0, %v2111
        %2113 = vmatmul.bf16.gmra.mxu0 %v1947
        %v2114 = vpop.f32.mrf.mxu0
        %v2115 = vadd.f32 0.0, %v2114
        %v2116 = vpop.f32.mrf.mxu0
        %v2117 = vadd.f32 0.0, %v2116
        %2118 = vmatmul.bf16.gmra.mxu0 %v1950
        %v2119 = vpop.f32.mrf.mxu0
        %v2120 = vadd.f32 0.0, %v2119
        %v2121 = vpop.f32.mrf.mxu0
        %v2122 = vadd.f32 0.0, %v2121
        %2123 = vmatmul.bf16.gmra.mxu0 %v1953
        %v2124 = vpop.f32.mrf.mxu0
        %v2125 = vadd.f32 0.0, %v2124
        %v2126 = vpop.f32.mrf.mxu0
        %v2127 = vadd.f32 0.0, %v2126
        %2128 = vmatmul.bf16.gmra.mxu0 %v1956
        %v2129 = vpop.f32.mrf.mxu0
        %v2130 = vadd.f32 0.0, %v2129
        %v2131 = vpop.f32.mrf.mxu0
        %v2132 = vadd.f32 0.0, %v2131
        %2133 = vmatmul.bf16.gmra.mxu0 %v1959
        %v2134 = vpop.f32.mrf.mxu0
        %v2135 = vadd.f32 0.0, %v2134
        %v2136 = vpop.f32.mrf.mxu0
        %v2137 = vadd.f32 0.0, %v2136
        %2138 = vdwg.mxu0
        %2139 = vmatpush.bf16.msra.mxu0 0
        %2140 = vmatpush.bf16.msra.mxu0 0
        %2141 = vmatpush.bf16.msra.mxu0 0
        %2142 = vmatpush.bf16.msra.mxu0 0
        %2143 = vmatpush.bf16.msra.mxu0 0
        %2144 = vmatpush.bf16.msra.mxu0 0
        %2145 = vmatpush.bf16.msra.mxu0 0
        %2146 = vmatpush.bf16.msra.mxu0 %v627
        %2147 = vmatmul.bf16.gmra.mxu0 %v1914
        %v2148 = vpop.f32.mrf.mxu0
        %v2149 = vadd.f32 0.0, %v2148
        %v2150 = vpop.f32.mrf.mxu0
        %v2151 = vadd.f32 0.0, %v2150
        %2152 = vmatmul.bf16.gmra.mxu0 %v1917
        %v2153 = vpop.f32.mrf.mxu0
        %v2154 = vadd.f32 0.0, %v2153
        %v2155 = vpop.f32.mrf.mxu0
        %v2156 = vadd.f32 0.0, %v2155
        %2157 = vmatmul.bf16.gmra.mxu0 %v1920
        %v2158 = vpop.f32.mrf.mxu0
        %v2159 = vadd.f32 0.0, %v2158
        %v2160 = vpop.f32.mrf.mxu0
        %v2161 = vadd.f32 0.0, %v2160
        %2162 = vmatmul.bf16.gmra.mxu0 %v1923
        %v2163 = vpop.f32.mrf.mxu0
        %v2164 = vadd.f32 0.0, %v2163
        %v2165 = vpop.f32.mrf.mxu0
        %v2166 = vadd.f32 0.0, %v2165
        %2167 = vmatmul.bf16.gmra.mxu0 %v1926
        %v2168 = vpop.f32.mrf.mxu0
        %v2169 = vadd.f32 0.0, %v2168
        %v2170 = vpop.f32.mrf.mxu0
        %v2171 = vadd.f32 0.0, %v2170
        %2172 = vmatmul.bf16.gmra.mxu0 %v1929
        %v2173 = vpop.f32.mrf.mxu0
        %v2174 = vadd.f32 0.0, %v2173
        %v2175 = vpop.f32.mrf.mxu0
        %v2176 = vadd.f32 0.0, %v2175
        %2177 = vmatmul.bf16.gmra.mxu0 %v1932
        %v2178 = vpop.f32.mrf.mxu0
        %v2179 = vadd.f32 0.0, %v2178
        %v2180 = vpop.f32.mrf.mxu0
        %v2181 = vadd.f32 0.0, %v2180
        %2182 = vmatmul.bf16.gmra.mxu0 %v1935
        %v2183 = vpop.f32.mrf.mxu0
        %v2184 = vadd.f32 0.0, %v2183
        %v2185 = vpop.f32.mrf.mxu0
        %v2186 = vadd.f32 0.0, %v2185
        %2187 = vmatmul.bf16.gmra.mxu0 %v1938
        %v2188 = vpop.f32.mrf.mxu0
        %v2189 = vadd.f32 0.0, %v2188
        %v2190 = vpop.f32.mrf.mxu0
        %v2191 = vadd.f32 0.0, %v2190
        %2192 = vmatmul.bf16.gmra.mxu0 %v1941
        %v2193 = vpop.f32.mrf.mxu0
        %v2194 = vadd.f32 0.0, %v2193
        %v2195 = vpop.f32.mrf.mxu0
        %v2196 = vadd.f32 0.0, %v2195
        %2197 = vmatmul.bf16.gmra.mxu0 %v1944
        %v2198 = vpop.f32.mrf.mxu0
        %v2199 = vadd.f32 0.0, %v2198
        %v2200 = vpop.f32.mrf.mxu0
        %v2201 = vadd.f32 0.0, %v2200
        %2202 = vmatmul.bf16.gmra.mxu0 %v1947
        %v2203 = vpop.f32.mrf.mxu0
        %v2204 = vadd.f32 0.0, %v2203
        %v2205 = vpop.f32.mrf.mxu0
        %v2206 = vadd.f32 0.0, %v2205
        %2207 = vmatmul.bf16.gmra.mxu0 %v1950
        %v2208 = vpop.f32.mrf.mxu0
        %v2209 = vadd.f32 0.0, %v2208
        %v2210 = vpop.f32.mrf.mxu0
        %v2211 = vadd.f32 0.0, %v2210
        %2212 = vmatmul.bf16.gmra.mxu0 %v1953
        %v2213 = vpop.f32.mrf.mxu0
        %v2214 = vadd.f32 0.0, %v2213
        %v2215 = vpop.f32.mrf.mxu0
        %v2216 = vadd.f32 0.0, %v2215
        %2217 = vmatmul.bf16.gmra.mxu0 %v1956
        %v2218 = vpop.f32.mrf.mxu0
        %v2219 = vadd.f32 0.0, %v2218
        %v2220 = vpop.f32.mrf.mxu0
        %v2221 = vadd.f32 0.0, %v2220
        %2222 = vmatmul.bf16.gmra.mxu0 %v1959
        %v2223 = vpop.f32.mrf.mxu0
        %v2224 = vadd.f32 0.0, %v2223
        %v2225 = vpop.f32.mrf.mxu0
        %v2226 = vadd.f32 0.0, %v2225
        %2227 = vdwg.mxu0
        %2228 = vmatpush.bf16.msra.mxu0 0
        %2229 = vmatpush.bf16.msra.mxu0 0
        %2230 = vmatpush.bf16.msra.mxu0 0
        %2231 = vmatpush.bf16.msra.mxu0 0
        %2232 = vmatpush.bf16.msra.mxu0 0
        %2233 = vmatpush.bf16.msra.mxu0 0
        %2234 = vmatpush.bf16.msra.mxu0 0
        %2235 = vmatpush.bf16.msra.mxu0 %v628
        %2236 = vmatmul.bf16.gmra.mxu0 %v1914
        %v2237 = vpop.f32.mrf.mxu0
        %v2238 = vadd.f32 0.0, %v2237
        %v2239 = vpop.f32.mrf.mxu0
        %v2240 = vadd.f32 0.0, %v2239
        %2241 = vmatmul.bf16.gmra.mxu0 %v1917
        %v2242 = vpop.f32.mrf.mxu0
        %v2243 = vadd.f32 0.0, %v2242
        %v2244 = vpop.f32.mrf.mxu0
        %v2245 = vadd.f32 0.0, %v2244
        %2246 = vmatmul.bf16.gmra.mxu0 %v1920
        %v2247 = vpop.f32.mrf.mxu0
        %v2248 = vadd.f32 0.0, %v2247
        %v2249 = vpop.f32.mrf.mxu0
        %v2250 = vadd.f32 0.0, %v2249
        %2251 = vmatmul.bf16.gmra.mxu0 %v1923
        %v2252 = vpop.f32.mrf.mxu0
        %v2253 = vadd.f32 0.0, %v2252
        %v2254 = vpop.f32.mrf.mxu0
        %v2255 = vadd.f32 0.0, %v2254
        %2256 = vmatmul.bf16.gmra.mxu0 %v1926
        %v2257 = vpop.f32.mrf.mxu0
        %v2258 = vadd.f32 0.0, %v2257
        %v2259 = vpop.f32.mrf.mxu0
        %v2260 = vadd.f32 0.0, %v2259
        %2261 = vmatmul.bf16.gmra.mxu0 %v1929
        %v2262 = vpop.f32.mrf.mxu0
        %v2263 = vadd.f32 0.0, %v2262
        %v2264 = vpop.f32.mrf.mxu0
        %v2265 = vadd.f32 0.0, %v2264
        %2266 = vmatmul.bf16.gmra.mxu0 %v1932
        %v2267 = vpop.f32.mrf.mxu0
        %v2268 = vadd.f32 0.0, %v2267
        %v2269 = vpop.f32.mrf.mxu0
        %v2270 = vadd.f32 0.0, %v2269
        %2271 = vmatmul.bf16.gmra.mxu0 %v1935
        %v2272 = vpop.f32.mrf.mxu0
        %v2273 = vadd.f32 0.0, %v2272
        %v2274 = vpop.f32.mrf.mxu0
        %v2275 = vadd.f32 0.0, %v2274
        %2276 = vmatmul.bf16.gmra.mxu0 %v1938
        %v2277 = vpop.f32.mrf.mxu0
        %v2278 = vadd.f32 0.0, %v2277
        %v2279 = vpop.f32.mrf.mxu0
        %v2280 = vadd.f32 0.0, %v2279
        %2281 = vmatmul.bf16.gmra.mxu0 %v1941
        %v2282 = vpop.f32.mrf.mxu0
        %v2283 = vadd.f32 0.0, %v2282
        %v2284 = vpop.f32.mrf.mxu0
        %v2285 = vadd.f32 0.0, %v2284
        %2286 = vmatmul.bf16.gmra.mxu0 %v1944
        %v2287 = vpop.f32.mrf.mxu0
        %v2288 = vadd.f32 0.0, %v2287
        %v2289 = vpop.f32.mrf.mxu0
        %v2290 = vadd.f32 0.0, %v2289
        %2291 = vmatmul.bf16.gmra.mxu0 %v1947
        %v2292 = vpop.f32.mrf.mxu0
        %v2293 = vadd.f32 0.0, %v2292
        %v2294 = vpop.f32.mrf.mxu0
        %v2295 = vadd.f32 0.0, %v2294
        %2296 = vmatmul.bf16.gmra.mxu0 %v1950
        %v2297 = vpop.f32.mrf.mxu0
        %v2298 = vadd.f32 0.0, %v2297
        %v2299 = vpop.f32.mrf.mxu0
        %v2300 = vadd.f32 0.0, %v2299
        %2301 = vmatmul.bf16.gmra.mxu0 %v1953
        %v2302 = vpop.f32.mrf.mxu0
        %v2303 = vadd.f32 0.0, %v2302
        %v2304 = vpop.f32.mrf.mxu0
        %v2305 = vadd.f32 0.0, %v2304
        %2306 = vmatmul.bf16.gmra.mxu0 %v1956
        %v2307 = vpop.f32.mrf.mxu0
        %v2308 = vadd.f32 0.0, %v2307
        %v2309 = vpop.f32.mrf.mxu0
        %v2310 = vadd.f32 0.0, %v2309
        %2311 = vmatmul.bf16.gmra.mxu0 %v1959
        %v2312 = vpop.f32.mrf.mxu0
        %v2313 = vadd.f32 0.0, %v2312
        %v2314 = vpop.f32.mrf.mxu0
        %v2315 = vadd.f32 0.0, %v2314
        %2316 = vdwg.mxu0
        %2317 = vmatpush.bf16.msra.mxu0 0
        %2318 = vmatpush.bf16.msra.mxu0 0
        %2319 = vmatpush.bf16.msra.mxu0 0
        %2320 = vmatpush.bf16.msra.mxu0 0
        %2321 = vmatpush.bf16.msra.mxu0 0
        %2322 = vmatpush.bf16.msra.mxu0 0
        %2323 = vmatpush.bf16.msra.mxu0 0
        %2324 = vmatpush.bf16.msra.mxu0 %v629
        %2325 = vmatmul.bf16.gmra.mxu0 %v1914
        %v2326 = vpop.f32.mrf.mxu0
        %v2327 = vadd.f32 0.0, %v2326
        %v2328 = vpop.f32.mrf.mxu0
        %v2329 = vadd.f32 0.0, %v2328
        %2330 = vmatmul.bf16.gmra.mxu0 %v1917
        %v2331 = vpop.f32.mrf.mxu0
        %v2332 = vadd.f32 0.0, %v2331
        %v2333 = vpop.f32.mrf.mxu0
        %v2334 = vadd.f32 0.0, %v2333
        %2335 = vmatmul.bf16.gmra.mxu0 %v1920
        %v2336 = vpop.f32.mrf.mxu0
        %v2337 = vadd.f32 0.0, %v2336
        %v2338 = vpop.f32.mrf.mxu0
        %v2339 = vadd.f32 0.0, %v2338
        %2340 = vmatmul.bf16.gmra.mxu0 %v1923
        %v2341 = vpop.f32.mrf.mxu0
        %v2342 = vadd.f32 0.0, %v2341
        %v2343 = vpop.f32.mrf.mxu0
        %v2344 = vadd.f32 0.0, %v2343
        %2345 = vmatmul.bf16.gmra.mxu0 %v1926
        %v2346 = vpop.f32.mrf.mxu0
        %v2347 = vadd.f32 0.0, %v2346
        %v2348 = vpop.f32.mrf.mxu0
        %v2349 = vadd.f32 0.0, %v2348
        %2350 = vmatmul.bf16.gmra.mxu0 %v1929
        %v2351 = vpop.f32.mrf.mxu0
        %v2352 = vadd.f32 0.0, %v2351
        %v2353 = vpop.f32.mrf.mxu0
        %v2354 = vadd.f32 0.0, %v2353
        %2355 = vmatmul.bf16.gmra.mxu0 %v1932
        %v2356 = vpop.f32.mrf.mxu0
        %v2357 = vadd.f32 0.0, %v2356
        %v2358 = vpop.f32.mrf.mxu0
        %v2359 = vadd.f32 0.0, %v2358
        %2360 = vmatmul.bf16.gmra.mxu0 %v1935
        %v2361 = vpop.f32.mrf.mxu0
        %v2362 = vadd.f32 0.0, %v2361
        %v2363 = vpop.f32.mrf.mxu0
        %v2364 = vadd.f32 0.0, %v2363
        %2365 = vmatmul.bf16.gmra.mxu0 %v1938
        %v2366 = vpop.f32.mrf.mxu0
        %v2367 = vadd.f32 0.0, %v2366
        %v2368 = vpop.f32.mrf.mxu0
        %v2369 = vadd.f32 0.0, %v2368
        %2370 = vmatmul.bf16.gmra.mxu0 %v1941
        %v2371 = vpop.f32.mrf.mxu0
        %v2372 = vadd.f32 0.0, %v2371
        %v2373 = vpop.f32.mrf.mxu0
        %v2374 = vadd.f32 0.0, %v2373
        %2375 = vmatmul.bf16.gmra.mxu0 %v1944
        %v2376 = vpop.f32.mrf.mxu0
        %v2377 = vadd.f32 0.0, %v2376
        %v2378 = vpop.f32.mrf.mxu0
        %v2379 = vadd.f32 0.0, %v2378
        %2380 = vmatmul.bf16.gmra.mxu0 %v1947
        %v2381 = vpop.f32.mrf.mxu0
        %v2382 = vadd.f32 0.0, %v2381
        %v2383 = vpop.f32.mrf.mxu0
        %v2384 = vadd.f32 0.0, %v2383
        %2385 = vmatmul.bf16.gmra.mxu0 %v1950
        %v2386 = vpop.f32.mrf.mxu0
        %v2387 = vadd.f32 0.0, %v2386
        %v2388 = vpop.f32.mrf.mxu0
        %v2389 = vadd.f32 0.0, %v2388
        %2390 = vmatmul.bf16.gmra.mxu0 %v1953
        %v2391 = vpop.f32.mrf.mxu0
        %v2392 = vadd.f32 0.0, %v2391
        %v2393 = vpop.f32.mrf.mxu0
        %v2394 = vadd.f32 0.0, %v2393
        %2395 = vmatmul.bf16.gmra.mxu0 %v1956
        %v2396 = vpop.f32.mrf.mxu0
        %v2397 = vadd.f32 0.0, %v2396
        %v2398 = vpop.f32.mrf.mxu0
        %v2399 = vadd.f32 0.0, %v2398
        %2400 = vmatmul.bf16.gmra.mxu0 %v1959
        %v2401 = vpop.f32.mrf.mxu0
        %v2402 = vadd.f32 0.0, %v2401
        %v2403 = vpop.f32.mrf.mxu0
        %v2404 = vadd.f32 0.0, %v2403
        %2405 = vdwg.mxu0
        %2406 = vmatpush.bf16.msra.mxu0 0
        %2407 = vmatpush.bf16.msra.mxu0 0
        %2408 = vmatpush.bf16.msra.mxu0 0
        %2409 = vmatpush.bf16.msra.mxu0 0
        %2410 = vmatpush.bf16.msra.mxu0 0
        %2411 = vmatpush.bf16.msra.mxu0 0
        %2412 = vmatpush.bf16.msra.mxu0 0
        %2413 = vmatpush.bf16.msra.mxu0 %v630
        %2414 = vmatmul.bf16.gmra.mxu0 %v1914
        %v2415 = vpop.f32.mrf.mxu0
        %v2416 = vadd.f32 0.0, %v2415
        %v2417 = vpop.f32.mrf.mxu0
        %v2418 = vadd.f32 0.0, %v2417
        %2419 = vmatmul.bf16.gmra.mxu0 %v1917
        %v2420 = vpop.f32.mrf.mxu0
        %v2421 = vadd.f32 0.0, %v2420
        %v2422 = vpop.f32.mrf.mxu0
        %v2423 = vadd.f32 0.0, %v2422
        %2424 = vmatmul.bf16.gmra.mxu0 %v1920
        %v2425 = vpop.f32.mrf.mxu0
        %v2426 = vadd.f32 0.0, %v2425
        %v2427 = vpop.f32.mrf.mxu0
        %v2428 = vadd.f32 0.0, %v2427
        %2429 = vmatmul.bf16.gmra.mxu0 %v1923
        %v2430 = vpop.f32.mrf.mxu0
        %v2431 = vadd.f32 0.0, %v2430
        %v2432 = vpop.f32.mrf.mxu0
        %v2433 = vadd.f32 0.0, %v2432
        %2434 = vmatmul.bf16.gmra.mxu0 %v1926
        %v2435 = vpop.f32.mrf.mxu0
        %v2436 = vadd.f32 0.0, %v2435
        %v2437 = vpop.f32.mrf.mxu0
        %v2438 = vadd.f32 0.0, %v2437
        %2439 = vmatmul.bf16.gmra.mxu0 %v1929
        %v2440 = vpop.f32.mrf.mxu0
        %v2441 = vadd.f32 0.0, %v2440
        %v2442 = vpop.f32.mrf.mxu0
        %v2443 = vadd.f32 0.0, %v2442
        %2444 = vmatmul.bf16.gmra.mxu0 %v1932
        %v2445 = vpop.f32.mrf.mxu0
        %v2446 = vadd.f32 0.0, %v2445
        %v2447 = vpop.f32.mrf.mxu0
        %v2448 = vadd.f32 0.0, %v2447
        %2449 = vmatmul.bf16.gmra.mxu0 %v1935
        %v2450 = vpop.f32.mrf.mxu0
        %v2451 = vadd.f32 0.0, %v2450
        %v2452 = vpop.f32.mrf.mxu0
        %v2453 = vadd.f32 0.0, %v2452
        %2454 = vmatmul.bf16.gmra.mxu0 %v1938
        %v2455 = vpop.f32.mrf.mxu0
        %v2456 = vadd.f32 0.0, %v2455
        %v2457 = vpop.f32.mrf.mxu0
        %v2458 = vadd.f32 0.0, %v2457
        %2459 = vmatmul.bf16.gmra.mxu0 %v1941
        %v2460 = vpop.f32.mrf.mxu0
        %v2461 = vadd.f32 0.0, %v2460
        %v2462 = vpop.f32.mrf.mxu0
        %v2463 = vadd.f32 0.0, %v2462
        %2464 = vmatmul.bf16.gmra.mxu0 %v1944
        %v2465 = vpop.f32.mrf.mxu0
        %v2466 = vadd.f32 0.0, %v2465
        %v2467 = vpop.f32.mrf.mxu0
        %v2468 = vadd.f32 0.0, %v2467
        %2469 = vmatmul.bf16.gmra.mxu0 %v1947
        %v2470 = vpop.f32.mrf.mxu0
        %v2471 = vadd.f32 0.0, %v2470
        %v2472 = vpop.f32.mrf.mxu0
        %v2473 = vadd.f32 0.0, %v2472
        %2474 = vmatmul.bf16.gmra.mxu0 %v1950
        %v2475 = vpop.f32.mrf.mxu0
        %v2476 = vadd.f32 0.0, %v2475
        %v2477 = vpop.f32.mrf.mxu0
        %v2478 = vadd.f32 0.0, %v2477
        %2479 = vmatmul.bf16.gmra.mxu0 %v1953
        %v2480 = vpop.f32.mrf.mxu0
        %v2481 = vadd.f32 0.0, %v2480
        %v2482 = vpop.f32.mrf.mxu0
        %v2483 = vadd.f32 0.0, %v2482
        %2484 = vmatmul.bf16.gmra.mxu0 %v1956
        %v2485 = vpop.f32.mrf.mxu0
        %v2486 = vadd.f32 0.0, %v2485
        %v2487 = vpop.f32.mrf.mxu0
        %v2488 = vadd.f32 0.0, %v2487
        %2489 = vmatmul.bf16.gmra.mxu0 %v1959
        %v2490 = vpop.f32.mrf.mxu0
        %v2491 = vadd.f32 0.0, %v2490
        %v2492 = vpop.f32.mrf.mxu0
        %v2493 = vadd.f32 0.0, %v2492
        %2494 = vdwg.mxu0
        %s2495 = sld [smem:[#allocation8 + $0x1]]
        %v2496 = vstv %s2495
        %v2497 = vsub.f32 %v1971, %v2496
        %v2498 = vsub.f32 %v2060, %v2496
        %v2499 = vsub.f32 %v2149, %v2496
        %v2500 = vsub.f32 %v2238, %v2496
        %v2501 = vsub.f32 %v2327, %v2496
        %v2502 = vsub.f32 %v2416, %v2496
        %v2503 = vsub.f32 %v1973, %v2496
        %v2504 = vsub.f32 %v2062, %v2496
        %v2505 = vsub.f32 %v2151, %v2496
        %v2506 = vsub.f32 %v2240, %v2496
        %v2507 = vsub.f32 %v2329, %v2496
        %v2508 = vsub.f32 %v2418, %v2496
        %v2509 = vsub.f32 %v1976, %v2496
        %v2510 = vsub.f32 %v2065, %v2496
        %v2511 = vsub.f32 %v2154, %v2496
        %v2512 = vsub.f32 %v2243, %v2496
        %v2513 = vsub.f32 %v2332, %v2496
        %v2514 = vsub.f32 %v2421, %v2496
        %v2515 = vsub.f32 %v1978, %v2496
        %v2516 = vsub.f32 %v2067, %v2496
        %v2517 = vsub.f32 %v2156, %v2496
        %v2518 = vsub.f32 %v2245, %v2496
        %v2519 = vsub.f32 %v2334, %v2496
        %v2520 = vsub.f32 %v2423, %v2496
        %v2521 = vsub.f32 %v1981, %v2496
        %v2522 = vsub.f32 %v2070, %v2496
        %v2523 = vsub.f32 %v2159, %v2496
        %v2524 = vsub.f32 %v2248, %v2496
        %v2525 = vsub.f32 %v2337, %v2496
        %v2526 = vsub.f32 %v2426, %v2496
        %v2527 = vsub.f32 %v1983, %v2496
        %v2528 = vsub.f32 %v2072, %v2496
        %v2529 = vsub.f32 %v2161, %v2496
        %v2530 = vsub.f32 %v2250, %v2496
        %v2531 = vsub.f32 %v2339, %v2496
        %v2532 = vsub.f32 %v2428, %v2496
        %v2533 = vsub.f32 %v1986, %v2496
        %v2534 = vsub.f32 %v2075, %v2496
        %v2535 = vsub.f32 %v2164, %v2496
        %v2536 = vsub.f32 %v2253, %v2496
        %v2537 = vsub.f32 %v2342, %v2496
        %v2538 = vsub.f32 %v2431, %v2496
        %v2539 = vsub.f32 %v1988, %v2496
        %v2540 = vsub.f32 %v2077, %v2496
        %v2541 = vsub.f32 %v2166, %v2496
        %v2542 = vsub.f32 %v2255, %v2496
        %v2543 = vsub.f32 %v2344, %v2496
        %v2544 = vsub.f32 %v2433, %v2496
        %v2545 = vsub.f32 %v1991, %v2496
        %v2546 = vsub.f32 %v2080, %v2496
        %v2547 = vsub.f32 %v2169, %v2496
        %v2548 = vsub.f32 %v2258, %v2496
        %v2549 = vsub.f32 %v2347, %v2496
        %v2550 = vsub.f32 %v2436, %v2496
        %v2551 = vsub.f32 %v1993, %v2496
        %v2552 = vsub.f32 %v2082, %v2496
        %v2553 = vsub.f32 %v2171, %v2496
        %v2554 = vsub.f32 %v2260, %v2496
        %v2555 = vsub.f32 %v2349, %v2496
        %v2556 = vsub.f32 %v2438, %v2496
        %v2557 = vsub.f32 %v1996, %v2496
        %v2558 = vsub.f32 %v2085, %v2496
        %v2559 = vsub.f32 %v2174, %v2496
        %v2560 = vsub.f32 %v2263, %v2496
        %v2561 = vsub.f32 %v2352, %v2496
        %v2562 = vsub.f32 %v2441, %v2496
        %v2563 = vsub.f32 %v1998, %v2496
        %v2564 = vsub.f32 %v2087, %v2496
        %v2565 = vsub.f32 %v2176, %v2496
        %v2566 = vsub.f32 %v2265, %v2496
        %v2567 = vsub.f32 %v2354, %v2496
        %v2568 = vsub.f32 %v2443, %v2496
        %v2569 = vsub.f32 %v2001, %v2496
        %v2570 = vsub.f32 %v2090, %v2496
        %v2571 = vsub.f32 %v2179, %v2496
        %v2572 = vsub.f32 %v2268, %v2496
        %v2573 = vsub.f32 %v2357, %v2496
        %v2574 = vsub.f32 %v2446, %v2496
        %v2575 = vsub.f32 %v2003, %v2496
        %v2576 = vsub.f32 %v2092, %v2496
        %v2577 = vsub.f32 %v2181, %v2496
        %v2578 = vsub.f32 %v2270, %v2496
        %v2579 = vsub.f32 %v2359, %v2496
        %v2580 = vsub.f32 %v2448, %v2496
        %v2581 = vsub.f32 %v2006, %v2496
        %v2582 = vsub.f32 %v2095, %v2496
        %v2583 = vsub.f32 %v2184, %v2496
        %v2584 = vsub.f32 %v2273, %v2496
        %v2585 = vsub.f32 %v2362, %v2496
        %v2586 = vsub.f32 %v2451, %v2496
        %v2587 = vsub.f32 %v2008, %v2496
        %v2588 = vsub.f32 %v2097, %v2496
        %v2589 = vsub.f32 %v2186, %v2496
        %v2590 = vsub.f32 %v2275, %v2496
        %v2591 = vsub.f32 %v2364, %v2496
        %v2592 = vsub.f32 %v2453, %v2496
        %v2593 = vsub.f32 %v2011, %v2496
        %v2594 = vsub.f32 %v2100, %v2496
        %v2595 = vsub.f32 %v2189, %v2496
        %v2596 = vsub.f32 %v2278, %v2496
        %v2597 = vsub.f32 %v2367, %v2496
        %v2598 = vsub.f32 %v2456, %v2496
        %v2599 = vsub.f32 %v2013, %v2496
        %v2600 = vsub.f32 %v2102, %v2496
        %v2601 = vsub.f32 %v2191, %v2496
        %v2602 = vsub.f32 %v2280, %v2496
        %v2603 = vsub.f32 %v2369, %v2496
        %v2604 = vsub.f32 %v2458, %v2496
        %v2605 = vsub.f32 %v2016, %v2496
        %v2606 = vsub.f32 %v2105, %v2496
        %v2607 = vsub.f32 %v2194, %v2496
        %v2608 = vsub.f32 %v2283, %v2496
        %v2609 = vsub.f32 %v2372, %v2496
        %v2610 = vsub.f32 %v2461, %v2496
        %v2611 = vsub.f32 %v2018, %v2496
        %v2612 = vsub.f32 %v2107, %v2496
        %v2613 = vsub.f32 %v2196, %v2496
        %v2614 = vsub.f32 %v2285, %v2496
        %v2615 = vsub.f32 %v2374, %v2496
        %v2616 = vsub.f32 %v2463, %v2496
        %v2617 = vsub.f32 %v2021, %v2496
        %v2618 = vsub.f32 %v2110, %v2496
        %v2619 = vsub.f32 %v2199, %v2496
        %v2620 = vsub.f32 %v2288, %v2496
        %v2621 = vsub.f32 %v2377, %v2496
        %v2622 = vsub.f32 %v2466, %v2496
        %v2623 = vsub.f32 %v2023, %v2496
        %v2624 = vsub.f32 %v2112, %v2496
        %v2625 = vsub.f32 %v2201, %v2496
        %v2626 = vsub.f32 %v2290, %v2496
        %v2627 = vsub.f32 %v2379, %v2496
        %v2628 = vsub.f32 %v2468, %v2496
        %v2629 = vsub.f32 %v2026, %v2496
        %v2630 = vsub.f32 %v2115, %v2496
        %v2631 = vsub.f32 %v2204, %v2496
        %v2632 = vsub.f32 %v2293, %v2496
        %v2633 = vsub.f32 %v2382, %v2496
        %v2634 = vsub.f32 %v2471, %v2496
        %v2635 = vsub.f32 %v2028, %v2496
        %v2636 = vsub.f32 %v2117, %v2496
        %v2637 = vsub.f32 %v2206, %v2496
        %v2638 = vsub.f32 %v2295, %v2496
        %v2639 = vsub.f32 %v2384, %v2496
        %v2640 = vsub.f32 %v2473, %v2496
        %v2641 = vsub.f32 %v2031, %v2496
        %v2642 = vsub.f32 %v2120, %v2496
        %v2643 = vsub.f32 %v2209, %v2496
        %v2644 = vsub.f32 %v2298, %v2496
        %v2645 = vsub.f32 %v2387, %v2496
        %v2646 = vsub.f32 %v2476, %v2496
        %v2647 = vsub.f32 %v2033, %v2496
        %v2648 = vsub.f32 %v2122, %v2496
        %v2649 = vsub.f32 %v2211, %v2496
        %v2650 = vsub.f32 %v2300, %v2496
        %v2651 = vsub.f32 %v2389, %v2496
        %v2652 = vsub.f32 %v2478, %v2496
        %v2653 = vsub.f32 %v2036, %v2496
        %v2654 = vsub.f32 %v2125, %v2496
        %v2655 = vsub.f32 %v2214, %v2496
        %v2656 = vsub.f32 %v2303, %v2496
        %v2657 = vsub.f32 %v2392, %v2496
        %v2658 = vsub.f32 %v2481, %v2496
        %v2659 = vsub.f32 %v2038, %v2496
        %v2660 = vsub.f32 %v2127, %v2496
        %v2661 = vsub.f32 %v2216, %v2496
        %v2662 = vsub.f32 %v2305, %v2496
        %v2663 = vsub.f32 %v2394, %v2496
        %v2664 = vsub.f32 %v2483, %v2496
        %v2665 = vsub.f32 %v2041, %v2496
        %v2666 = vsub.f32 %v2130, %v2496
        %v2667 = vsub.f32 %v2219, %v2496
        %v2668 = vsub.f32 %v2308, %v2496
        %v2669 = vsub.f32 %v2397, %v2496
        %v2670 = vsub.f32 %v2486, %v2496
        %v2671 = vsub.f32 %v2043, %v2496
        %v2672 = vsub.f32 %v2132, %v2496
        %v2673 = vsub.f32 %v2221, %v2496
        %v2674 = vsub.f32 %v2310, %v2496
        %v2675 = vsub.f32 %v2399, %v2496
        %v2676 = vsub.f32 %v2488, %v2496
        %v2677 = vsub.f32 %v2046, %v2496
        %v2678 = vsub.f32 %v2135, %v2496
        %v2679 = vsub.f32 %v2224, %v2496
        %v2680 = vsub.f32 %v2313, %v2496
        %v2681 = vsub.f32 %v2402, %v2496
        %v2682 = vsub.f32 %v2491, %v2496
        %v2683 = vsub.f32 %v2048, %v2496
        %v2684 = vsub.f32 %v2137, %v2496
        %v2685 = vsub.f32 %v2226, %v2496
        %v2686 = vsub.f32 %v2315, %v2496
        %v2687 = vsub.f32 %v2404, %v2496
        %v2688 = vsub.f32 %v2493, %v2496
        %s2689 = sld [smem:[#allocation9 + $0x1]]
        %v2690 = vstv %s2689
        %v2691 = vmul.f32 %v2497, %v2690
        %v2692 = vmul.f32 %v2498, %v2690
        %v2693 = vmul.f32 %v2499, %v2690
        %v2694 = vmul.f32 %v2500, %v2690
        %v2695 = vmul.f32 %v2501, %v2690
        %v2696 = vmul.f32 %v2502, %v2690
        %v2697 = vmul.f32 %v2503, %v2690
        %v2698 = vmul.f32 %v2504, %v2690
        %v2699 = vmul.f32 %v2505, %v2690
        %v2700 = vmul.f32 %v2506, %v2690
        %v2701 = vmul.f32 %v2507, %v2690
        %v2702 = vmul.f32 %v2508, %v2690
        %v2703 = vmul.f32 %v2509, %v2690
        %v2704 = vmul.f32 %v2510, %v2690
        %v2705 = vmul.f32 %v2511, %v2690
        %v2706 = vmul.f32 %v2512, %v2690
        %v2707 = vmul.f32 %v2513, %v2690
        %v2708 = vmul.f32 %v2514, %v2690
        %v2709 = vmul.f32 %v2515, %v2690
        %v2710 = vmul.f32 %v2516, %v2690
        %v2711 = vmul.f32 %v2517, %v2690
        %v2712 = vmul.f32 %v2518, %v2690
        %v2713 = vmul.f32 %v2519, %v2690
        %v2714 = vmul.f32 %v2520, %v2690
        %v2715 = vmul.f32 %v2521, %v2690
        %v2716 = vmul.f32 %v2522, %v2690
        %v2717 = vmul.f32 %v2523, %v2690
        %v2718 = vmul.f32 %v2524, %v2690
        %v2719 = vmul.f32 %v2525, %v2690
        %v2720 = vmul.f32 %v2526, %v2690
        %v2721 = vmul.f32 %v2527, %v2690
        %v2722 = vmul.f32 %v2528, %v2690
        %v2723 = vmul.f32 %v2529, %v2690
        %v2724 = vmul.f32 %v2530, %v2690
        %v2725 = vmul.f32 %v2531, %v2690
        %v2726 = vmul.f32 %v2532, %v2690
        %v2727 = vmul.f32 %v2533, %v2690
        %v2728 = vmul.f32 %v2534, %v2690
        %v2729 = vmul.f32 %v2535, %v2690
        %v2730 = vmul.f32 %v2536, %v2690
        %v2731 = vmul.f32 %v2537, %v2690
        %v2732 = vmul.f32 %v2538, %v2690
        %v2733 = vmul.f32 %v2539, %v2690
        %v2734 = vmul.f32 %v2540, %v2690
        %v2735 = vmul.f32 %v2541, %v2690
        %v2736 = vmul.f32 %v2542, %v2690
        %v2737 = vmul.f32 %v2543, %v2690
        %v2738 = vmul.f32 %v2544, %v2690
        %v2739 = vmul.f32 %v2545, %v2690
        %v2740 = vmul.f32 %v2546, %v2690
        %v2741 = vmul.f32 %v2547, %v2690
        %v2742 = vmul.f32 %v2548, %v2690
        %v2743 = vmul.f32 %v2549, %v2690
        %v2744 = vmul.f32 %v2550, %v2690
        %v2745 = vmul.f32 %v2551, %v2690
        %v2746 = vmul.f32 %v2552, %v2690
        %v2747 = vmul.f32 %v2553, %v2690
        %v2748 = vmul.f32 %v2554, %v2690
        %v2749 = vmul.f32 %v2555, %v2690
        %v2750 = vmul.f32 %v2556, %v2690
        %v2751 = vmul.f32 %v2557, %v2690
        %v2752 = vmul.f32 %v2558, %v2690
        %v2753 = vmul.f32 %v2559, %v2690
        %v2754 = vmul.f32 %v2560, %v2690
        %v2755 = vmul.f32 %v2561, %v2690
        %v2756 = vmul.f32 %v2562, %v2690
        %v2757 = vmul.f32 %v2563, %v2690
        %v2758 = vmul.f32 %v2564, %v2690
        %v2759 = vmul.f32 %v2565, %v2690
        %v2760 = vmul.f32 %v2566, %v2690
        %v2761 = vmul.f32 %v2567, %v2690
        %v2762 = vmul.f32 %v2568, %v2690
        %v2763 = vmul.f32 %v2569, %v2690
        %v2764 = vmul.f32 %v2570, %v2690
        %v2765 = vmul.f32 %v2571, %v2690
        %v2766 = vmul.f32 %v2572, %v2690
        %v2767 = vmul.f32 %v2573, %v2690
        %v2768 = vmul.f32 %v2574, %v2690
        %v2769 = vmul.f32 %v2575, %v2690
        %v2770 = vmul.f32 %v2576, %v2690
        %v2771 = vmul.f32 %v2577, %v2690
        %v2772 = vmul.f32 %v2578, %v2690
        %v2773 = vmul.f32 %v2579, %v2690
        %v2774 = vmul.f32 %v2580, %v2690
        %v2775 = vmul.f32 %v2581, %v2690
        %v2776 = vmul.f32 %v2582, %v2690
        %v2777 = vmul.f32 %v2583, %v2690
        %v2778 = vmul.f32 %v2584, %v2690
        %v2779 = vmul.f32 %v2585, %v2690
        %v2780 = vmul.f32 %v2586, %v2690
        %v2781 = vmul.f32 %v2587, %v2690
        %v2782 = vmul.f32 %v2588, %v2690
        %v2783 = vmul.f32 %v2589, %v2690
        %v2784 = vmul.f32 %v2590, %v2690
        %v2785 = vmul.f32 %v2591, %v2690
        %v2786 = vmul.f32 %v2592, %v2690
        %v2787 = vmul.f32 %v2593, %v2690
        %v2788 = vmul.f32 %v2594, %v2690
        %v2789 = vmul.f32 %v2595, %v2690
        %v2790 = vmul.f32 %v2596, %v2690
        %v2791 = vmul.f32 %v2597, %v2690
        %v2792 = vmul.f32 %v2598, %v2690
        %v2793 = vmul.f32 %v2599, %v2690
        %v2794 = vmul.f32 %v2600, %v2690
        %v2795 = vmul.f32 %v2601, %v2690
        %v2796 = vmul.f32 %v2602, %v2690
        %v2797 = vmul.f32 %v2603, %v2690
        %v2798 = vmul.f32 %v2604, %v2690
        %v2799 = vmul.f32 %v2605, %v2690
        %v2800 = vmul.f32 %v2606, %v2690
        %v2801 = vmul.f32 %v2607, %v2690
        %v2802 = vmul.f32 %v2608, %v2690
        %v2803 = vmul.f32 %v2609, %v2690
        %v2804 = vmul.f32 %v2610, %v2690
        %v2805 = vmul.f32 %v2611, %v2690
        %v2806 = vmul.f32 %v2612, %v2690
        %v2807 = vmul.f32 %v2613, %v2690
        %v2808 = vmul.f32 %v2614, %v2690
        %v2809 = vmul.f32 %v2615, %v2690
        %v2810 = vmul.f32 %v2616, %v2690
        %v2811 = vmul.f32 %v2617, %v2690
        %v2812 = vmul.f32 %v2618, %v2690
        %v2813 = vmul.f32 %v2619, %v2690
        %v2814 = vmul.f32 %v2620, %v2690
        %v2815 = vmul.f32 %v2621, %v2690
        %v2816 = vmul.f32 %v2622, %v2690
        %v2817 = vmul.f32 %v2623, %v2690
        %v2818 = vmul.f32 %v2624, %v2690
        %v2819 = vmul.f32 %v2625, %v2690
        %v2820 = vmul.f32 %v2626, %v2690
        %v2821 = vmul.f32 %v2627, %v2690
        %v2822 = vmul.f32 %v2628, %v2690
        %v2823 = vmul.f32 %v2629, %v2690
        %v2824 = vmul.f32 %v2630, %v2690
        %v2825 = vmul.f32 %v2631, %v2690
        %v2826 = vmul.f32 %v2632, %v2690
        %v2827 = vmul.f32 %v2633, %v2690
        %v2828 = vmul.f32 %v2634, %v2690
        %v2829 = vmul.f32 %v2635, %v2690
        %v2830 = vmul.f32 %v2636, %v2690
        %v2831 = vmul.f32 %v2637, %v2690
        %v2832 = vmul.f32 %v2638, %v2690
        %v2833 = vmul.f32 %v2639, %v2690
        %v2834 = vmul.f32 %v2640, %v2690
        %v2835 = vmul.f32 %v2641, %v2690
        %v2836 = vmul.f32 %v2642, %v2690
        %v2837 = vmul.f32 %v2643, %v2690
        %v2838 = vmul.f32 %v2644, %v2690
        %v2839 = vmul.f32 %v2645, %v2690
        %v2840 = vmul.f32 %v2646, %v2690
        %v2841 = vmul.f32 %v2647, %v2690
        %v2842 = vmul.f32 %v2648, %v2690
        %v2843 = vmul.f32 %v2649, %v2690
        %v2844 = vmul.f32 %v2650, %v2690
        %v2845 = vmul.f32 %v2651, %v2690
        %v2846 = vmul.f32 %v2652, %v2690
        %v2847 = vmul.f32 %v2653, %v2690
        %v2848 = vmul.f32 %v2654, %v2690
        %v2849 = vmul.f32 %v2655, %v2690
        %v2850 = vmul.f32 %v2656, %v2690
        %v2851 = vmul.f32 %v2657, %v2690
        %v2852 = vmul.f32 %v2658, %v2690
        %v2853 = vmul.f32 %v2659, %v2690
        %v2854 = vmul.f32 %v2660, %v2690
        %v2855 = vmul.f32 %v2661, %v2690
        %v2856 = vmul.f32 %v2662, %v2690
        %v2857 = vmul.f32 %v2663, %v2690
        %v2858 = vmul.f32 %v2664, %v2690
        %v2859 = vmul.f32 %v2665, %v2690
        %v2860 = vmul.f32 %v2666, %v2690
        %v2861 = vmul.f32 %v2667, %v2690
        %v2862 = vmul.f32 %v2668, %v2690
        %v2863 = vmul.f32 %v2669, %v2690
        %v2864 = vmul.f32 %v2670, %v2690
        %v2865 = vmul.f32 %v2671, %v2690
        %v2866 = vmul.f32 %v2672, %v2690
        %v2867 = vmul.f32 %v2673, %v2690
        %v2868 = vmul.f32 %v2674, %v2690
        %v2869 = vmul.f32 %v2675, %v2690
        %v2870 = vmul.f32 %v2676, %v2690
        %v2871 = vmul.f32 %v2677, %v2690
        %v2872 = vmul.f32 %v2678, %v2690
        %v2873 = vmul.f32 %v2679, %v2690
        %v2874 = vmul.f32 %v2680, %v2690
        %v2875 = vmul.f32 %v2681, %v2690
        %v2876 = vmul.f32 %v2682, %v2690
        %v2877 = vmul.f32 %v2683, %v2690
        %v2878 = vmul.f32 %v2684, %v2690
        %v2879 = vmul.f32 %v2685, %v2690
        %v2880 = vmul.f32 %v2686, %v2690
        %v2881 = vmul.f32 %v2687, %v2690
        %v2882 = vmul.f32 %v2688, %v2690
        %s2883 = scalar_lea.vmem %s318, 1536 [#allocation11]
        %2884 = vst [vmem:[%s2883] sm:$0xff] %v2691
        %2885 = vst [vmem:[%s2883 + $0x8] sm:$0xff] %v2692
        %2886 = vst [vmem:[%s2883 + $0x10] sm:$0xff] %v2693
        %2887 = vst [vmem:[%s2883 + $0x18] sm:$0xff] %v2694
        %2888 = vst [vmem:[%s2883 + $0x20] sm:$0xff] %v2695
        %2889 = vst [vmem:[%s2883 + $0x28] sm:$0xff] %v2696
        %2890 = vst [vmem:[%s2883 + $0x30] sm:$0xff] %v2697
        %2891 = vst [vmem:[%s2883 + $0x38] sm:$0xff] %v2698
        %2892 = vst [vmem:[%s2883 + $0x40] sm:$0xff] %v2699
        %2893 = vst [vmem:[%s2883 + $0x48] sm:$0xff] %v2700
        %2894 = vst [vmem:[%s2883 + $0x50] sm:$0xff] %v2701
        %2895 = vst [vmem:[%s2883 + $0x58] sm:$0xff] %v2702
        %2896 = vst [vmem:[%s2883 + $0x60] sm:$0xff] %v2703
        %2897 = vst [vmem:[%s2883 + $0x68] sm:$0xff] %v2704
        %2898 = vst [vmem:[%s2883 + $0x70] sm:$0xff] %v2705
        %2899 = vst [vmem:[%s2883 + $0x78] sm:$0xff] %v2706
        %2900 = vst [vmem:[%s2883 + $0x80] sm:$0xff] %v2707
        %2901 = vst [vmem:[%s2883 + $0x88] sm:$0xff] %v2708
        %2902 = vst [vmem:[%s2883 + $0x90] sm:$0xff] %v2709
        %2903 = vst [vmem:[%s2883 + $0x98] sm:$0xff] %v2710
        %2904 = vst [vmem:[%s2883 + $0xa0] sm:$0xff] %v2711
        %2905 = vst [vmem:[%s2883 + $0xa8] sm:$0xff] %v2712
        %2906 = vst [vmem:[%s2883 + $0xb0] sm:$0xff] %v2713
        %2907 = vst [vmem:[%s2883 + $0xb8] sm:$0xff] %v2714
        %2908 = vst [vmem:[%s2883 + $0xc0] sm:$0xff] %v2715
        %2909 = vst [vmem:[%s2883 + $0xc8] sm:$0xff] %v2716
        %2910 = vst [vmem:[%s2883 + $0xd0] sm:$0xff] %v2717
        %2911 = vst [vmem:[%s2883 + $0xd8] sm:$0xff] %v2718
        %2912 = vst [vmem:[%s2883 + $0xe0] sm:$0xff] %v2719
        %2913 = vst [vmem:[%s2883 + $0xe8] sm:$0xff] %v2720
        %2914 = vst [vmem:[%s2883 + $0xf0] sm:$0xff] %v2721
        %2915 = vst [vmem:[%s2883 + $0xf8] sm:$0xff] %v2722
        %2916 = vst [vmem:[%s2883 + $0x100] sm:$0xff] %v2723
        %2917 = vst [vmem:[%s2883 + $0x108] sm:$0xff] %v2724
        %2918 = vst [vmem:[%s2883 + $0x110] sm:$0xff] %v2725
        %2919 = vst [vmem:[%s2883 + $0x118] sm:$0xff] %v2726
        %2920 = vst [vmem:[%s2883 + $0x120] sm:$0xff] %v2727
        %2921 = vst [vmem:[%s2883 + $0x128] sm:$0xff] %v2728
        %2922 = vst [vmem:[%s2883 + $0x130] sm:$0xff] %v2729
        %2923 = vst [vmem:[%s2883 + $0x138] sm:$0xff] %v2730
        %2924 = vst [vmem:[%s2883 + $0x140] sm:$0xff] %v2731
        %2925 = vst [vmem:[%s2883 + $0x148] sm:$0xff] %v2732
        %2926 = vst [vmem:[%s2883 + $0x150] sm:$0xff] %v2733
        %2927 = vst [vmem:[%s2883 + $0x158] sm:$0xff] %v2734
        %2928 = vst [vmem:[%s2883 + $0x160] sm:$0xff] %v2735
        %2929 = vst [vmem:[%s2883 + $0x168] sm:$0xff] %v2736
        %2930 = vst [vmem:[%s2883 + $0x170] sm:$0xff] %v2737
        %2931 = vst [vmem:[%s2883 + $0x178] sm:$0xff] %v2738
        %2932 = vst [vmem:[%s2883 + $0x180] sm:$0xff] %v2739
        %2933 = vst [vmem:[%s2883 + $0x188] sm:$0xff] %v2740
        %2934 = vst [vmem:[%s2883 + $0x190] sm:$0xff] %v2741
        %2935 = vst [vmem:[%s2883 + $0x198] sm:$0xff] %v2742
        %2936 = vst [vmem:[%s2883 + $0x1a0] sm:$0xff] %v2743
        %2937 = vst [vmem:[%s2883 + $0x1a8] sm:$0xff] %v2744
        %2938 = vst [vmem:[%s2883 + $0x1b0] sm:$0xff] %v2745
        %2939 = vst [vmem:[%s2883 + $0x1b8] sm:$0xff] %v2746
        %2940 = vst [vmem:[%s2883 + $0x1c0] sm:$0xff] %v2747
        %2941 = vst [vmem:[%s2883 + $0x1c8] sm:$0xff] %v2748
        %2942 = vst [vmem:[%s2883 + $0x1d0] sm:$0xff] %v2749
        %2943 = vst [vmem:[%s2883 + $0x1d8] sm:$0xff] %v2750
        %2944 = vst [vmem:[%s2883 + $0x1e0] sm:$0xff] %v2751
        %2945 = vst [vmem:[%s2883 + $0x1e8] sm:$0xff] %v2752
        %2946 = vst [vmem:[%s2883 + $0x1f0] sm:$0xff] %v2753
        %2947 = vst [vmem:[%s2883 + $0x1f8] sm:$0xff] %v2754
        %2948 = vst [vmem:[%s2883 + $0x200] sm:$0xff] %v2755
        %2949 = vst [vmem:[%s2883 + $0x208] sm:$0xff] %v2756
        %2950 = vst [vmem:[%s2883 + $0x210] sm:$0xff] %v2757
        %2951 = vst [vmem:[%s2883 + $0x218] sm:$0xff] %v2758
        %2952 = vst [vmem:[%s2883 + $0x220] sm:$0xff] %v2759
        %2953 = vst [vmem:[%s2883 + $0x228] sm:$0xff] %v2760
        %2954 = vst [vmem:[%s2883 + $0x230] sm:$0xff] %v2761
        %2955 = vst [vmem:[%s2883 + $0x238] sm:$0xff] %v2762
        %2956 = vst [vmem:[%s2883 + $0x240] sm:$0xff] %v2763
        %2957 = vst [vmem:[%s2883 + $0x248] sm:$0xff] %v2764
        %2958 = vst [vmem:[%s2883 + $0x250] sm:$0xff] %v2765
        %2959 = vst [vmem:[%s2883 + $0x258] sm:$0xff] %v2766
        %2960 = vst [vmem:[%s2883 + $0x260] sm:$0xff] %v2767
        %2961 = vst [vmem:[%s2883 + $0x268] sm:$0xff] %v2768
        %2962 = vst [vmem:[%s2883 + $0x270] sm:$0xff] %v2769
        %2963 = vst [vmem:[%s2883 + $0x278] sm:$0xff] %v2770
        %2964 = vst [vmem:[%s2883 + $0x280] sm:$0xff] %v2771
        %2965 = vst [vmem:[%s2883 + $0x288] sm:$0xff] %v2772
        %2966 = vst [vmem:[%s2883 + $0x290] sm:$0xff] %v2773
        %2967 = vst [vmem:[%s2883 + $0x298] sm:$0xff] %v2774
        %2968 = vst [vmem:[%s2883 + $0x2a0] sm:$0xff] %v2775
        %2969 = vst [vmem:[%s2883 + $0x2a8] sm:$0xff] %v2776
        %2970 = vst [vmem:[%s2883 + $0x2b0] sm:$0xff] %v2777
        %2971 = vst [vmem:[%s2883 + $0x2b8] sm:$0xff] %v2778
        %2972 = vst [vmem:[%s2883 + $0x2c0] sm:$0xff] %v2779
        %2973 = vst [vmem:[%s2883 + $0x2c8] sm:$0xff] %v2780
        %2974 = vst [vmem:[%s2883 + $0x2d0] sm:$0xff] %v2781
        %2975 = vst [vmem:[%s2883 + $0x2d8] sm:$0xff] %v2782
        %2976 = vst [vmem:[%s2883 + $0x2e0] sm:$0xff] %v2783
        %2977 = vst [vmem:[%s2883 + $0x2e8] sm:$0xff] %v2784
        %2978 = vst [vmem:[%s2883 + $0x2f0] sm:$0xff] %v2785
        %2979 = vst [vmem:[%s2883 + $0x2f8] sm:$0xff] %v2786
        %2980 = vst [vmem:[%s2883 + $0x300] sm:$0xff] %v2787
        %2981 = vst [vmem:[%s2883 + $0x308] sm:$0xff] %v2788
        %2982 = vst [vmem:[%s2883 + $0x310] sm:$0xff] %v2789
        %2983 = vst [vmem:[%s2883 + $0x318] sm:$0xff] %v2790
        %2984 = vst [vmem:[%s2883 + $0x320] sm:$0xff] %v2791
        %2985 = vst [vmem:[%s2883 + $0x328] sm:$0xff] %v2792
        %2986 = vst [vmem:[%s2883 + $0x330] sm:$0xff] %v2793
        %2987 = vst [vmem:[%s2883 + $0x338] sm:$0xff] %v2794
        %2988 = vst [vmem:[%s2883 + $0x340] sm:$0xff] %v2795
        %2989 = vst [vmem:[%s2883 + $0x348] sm:$0xff] %v2796
        %2990 = vst [vmem:[%s2883 + $0x350] sm:$0xff] %v2797
        %2991 = vst [vmem:[%s2883 + $0x358] sm:$0xff] %v2798
        %2992 = vst [vmem:[%s2883 + $0x360] sm:$0xff] %v2799
        %2993 = vst [vmem:[%s2883 + $0x368] sm:$0xff] %v2800
        %2994 = vst [vmem:[%s2883 + $0x370] sm:$0xff] %v2801
        %2995 = vst [vmem:[%s2883 + $0x378] sm:$0xff] %v2802
        %2996 = vst [vmem:[%s2883 + $0x380] sm:$0xff] %v2803
        %2997 = vst [vmem:[%s2883 + $0x388] sm:$0xff] %v2804
        %2998 = vst [vmem:[%s2883 + $0x390] sm:$0xff] %v2805
        %2999 = vst [vmem:[%s2883 + $0x398] sm:$0xff] %v2806
        %3000 = vst [vmem:[%s2883 + $0x3a0] sm:$0xff] %v2807
        %3001 = vst [vmem:[%s2883 + $0x3a8] sm:$0xff] %v2808
        %3002 = vst [vmem:[%s2883 + $0x3b0] sm:$0xff] %v2809
        %3003 = vst [vmem:[%s2883 + $0x3b8] sm:$0xff] %v2810
        %3004 = vst [vmem:[%s2883 + $0x3c0] sm:$0xff] %v2811
        %3005 = vst [vmem:[%s2883 + $0x3c8] sm:$0xff] %v2812
        %3006 = vst [vmem:[%s2883 + $0x3d0] sm:$0xff] %v2813
        %3007 = vst [vmem:[%s2883 + $0x3d8] sm:$0xff] %v2814
        %3008 = vst [vmem:[%s2883 + $0x3e0] sm:$0xff] %v2815
        %3009 = vst [vmem:[%s2883 + $0x3e8] sm:$0xff] %v2816
        %3010 = vst [vmem:[%s2883 + $0x3f0] sm:$0xff] %v2817
        %3011 = vst [vmem:[%s2883 + $0x3f8] sm:$0xff] %v2818
        %3012 = vst [vmem:[%s2883 + $0x400] sm:$0xff] %v2819
        %3013 = vst [vmem:[%s2883 + $0x408] sm:$0xff] %v2820
        %3014 = vst [vmem:[%s2883 + $0x410] sm:$0xff] %v2821
        %3015 = vst [vmem:[%s2883 + $0x418] sm:$0xff] %v2822
        %3016 = vst [vmem:[%s2883 + $0x420] sm:$0xff] %v2823
        %3017 = vst [vmem:[%s2883 + $0x428] sm:$0xff] %v2824
        %3018 = vst [vmem:[%s2883 + $0x430] sm:$0xff] %v2825
        %3019 = vst [vmem:[%s2883 + $0x438] sm:$0xff] %v2826
        %3020 = vst [vmem:[%s2883 + $0x440] sm:$0xff] %v2827
        %3021 = vst [vmem:[%s2883 + $0x448] sm:$0xff] %v2828
        %3022 = vst [vmem:[%s2883 + $0x450] sm:$0xff] %v2829
        %3023 = vst [vmem:[%s2883 + $0x458] sm:$0xff] %v2830
        %3024 = vst [vmem:[%s2883 + $0x460] sm:$0xff] %v2831
        %3025 = vst [vmem:[%s2883 + $0x468] sm:$0xff] %v2832
        %3026 = vst [vmem:[%s2883 + $0x470] sm:$0xff] %v2833
        %3027 = vst [vmem:[%s2883 + $0x478] sm:$0xff] %v2834
        %3028 = vst [vmem:[%s2883 + $0x480] sm:$0xff] %v2835
        %3029 = vst [vmem:[%s2883 + $0x488] sm:$0xff] %v2836
        %3030 = vst [vmem:[%s2883 + $0x490] sm:$0xff] %v2837
        %3031 = vst [vmem:[%s2883 + $0x498] sm:$0xff] %v2838
        %3032 = vst [vmem:[%s2883 + $0x4a0] sm:$0xff] %v2839
        %3033 = vst [vmem:[%s2883 + $0x4a8] sm:$0xff] %v2840
        %3034 = vst [vmem:[%s2883 + $0x4b0] sm:$0xff] %v2841
        %3035 = vst [vmem:[%s2883 + $0x4b8] sm:$0xff] %v2842
        %3036 = vst [vmem:[%s2883 + $0x4c0] sm:$0xff] %v2843
        %3037 = vst [vmem:[%s2883 + $0x4c8] sm:$0xff] %v2844
        %3038 = vst [vmem:[%s2883 + $0x4d0] sm:$0xff] %v2845
        %3039 = vst [vmem:[%s2883 + $0x4d8] sm:$0xff] %v2846
        %3040 = vst [vmem:[%s2883 + $0x4e0] sm:$0xff] %v2847
        %3041 = vst [vmem:[%s2883 + $0x4e8] sm:$0xff] %v2848
        %3042 = vst [vmem:[%s2883 + $0x4f0] sm:$0xff] %v2849
        %3043 = vst [vmem:[%s2883 + $0x4f8] sm:$0xff] %v2850
        %3044 = vst [vmem:[%s2883 + $0x500] sm:$0xff] %v2851
        %3045 = vst [vmem:[%s2883 + $0x508] sm:$0xff] %v2852
        %3046 = vst [vmem:[%s2883 + $0x510] sm:$0xff] %v2853
        %3047 = vst [vmem:[%s2883 + $0x518] sm:$0xff] %v2854
        %3048 = vst [vmem:[%s2883 + $0x520] sm:$0xff] %v2855
        %3049 = vst [vmem:[%s2883 + $0x528] sm:$0xff] %v2856
        %3050 = vst [vmem:[%s2883 + $0x530] sm:$0xff] %v2857
        %3051 = vst [vmem:[%s2883 + $0x538] sm:$0xff] %v2858
        %3052 = vst [vmem:[%s2883 + $0x540] sm:$0xff] %v2859
        %3053 = vst [vmem:[%s2883 + $0x548] sm:$0xff] %v2860
        %3054 = vst [vmem:[%s2883 + $0x550] sm:$0xff] %v2861
        %3055 = vst [vmem:[%s2883 + $0x558] sm:$0xff] %v2862
        %3056 = vst [vmem:[%s2883 + $0x560] sm:$0xff] %v2863
        %3057 = vst [vmem:[%s2883 + $0x568] sm:$0xff] %v2864
        %3058 = vst [vmem:[%s2883 + $0x570] sm:$0xff] %v2865
        %3059 = vst [vmem:[%s2883 + $0x578] sm:$0xff] %v2866
        %3060 = vst [vmem:[%s2883 + $0x580] sm:$0xff] %v2867
        %3061 = vst [vmem:[%s2883 + $0x588] sm:$0xff] %v2868
        %3062 = vst [vmem:[%s2883 + $0x590] sm:$0xff] %v2869
        %3063 = vst [vmem:[%s2883 + $0x598] sm:$0xff] %v2870
        %3064 = vst [vmem:[%s2883 + $0x5a0] sm:$0xff] %v2871
        %3065 = vst [vmem:[%s2883 + $0x5a8] sm:$0xff] %v2872
        %3066 = vst [vmem:[%s2883 + $0x5b0] sm:$0xff] %v2873
        %3067 = vst [vmem:[%s2883 + $0x5b8] sm:$0xff] %v2874
        %3068 = vst [vmem:[%s2883 + $0x5c0] sm:$0xff] %v2875
        %3069 = vst [vmem:[%s2883 + $0x5c8] sm:$0xff] %v2876
        %3070 = vst [vmem:[%s2883 + $0x5d0] sm:$0xff] %v2877
        %3071 = vst [vmem:[%s2883 + $0x5d8] sm:$0xff] %v2878
        %3072 = vst [vmem:[%s2883 + $0x5e0] sm:$0xff] %v2879
        %3073 = vst [vmem:[%s2883 + $0x5e8] sm:$0xff] %v2880
        %3074 = vst [vmem:[%s2883 + $0x5f0] sm:$0xff] %v2881
        %3075 = vst [vmem:[%s2883 + $0x5f8] sm:$0xff] %v2882
        %s3076 = scalar_lea.vmem %s270, 16 [#allocation2]
        %v3077 = vld [vmem:[%s3076] sm:$0xf]
        %v3078 = vld [vmem:[%s3076 + $0x4] sm:$0xf]
        %v3081 = vunpack.c.l.b16 %v3077
        %v3082 = vunpack.c.l.b16 %v3078
        %v3083 = vpack.c.b16 %v3082, %v3081
        %3085 = vmatpush.bf16.msra.mxu0 0
        %3086 = vmatpush.bf16.msra.mxu0 0
        %3087 = vmatpush.bf16.msra.mxu0 0
        %3088 = vmatpush.bf16.msra.mxu0 0
        %3089 = vmatpush.bf16.msra.mxu0 0
        %3090 = vmatpush.bf16.msra.mxu0 0
        %3091 = vmatpush.bf16.msra.mxu0 0
        %3092 = vmatpush.bf16.msra.mxu0 %v3083
        %3093 = vmatmul.bf16.gmra.mxu0 %v455
        %v3094 = vpop.f32.mrf.mxu0
        %v3095 = vadd.f32 0.0, %v3094
        %v3096 = vpop.f32.mrf.mxu0
        %v3097 = vadd.f32 0.0, %v3096
        %3098 = vmatmul.bf16.gmra.mxu0 %v458
        %v3099 = vpop.f32.mrf.mxu0
        %v3100 = vadd.f32 0.0, %v3099
        %v3101 = vpop.f32.mrf.mxu0
        %v3102 = vadd.f32 0.0, %v3101
        %3103 = vmatmul.bf16.gmra.mxu0 %v461
        %v3104 = vpop.f32.mrf.mxu0
        %v3105 = vadd.f32 0.0, %v3104
        %v3106 = vpop.f32.mrf.mxu0
        %v3107 = vadd.f32 0.0, %v3106
        %3108 = vmatmul.bf16.gmra.mxu0 %v464
        %v3109 = vpop.f32.mrf.mxu0
        %v3110 = vadd.f32 0.0, %v3109
        %v3111 = vpop.f32.mrf.mxu0
        %v3112 = vadd.f32 0.0, %v3111
        %3113 = vmatmul.bf16.gmra.mxu0 %v467
        %v3114 = vpop.f32.mrf.mxu0
        %v3115 = vadd.f32 0.0, %v3114
        %v3116 = vpop.f32.mrf.mxu0
        %v3117 = vadd.f32 0.0, %v3116
        %3118 = vmatmul.bf16.gmra.mxu0 %v470
        %v3119 = vpop.f32.mrf.mxu0
        %v3120 = vadd.f32 0.0, %v3119
        %v3121 = vpop.f32.mrf.mxu0
        %v3122 = vadd.f32 0.0, %v3121
        %3123 = vmatmul.bf16.gmra.mxu0 %v473
        %v3124 = vpop.f32.mrf.mxu0
        %v3125 = vadd.f32 0.0, %v3124
        %v3126 = vpop.f32.mrf.mxu0
        %v3127 = vadd.f32 0.0, %v3126
        %3128 = vmatmul.bf16.gmra.mxu0 %v476
        %v3129 = vpop.f32.mrf.mxu0
        %v3130 = vadd.f32 0.0, %v3129
        %v3131 = vpop.f32.mrf.mxu0
        %v3132 = vadd.f32 0.0, %v3131
        %3133 = vmatmul.bf16.gmra.mxu0 %v479
        %v3134 = vpop.f32.mrf.mxu0
        %v3135 = vadd.f32 0.0, %v3134
        %v3136 = vpop.f32.mrf.mxu0
        %v3137 = vadd.f32 0.0, %v3136
        %3138 = vmatmul.bf16.gmra.mxu0 %v482
        %v3139 = vpop.f32.mrf.mxu0
        %v3140 = vadd.f32 0.0, %v3139
        %v3141 = vpop.f32.mrf.mxu0
        %v3142 = vadd.f32 0.0, %v3141
        %3143 = vmatmul.bf16.gmra.mxu0 %v485
        %v3144 = vpop.f32.mrf.mxu0
        %v3145 = vadd.f32 0.0, %v3144
        %v3146 = vpop.f32.mrf.mxu0
        %v3147 = vadd.f32 0.0, %v3146
        %3148 = vmatmul.bf16.gmra.mxu0 %v488
        %v3149 = vpop.f32.mrf.mxu0
        %v3150 = vadd.f32 0.0, %v3149
        %v3151 = vpop.f32.mrf.mxu0
        %v3152 = vadd.f32 0.0, %v3151
        %3153 = vmatmul.bf16.gmra.mxu0 %v491
        %v3154 = vpop.f32.mrf.mxu0
        %v3155 = vadd.f32 0.0, %v3154
        %v3156 = vpop.f32.mrf.mxu0
        %v3157 = vadd.f32 0.0, %v3156
        %3158 = vmatmul.bf16.gmra.mxu0 %v494
        %v3159 = vpop.f32.mrf.mxu0
        %v3160 = vadd.f32 0.0, %v3159
        %v3161 = vpop.f32.mrf.mxu0
        %v3162 = vadd.f32 0.0, %v3161
        %3163 = vmatmul.bf16.gmra.mxu0 %v497
        %v3164 = vpop.f32.mrf.mxu0
        %v3165 = vadd.f32 0.0, %v3164
        %v3166 = vpop.f32.mrf.mxu0
        %v3167 = vadd.f32 0.0, %v3166
        %3168 = vmatmul.bf16.gmra.mxu0 %v500
        %v3169 = vpop.f32.mrf.mxu0
        %v3170 = vadd.f32 0.0, %v3169
        %v3171 = vpop.f32.mrf.mxu0
        %v3172 = vadd.f32 0.0, %v3171
        %3173 = vdwg.mxu0
        %v3174 = vpack.c.bf16 %v3097, %v3095
        %v3175 = vpack.c.bf16 %v3102, %v3100
        %v3176 = vpack.c.bf16 %v3107, %v3105
        %v3177 = vpack.c.bf16 %v3112, %v3110
        %v3178 = vpack.c.bf16 %v3117, %v3115
        %v3179 = vpack.c.bf16 %v3122, %v3120
        %v3180 = vpack.c.bf16 %v3127, %v3125
        %v3181 = vpack.c.bf16 %v3132, %v3130
        %v3182 = vpack.c.bf16 %v3137, %v3135
        %v3183 = vpack.c.bf16 %v3142, %v3140
        %v3184 = vpack.c.bf16 %v3147, %v3145
        %v3185 = vpack.c.bf16 %v3152, %v3150
        %v3186 = vpack.c.bf16 %v3157, %v3155
        %v3187 = vpack.c.bf16 %v3162, %v3160
        %v3188 = vpack.c.bf16 %v3167, %v3165
        %v3189 = vpack.c.bf16 %v3172, %v3170
        %v3191 = vsel %vm453, %v3174, 0
        %v3194 = vsel %vm453, %v3175, 0
        %v3197 = vsel %vm453, %v3176, 0
        %v3200 = vsel %vm453, %v3177, 0
        %v3203 = vsel %vm453, %v3178, 0
        %v3206 = vsel %vm453, %v3179, 0
        %v3209 = vsel %vm453, %v3180, 0
        %v3212 = vsel %vm453, %v3181, 0
        %v3215 = vsel %vm453, %v3182, 0
        %v3218 = vsel %vm453, %v3183, 0
        %v3221 = vsel %vm453, %v3184, 0
        %v3224 = vsel %vm453, %v3185, 0
        %v3227 = vsel %vm453, %v3186, 0
        %v3230 = vsel %vm453, %v3187, 0
        %v3233 = vsel %vm453, %v3188, 0
        %v3236 = vsel %vm453, %v3189, 0
        %3238 = vmatpush.bf16.msra.mxu0 0
        %3239 = vmatpush.bf16.msra.mxu0 0
        %3240 = vmatpush.bf16.msra.mxu0 0
        %3241 = vmatpush.bf16.msra.mxu0 0
        %3242 = vmatpush.bf16.msra.mxu0 0
        %3243 = vmatpush.bf16.msra.mxu0 0
        %3244 = vmatpush.bf16.msra.mxu0 0
        %3245 = vmatpush.bf16.msra.mxu0 %v625
        %3246 = vmatmul.bf16.gmra.mxu0 %v3191
        %v3247 = vpop.f32.mrf.mxu0
        %v3248 = vadd.f32 0.0, %v3247
        %v3249 = vpop.f32.mrf.mxu0
        %v3250 = vadd.f32 0.0, %v3249
        %3251 = vmatmul.bf16.gmra.mxu0 %v3194
        %v3252 = vpop.f32.mrf.mxu0
        %v3253 = vadd.f32 0.0, %v3252
        %v3254 = vpop.f32.mrf.mxu0
        %v3255 = vadd.f32 0.0, %v3254
        %3256 = vmatmul.bf16.gmra.mxu0 %v3197
        %v3257 = vpop.f32.mrf.mxu0
        %v3258 = vadd.f32 0.0, %v3257
        %v3259 = vpop.f32.mrf.mxu0
        %v3260 = vadd.f32 0.0, %v3259
        %3261 = vmatmul.bf16.gmra.mxu0 %v3200
        %v3262 = vpop.f32.mrf.mxu0
        %v3263 = vadd.f32 0.0, %v3262
        %v3264 = vpop.f32.mrf.mxu0
        %v3265 = vadd.f32 0.0, %v3264
        %3266 = vmatmul.bf16.gmra.mxu0 %v3203
        %v3267 = vpop.f32.mrf.mxu0
        %v3268 = vadd.f32 0.0, %v3267
        %v3269 = vpop.f32.mrf.mxu0
        %v3270 = vadd.f32 0.0, %v3269
        %3271 = vmatmul.bf16.gmra.mxu0 %v3206
        %v3272 = vpop.f32.mrf.mxu0
        %v3273 = vadd.f32 0.0, %v3272
        %v3274 = vpop.f32.mrf.mxu0
        %v3275 = vadd.f32 0.0, %v3274
        %3276 = vmatmul.bf16.gmra.mxu0 %v3209
        %v3277 = vpop.f32.mrf.mxu0
        %v3278 = vadd.f32 0.0, %v3277
        %v3279 = vpop.f32.mrf.mxu0
        %v3280 = vadd.f32 0.0, %v3279
        %3281 = vmatmul.bf16.gmra.mxu0 %v3212
        %v3282 = vpop.f32.mrf.mxu0
        %v3283 = vadd.f32 0.0, %v3282
        %v3284 = vpop.f32.mrf.mxu0
        %v3285 = vadd.f32 0.0, %v3284
        %3286 = vmatmul.bf16.gmra.mxu0 %v3215
        %v3287 = vpop.f32.mrf.mxu0
        %v3288 = vadd.f32 0.0, %v3287
        %v3289 = vpop.f32.mrf.mxu0
        %v3290 = vadd.f32 0.0, %v3289
        %3291 = vmatmul.bf16.gmra.mxu0 %v3218
        %v3292 = vpop.f32.mrf.mxu0
        %v3293 = vadd.f32 0.0, %v3292
        %v3294 = vpop.f32.mrf.mxu0
        %v3295 = vadd.f32 0.0, %v3294
        %3296 = vmatmul.bf16.gmra.mxu0 %v3221
        %v3297 = vpop.f32.mrf.mxu0
        %v3298 = vadd.f32 0.0, %v3297
        %v3299 = vpop.f32.mrf.mxu0
        %v3300 = vadd.f32 0.0, %v3299
        %3301 = vmatmul.bf16.gmra.mxu0 %v3224
        %v3302 = vpop.f32.mrf.mxu0
        %v3303 = vadd.f32 0.0, %v3302
        %v3304 = vpop.f32.mrf.mxu0
        %v3305 = vadd.f32 0.0, %v3304
        %3306 = vmatmul.bf16.gmra.mxu0 %v3227
        %v3307 = vpop.f32.mrf.mxu0
        %v3308 = vadd.f32 0.0, %v3307
        %v3309 = vpop.f32.mrf.mxu0
        %v3310 = vadd.f32 0.0, %v3309
        %3311 = vmatmul.bf16.gmra.mxu0 %v3230
        %v3312 = vpop.f32.mrf.mxu0
        %v3313 = vadd.f32 0.0, %v3312
        %v3314 = vpop.f32.mrf.mxu0
        %v3315 = vadd.f32 0.0, %v3314
        %3316 = vmatmul.bf16.gmra.mxu0 %v3233
        %v3317 = vpop.f32.mrf.mxu0
        %v3318 = vadd.f32 0.0, %v3317
        %v3319 = vpop.f32.mrf.mxu0
        %v3320 = vadd.f32 0.0, %v3319
        %3321 = vmatmul.bf16.gmra.mxu0 %v3236
        %v3322 = vpop.f32.mrf.mxu0
        %v3323 = vadd.f32 0.0, %v3322
        %v3324 = vpop.f32.mrf.mxu0
        %v3325 = vadd.f32 0.0, %v3324
        %3326 = vdwg.mxu0
        %3327 = vmatpush.bf16.msra.mxu0 0
        %3328 = vmatpush.bf16.msra.mxu0 0
        %3329 = vmatpush.bf16.msra.mxu0 0
        %3330 = vmatpush.bf16.msra.mxu0 0
        %3331 = vmatpush.bf16.msra.mxu0 0
        %3332 = vmatpush.bf16.msra.mxu0 0
        %3333 = vmatpush.bf16.msra.mxu0 0
        %3334 = vmatpush.bf16.msra.mxu0 %v626
        %3335 = vmatmul.bf16.gmra.mxu0 %v3191
        %v3336 = vpop.f32.mrf.mxu0
        %v3337 = vadd.f32 0.0, %v3336
        %v3338 = vpop.f32.mrf.mxu0
        %v3339 = vadd.f32 0.0, %v3338
        %3340 = vmatmul.bf16.gmra.mxu0 %v3194
        %v3341 = vpop.f32.mrf.mxu0
        %v3342 = vadd.f32 0.0, %v3341
        %v3343 = vpop.f32.mrf.mxu0
        %v3344 = vadd.f32 0.0, %v3343
        %3345 = vmatmul.bf16.gmra.mxu0 %v3197
        %v3346 = vpop.f32.mrf.mxu0
        %v3347 = vadd.f32 0.0, %v3346
        %v3348 = vpop.f32.mrf.mxu0
        %v3349 = vadd.f32 0.0, %v3348
        %3350 = vmatmul.bf16.gmra.mxu0 %v3200
        %v3351 = vpop.f32.mrf.mxu0
        %v3352 = vadd.f32 0.0, %v3351
        %v3353 = vpop.f32.mrf.mxu0
        %v3354 = vadd.f32 0.0, %v3353
        %3355 = vmatmul.bf16.gmra.mxu0 %v3203
        %v3356 = vpop.f32.mrf.mxu0
        %v3357 = vadd.f32 0.0, %v3356
        %v3358 = vpop.f32.mrf.mxu0
        %v3359 = vadd.f32 0.0, %v3358
        %3360 = vmatmul.bf16.gmra.mxu0 %v3206
        %v3361 = vpop.f32.mrf.mxu0
        %v3362 = vadd.f32 0.0, %v3361
        %v3363 = vpop.f32.mrf.mxu0
        %v3364 = vadd.f32 0.0, %v3363
        %3365 = vmatmul.bf16.gmra.mxu0 %v3209
        %v3366 = vpop.f32.mrf.mxu0
        %v3367 = vadd.f32 0.0, %v3366
        %v3368 = vpop.f32.mrf.mxu0
        %v3369 = vadd.f32 0.0, %v3368
        %3370 = vmatmul.bf16.gmra.mxu0 %v3212
        %v3371 = vpop.f32.mrf.mxu0
        %v3372 = vadd.f32 0.0, %v3371
        %v3373 = vpop.f32.mrf.mxu0
        %v3374 = vadd.f32 0.0, %v3373
        %3375 = vmatmul.bf16.gmra.mxu0 %v3215
        %v3376 = vpop.f32.mrf.mxu0
        %v3377 = vadd.f32 0.0, %v3376
        %v3378 = vpop.f32.mrf.mxu0
        %v3379 = vadd.f32 0.0, %v3378
        %3380 = vmatmul.bf16.gmra.mxu0 %v3218
        %v3381 = vpop.f32.mrf.mxu0
        %v3382 = vadd.f32 0.0, %v3381
        %v3383 = vpop.f32.mrf.mxu0
        %v3384 = vadd.f32 0.0, %v3383
        %3385 = vmatmul.bf16.gmra.mxu0 %v3221
        %v3386 = vpop.f32.mrf.mxu0
        %v3387 = vadd.f32 0.0, %v3386
        %v3388 = vpop.f32.mrf.mxu0
        %v3389 = vadd.f32 0.0, %v3388
        %3390 = vmatmul.bf16.gmra.mxu0 %v3224
        %v3391 = vpop.f32.mrf.mxu0
        %v3392 = vadd.f32 0.0, %v3391
        %v3393 = vpop.f32.mrf.mxu0
        %v3394 = vadd.f32 0.0, %v3393
        %3395 = vmatmul.bf16.gmra.mxu0 %v3227
        %v3396 = vpop.f32.mrf.mxu0
        %v3397 = vadd.f32 0.0, %v3396
        %v3398 = vpop.f32.mrf.mxu0
        %v3399 = vadd.f32 0.0, %v3398
        %3400 = vmatmul.bf16.gmra.mxu0 %v3230
        %v3401 = vpop.f32.mrf.mxu0
        %v3402 = vadd.f32 0.0, %v3401
        %v3403 = vpop.f32.mrf.mxu0
        %v3404 = vadd.f32 0.0, %v3403
        %3405 = vmatmul.bf16.gmra.mxu0 %v3233
        %v3406 = vpop.f32.mrf.mxu0
        %v3407 = vadd.f32 0.0, %v3406
        %v3408 = vpop.f32.mrf.mxu0
        %v3409 = vadd.f32 0.0, %v3408
        %3410 = vmatmul.bf16.gmra.mxu0 %v3236
        %v3411 = vpop.f32.mrf.mxu0
        %v3412 = vadd.f32 0.0, %v3411
        %v3413 = vpop.f32.mrf.mxu0
        %v3414 = vadd.f32 0.0, %v3413
        %3415 = vdwg.mxu0
        %3416 = vmatpush.bf16.msra.mxu0 0
        %3417 = vmatpush.bf16.msra.mxu0 0
        %3418 = vmatpush.bf16.msra.mxu0 0
        %3419 = vmatpush.bf16.msra.mxu0 0
        %3420 = vmatpush.bf16.msra.mxu0 0
        %3421 = vmatpush.bf16.msra.mxu0 0
        %3422 = vmatpush.bf16.msra.mxu0 0
        %3423 = vmatpush.bf16.msra.mxu0 %v627
        %3424 = vmatmul.bf16.gmra.mxu0 %v3191
        %v3425 = vpop.f32.mrf.mxu0
        %v3426 = vadd.f32 0.0, %v3425
        %v3427 = vpop.f32.mrf.mxu0
        %v3428 = vadd.f32 0.0, %v3427
        %3429 = vmatmul.bf16.gmra.mxu0 %v3194
        %v3430 = vpop.f32.mrf.mxu0
        %v3431 = vadd.f32 0.0, %v3430
        %v3432 = vpop.f32.mrf.mxu0
        %v3433 = vadd.f32 0.0, %v3432
        %3434 = vmatmul.bf16.gmra.mxu0 %v3197
        %v3435 = vpop.f32.mrf.mxu0
        %v3436 = vadd.f32 0.0, %v3435
        %v3437 = vpop.f32.mrf.mxu0
        %v3438 = vadd.f32 0.0, %v3437
        %3439 = vmatmul.bf16.gmra.mxu0 %v3200
        %v3440 = vpop.f32.mrf.mxu0
        %v3441 = vadd.f32 0.0, %v3440
        %v3442 = vpop.f32.mrf.mxu0
        %v3443 = vadd.f32 0.0, %v3442
        %3444 = vmatmul.bf16.gmra.mxu0 %v3203
        %v3445 = vpop.f32.mrf.mxu0
        %v3446 = vadd.f32 0.0, %v3445
        %v3447 = vpop.f32.mrf.mxu0
        %v3448 = vadd.f32 0.0, %v3447
        %3449 = vmatmul.bf16.gmra.mxu0 %v3206
        %v3450 = vpop.f32.mrf.mxu0
        %v3451 = vadd.f32 0.0, %v3450
        %v3452 = vpop.f32.mrf.mxu0
        %v3453 = vadd.f32 0.0, %v3452
        %3454 = vmatmul.bf16.gmra.mxu0 %v3209
        %v3455 = vpop.f32.mrf.mxu0
        %v3456 = vadd.f32 0.0, %v3455
        %v3457 = vpop.f32.mrf.mxu0
        %v3458 = vadd.f32 0.0, %v3457
        %3459 = vmatmul.bf16.gmra.mxu0 %v3212
        %v3460 = vpop.f32.mrf.mxu0
        %v3461 = vadd.f32 0.0, %v3460
        %v3462 = vpop.f32.mrf.mxu0
        %v3463 = vadd.f32 0.0, %v3462
        %3464 = vmatmul.bf16.gmra.mxu0 %v3215
        %v3465 = vpop.f32.mrf.mxu0
        %v3466 = vadd.f32 0.0, %v3465
        %v3467 = vpop.f32.mrf.mxu0
        %v3468 = vadd.f32 0.0, %v3467
        %3469 = vmatmul.bf16.gmra.mxu0 %v3218
        %v3470 = vpop.f32.mrf.mxu0
        %v3471 = vadd.f32 0.0, %v3470
        %v3472 = vpop.f32.mrf.mxu0
        %v3473 = vadd.f32 0.0, %v3472
        %3474 = vmatmul.bf16.gmra.mxu0 %v3221
        %v3475 = vpop.f32.mrf.mxu0
        %v3476 = vadd.f32 0.0, %v3475
        %v3477 = vpop.f32.mrf.mxu0
        %v3478 = vadd.f32 0.0, %v3477
        %3479 = vmatmul.bf16.gmra.mxu0 %v3224
        %v3480 = vpop.f32.mrf.mxu0
        %v3481 = vadd.f32 0.0, %v3480
        %v3482 = vpop.f32.mrf.mxu0
        %v3483 = vadd.f32 0.0, %v3482
        %3484 = vmatmul.bf16.gmra.mxu0 %v3227
        %v3485 = vpop.f32.mrf.mxu0
        %v3486 = vadd.f32 0.0, %v3485
        %v3487 = vpop.f32.mrf.mxu0
        %v3488 = vadd.f32 0.0, %v3487
        %3489 = vmatmul.bf16.gmra.mxu0 %v3230
        %v3490 = vpop.f32.mrf.mxu0
        %v3491 = vadd.f32 0.0, %v3490
        %v3492 = vpop.f32.mrf.mxu0
        %v3493 = vadd.f32 0.0, %v3492
        %3494 = vmatmul.bf16.gmra.mxu0 %v3233
        %v3495 = vpop.f32.mrf.mxu0
        %v3496 = vadd.f32 0.0, %v3495
        %v3497 = vpop.f32.mrf.mxu0
        %v3498 = vadd.f32 0.0, %v3497
        %3499 = vmatmul.bf16.gmra.mxu0 %v3236
        %v3500 = vpop.f32.mrf.mxu0
        %v3501 = vadd.f32 0.0, %v3500
        %v3502 = vpop.f32.mrf.mxu0
        %v3503 = vadd.f32 0.0, %v3502
        %3504 = vdwg.mxu0
        %3505 = vmatpush.bf16.msra.mxu0 0
        %3506 = vmatpush.bf16.msra.mxu0 0
        %3507 = vmatpush.bf16.msra.mxu0 0
        %3508 = vmatpush.bf16.msra.mxu0 0
        %3509 = vmatpush.bf16.msra.mxu0 0
        %3510 = vmatpush.bf16.msra.mxu0 0
        %3511 = vmatpush.bf16.msra.mxu0 0
        %3512 = vmatpush.bf16.msra.mxu0 %v628
        %3513 = vmatmul.bf16.gmra.mxu0 %v3191
        %v3514 = vpop.f32.mrf.mxu0
        %v3515 = vadd.f32 0.0, %v3514
        %v3516 = vpop.f32.mrf.mxu0
        %v3517 = vadd.f32 0.0, %v3516
        %3518 = vmatmul.bf16.gmra.mxu0 %v3194
        %v3519 = vpop.f32.mrf.mxu0
        %v3520 = vadd.f32 0.0, %v3519
        %v3521 = vpop.f32.mrf.mxu0
        %v3522 = vadd.f32 0.0, %v3521
        %3523 = vmatmul.bf16.gmra.mxu0 %v3197
        %v3524 = vpop.f32.mrf.mxu0
        %v3525 = vadd.f32 0.0, %v3524
        %v3526 = vpop.f32.mrf.mxu0
        %v3527 = vadd.f32 0.0, %v3526
        %3528 = vmatmul.bf16.gmra.mxu0 %v3200
        %v3529 = vpop.f32.mrf.mxu0
        %v3530 = vadd.f32 0.0, %v3529
        %v3531 = vpop.f32.mrf.mxu0
        %v3532 = vadd.f32 0.0, %v3531
        %3533 = vmatmul.bf16.gmra.mxu0 %v3203
        %v3534 = vpop.f32.mrf.mxu0
        %v3535 = vadd.f32 0.0, %v3534
        %v3536 = vpop.f32.mrf.mxu0
        %v3537 = vadd.f32 0.0, %v3536
        %3538 = vmatmul.bf16.gmra.mxu0 %v3206
        %v3539 = vpop.f32.mrf.mxu0
        %v3540 = vadd.f32 0.0, %v3539
        %v3541 = vpop.f32.mrf.mxu0
        %v3542 = vadd.f32 0.0, %v3541
        %3543 = vmatmul.bf16.gmra.mxu0 %v3209
        %v3544 = vpop.f32.mrf.mxu0
        %v3545 = vadd.f32 0.0, %v3544
        %v3546 = vpop.f32.mrf.mxu0
        %v3547 = vadd.f32 0.0, %v3546
        %3548 = vmatmul.bf16.gmra.mxu0 %v3212
        %v3549 = vpop.f32.mrf.mxu0
        %v3550 = vadd.f32 0.0, %v3549
        %v3551 = vpop.f32.mrf.mxu0
        %v3552 = vadd.f32 0.0, %v3551
        %3553 = vmatmul.bf16.gmra.mxu0 %v3215
        %v3554 = vpop.f32.mrf.mxu0
        %v3555 = vadd.f32 0.0, %v3554
        %v3556 = vpop.f32.mrf.mxu0
        %v3557 = vadd.f32 0.0, %v3556
        %3558 = vmatmul.bf16.gmra.mxu0 %v3218
        %v3559 = vpop.f32.mrf.mxu0
        %v3560 = vadd.f32 0.0, %v3559
        %v3561 = vpop.f32.mrf.mxu0
        %v3562 = vadd.f32 0.0, %v3561
        %3563 = vmatmul.bf16.gmra.mxu0 %v3221
        %v3564 = vpop.f32.mrf.mxu0
        %v3565 = vadd.f32 0.0, %v3564
        %v3566 = vpop.f32.mrf.mxu0
        %v3567 = vadd.f32 0.0, %v3566
        %3568 = vmatmul.bf16.gmra.mxu0 %v3224
        %v3569 = vpop.f32.mrf.mxu0
        %v3570 = vadd.f32 0.0, %v3569
        %v3571 = vpop.f32.mrf.mxu0
        %v3572 = vadd.f32 0.0, %v3571
        %3573 = vmatmul.bf16.gmra.mxu0 %v3227
        %v3574 = vpop.f32.mrf.mxu0
        %v3575 = vadd.f32 0.0, %v3574
        %v3576 = vpop.f32.mrf.mxu0
        %v3577 = vadd.f32 0.0, %v3576
        %3578 = vmatmul.bf16.gmra.mxu0 %v3230
        %v3579 = vpop.f32.mrf.mxu0
        %v3580 = vadd.f32 0.0, %v3579
        %v3581 = vpop.f32.mrf.mxu0
        %v3582 = vadd.f32 0.0, %v3581
        %3583 = vmatmul.bf16.gmra.mxu0 %v3233
        %v3584 = vpop.f32.mrf.mxu0
        %v3585 = vadd.f32 0.0, %v3584
        %v3586 = vpop.f32.mrf.mxu0
        %v3587 = vadd.f32 0.0, %v3586
        %3588 = vmatmul.bf16.gmra.mxu0 %v3236
        %v3589 = vpop.f32.mrf.mxu0
        %v3590 = vadd.f32 0.0, %v3589
        %v3591 = vpop.f32.mrf.mxu0
        %v3592 = vadd.f32 0.0, %v3591
        %3593 = vdwg.mxu0
        %3594 = vmatpush.bf16.msra.mxu0 0
        %3595 = vmatpush.bf16.msra.mxu0 0
        %3596 = vmatpush.bf16.msra.mxu0 0
        %3597 = vmatpush.bf16.msra.mxu0 0
        %3598 = vmatpush.bf16.msra.mxu0 0
        %3599 = vmatpush.bf16.msra.mxu0 0
        %3600 = vmatpush.bf16.msra.mxu0 0
        %3601 = vmatpush.bf16.msra.mxu0 %v629
        %3602 = vmatmul.bf16.gmra.mxu0 %v3191
        %v3603 = vpop.f32.mrf.mxu0
        %v3604 = vadd.f32 0.0, %v3603
        %v3605 = vpop.f32.mrf.mxu0
        %v3606 = vadd.f32 0.0, %v3605
        %3607 = vmatmul.bf16.gmra.mxu0 %v3194
        %v3608 = vpop.f32.mrf.mxu0
        %v3609 = vadd.f32 0.0, %v3608
        %v3610 = vpop.f32.mrf.mxu0
        %v3611 = vadd.f32 0.0, %v3610
        %3612 = vmatmul.bf16.gmra.mxu0 %v3197
        %v3613 = vpop.f32.mrf.mxu0
        %v3614 = vadd.f32 0.0, %v3613
        %v3615 = vpop.f32.mrf.mxu0
        %v3616 = vadd.f32 0.0, %v3615
        %3617 = vmatmul.bf16.gmra.mxu0 %v3200
        %v3618 = vpop.f32.mrf.mxu0
        %v3619 = vadd.f32 0.0, %v3618
        %v3620 = vpop.f32.mrf.mxu0
        %v3621 = vadd.f32 0.0, %v3620
        %3622 = vmatmul.bf16.gmra.mxu0 %v3203
        %v3623 = vpop.f32.mrf.mxu0
        %v3624 = vadd.f32 0.0, %v3623
        %v3625 = vpop.f32.mrf.mxu0
        %v3626 = vadd.f32 0.0, %v3625
        %3627 = vmatmul.bf16.gmra.mxu0 %v3206
        %v3628 = vpop.f32.mrf.mxu0
        %v3629 = vadd.f32 0.0, %v3628
        %v3630 = vpop.f32.mrf.mxu0
        %v3631 = vadd.f32 0.0, %v3630
        %3632 = vmatmul.bf16.gmra.mxu0 %v3209
        %v3633 = vpop.f32.mrf.mxu0
        %v3634 = vadd.f32 0.0, %v3633
        %v3635 = vpop.f32.mrf.mxu0
        %v3636 = vadd.f32 0.0, %v3635
        %3637 = vmatmul.bf16.gmra.mxu0 %v3212
        %v3638 = vpop.f32.mrf.mxu0
        %v3639 = vadd.f32 0.0, %v3638
        %v3640 = vpop.f32.mrf.mxu0
        %v3641 = vadd.f32 0.0, %v3640
        %3642 = vmatmul.bf16.gmra.mxu0 %v3215
        %v3643 = vpop.f32.mrf.mxu0
        %v3644 = vadd.f32 0.0, %v3643
        %v3645 = vpop.f32.mrf.mxu0
        %v3646 = vadd.f32 0.0, %v3645
        %3647 = vmatmul.bf16.gmra.mxu0 %v3218
        %v3648 = vpop.f32.mrf.mxu0
        %v3649 = vadd.f32 0.0, %v3648
        %v3650 = vpop.f32.mrf.mxu0
        %v3651 = vadd.f32 0.0, %v3650
        %3652 = vmatmul.bf16.gmra.mxu0 %v3221
        %v3653 = vpop.f32.mrf.mxu0
        %v3654 = vadd.f32 0.0, %v3653
        %v3655 = vpop.f32.mrf.mxu0
        %v3656 = vadd.f32 0.0, %v3655
        %3657 = vmatmul.bf16.gmra.mxu0 %v3224
        %v3658 = vpop.f32.mrf.mxu0
        %v3659 = vadd.f32 0.0, %v3658
        %v3660 = vpop.f32.mrf.mxu0
        %v3661 = vadd.f32 0.0, %v3660
        %3662 = vmatmul.bf16.gmra.mxu0 %v3227
        %v3663 = vpop.f32.mrf.mxu0
        %v3664 = vadd.f32 0.0, %v3663
        %v3665 = vpop.f32.mrf.mxu0
        %v3666 = vadd.f32 0.0, %v3665
        %3667 = vmatmul.bf16.gmra.mxu0 %v3230
        %v3668 = vpop.f32.mrf.mxu0
        %v3669 = vadd.f32 0.0, %v3668
        %v3670 = vpop.f32.mrf.mxu0
        %v3671 = vadd.f32 0.0, %v3670
        %3672 = vmatmul.bf16.gmra.mxu0 %v3233
        %v3673 = vpop.f32.mrf.mxu0
        %v3674 = vadd.f32 0.0, %v3673
        %v3675 = vpop.f32.mrf.mxu0
        %v3676 = vadd.f32 0.0, %v3675
        %3677 = vmatmul.bf16.gmra.mxu0 %v3236
        %v3678 = vpop.f32.mrf.mxu0
        %v3679 = vadd.f32 0.0, %v3678
        %v3680 = vpop.f32.mrf.mxu0
        %v3681 = vadd.f32 0.0, %v3680
        %3682 = vdwg.mxu0
        %3683 = vmatpush.bf16.msra.mxu0 0
        %3684 = vmatpush.bf16.msra.mxu0 0
        %3685 = vmatpush.bf16.msra.mxu0 0
        %3686 = vmatpush.bf16.msra.mxu0 0
        %3687 = vmatpush.bf16.msra.mxu0 0
        %3688 = vmatpush.bf16.msra.mxu0 0
        %3689 = vmatpush.bf16.msra.mxu0 0
        %3690 = vmatpush.bf16.msra.mxu0 %v630
        %3691 = vmatmul.bf16.gmra.mxu0 %v3191
        %v3692 = vpop.f32.mrf.mxu0
        %v3693 = vadd.f32 0.0, %v3692
        %v3694 = vpop.f32.mrf.mxu0
        %v3695 = vadd.f32 0.0, %v3694
        %3696 = vmatmul.bf16.gmra.mxu0 %v3194
        %v3697 = vpop.f32.mrf.mxu0
        %v3698 = vadd.f32 0.0, %v3697
        %v3699 = vpop.f32.mrf.mxu0
        %v3700 = vadd.f32 0.0, %v3699
        %3701 = vmatmul.bf16.gmra.mxu0 %v3197
        %v3702 = vpop.f32.mrf.mxu0
        %v3703 = vadd.f32 0.0, %v3702
        %v3704 = vpop.f32.mrf.mxu0
        %v3705 = vadd.f32 0.0, %v3704
        %3706 = vmatmul.bf16.gmra.mxu0 %v3200
        %v3707 = vpop.f32.mrf.mxu0
        %v3708 = vadd.f32 0.0, %v3707
        %v3709 = vpop.f32.mrf.mxu0
        %v3710 = vadd.f32 0.0, %v3709
        %3711 = vmatmul.bf16.gmra.mxu0 %v3203
        %v3712 = vpop.f32.mrf.mxu0
        %v3713 = vadd.f32 0.0, %v3712
        %v3714 = vpop.f32.mrf.mxu0
        %v3715 = vadd.f32 0.0, %v3714
        %3716 = vmatmul.bf16.gmra.mxu0 %v3206
        %v3717 = vpop.f32.mrf.mxu0
        %v3718 = vadd.f32 0.0, %v3717
        %v3719 = vpop.f32.mrf.mxu0
        %v3720 = vadd.f32 0.0, %v3719
        %3721 = vmatmul.bf16.gmra.mxu0 %v3209
        %v3722 = vpop.f32.mrf.mxu0
        %v3723 = vadd.f32 0.0, %v3722
        %v3724 = vpop.f32.mrf.mxu0
        %v3725 = vadd.f32 0.0, %v3724
        %3726 = vmatmul.bf16.gmra.mxu0 %v3212
        %v3727 = vpop.f32.mrf.mxu0
        %v3728 = vadd.f32 0.0, %v3727
        %v3729 = vpop.f32.mrf.mxu0
        %v3730 = vadd.f32 0.0, %v3729
        %3731 = vmatmul.bf16.gmra.mxu0 %v3215
        %v3732 = vpop.f32.mrf.mxu0
        %v3733 = vadd.f32 0.0, %v3732
        %v3734 = vpop.f32.mrf.mxu0
        %v3735 = vadd.f32 0.0, %v3734
        %3736 = vmatmul.bf16.gmra.mxu0 %v3218
        %v3737 = vpop.f32.mrf.mxu0
        %v3738 = vadd.f32 0.0, %v3737
        %v3739 = vpop.f32.mrf.mxu0
        %v3740 = vadd.f32 0.0, %v3739
        %3741 = vmatmul.bf16.gmra.mxu0 %v3221
        %v3742 = vpop.f32.mrf.mxu0
        %v3743 = vadd.f32 0.0, %v3742
        %v3744 = vpop.f32.mrf.mxu0
        %v3745 = vadd.f32 0.0, %v3744
        %3746 = vmatmul.bf16.gmra.mxu0 %v3224
        %v3747 = vpop.f32.mrf.mxu0
        %v3748 = vadd.f32 0.0, %v3747
        %v3749 = vpop.f32.mrf.mxu0
        %v3750 = vadd.f32 0.0, %v3749
        %3751 = vmatmul.bf16.gmra.mxu0 %v3227
        %v3752 = vpop.f32.mrf.mxu0
        %v3753 = vadd.f32 0.0, %v3752
        %v3754 = vpop.f32.mrf.mxu0
        %v3755 = vadd.f32 0.0, %v3754
        %3756 = vmatmul.bf16.gmra.mxu0 %v3230
        %v3757 = vpop.f32.mrf.mxu0
        %v3758 = vadd.f32 0.0, %v3757
        %v3759 = vpop.f32.mrf.mxu0
        %v3760 = vadd.f32 0.0, %v3759
        %3761 = vmatmul.bf16.gmra.mxu0 %v3233
        %v3762 = vpop.f32.mrf.mxu0
        %v3763 = vadd.f32 0.0, %v3762
        %v3764 = vpop.f32.mrf.mxu0
        %v3765 = vadd.f32 0.0, %v3764
        %3766 = vmatmul.bf16.gmra.mxu0 %v3236
        %v3767 = vpop.f32.mrf.mxu0
        %v3768 = vadd.f32 0.0, %v3767
        %v3769 = vpop.f32.mrf.mxu0
        %v3770 = vadd.f32 0.0, %v3769
        %3771 = vdwg.mxu0
        %s3772 = sld [smem:[#allocation8 + $0x2]]
        %v3773 = vstv %s3772
        %v3774 = vsub.f32 %v3248, %v3773
        %v3775 = vsub.f32 %v3337, %v3773
        %v3776 = vsub.f32 %v3426, %v3773
        %v3777 = vsub.f32 %v3515, %v3773
        %v3778 = vsub.f32 %v3604, %v3773
        %v3779 = vsub.f32 %v3693, %v3773
        %v3780 = vsub.f32 %v3250, %v3773
        %v3781 = vsub.f32 %v3339, %v3773
        %v3782 = vsub.f32 %v3428, %v3773
        %v3783 = vsub.f32 %v3517, %v3773
        %v3784 = vsub.f32 %v3606, %v3773
        %v3785 = vsub.f32 %v3695, %v3773
        %v3786 = vsub.f32 %v3253, %v3773
        %v3787 = vsub.f32 %v3342, %v3773
        %v3788 = vsub.f32 %v3431, %v3773
        %v3789 = vsub.f32 %v3520, %v3773
        %v3790 = vsub.f32 %v3609, %v3773
        %v3791 = vsub.f32 %v3698, %v3773
        %v3792 = vsub.f32 %v3255, %v3773
        %v3793 = vsub.f32 %v3344, %v3773
        %v3794 = vsub.f32 %v3433, %v3773
        %v3795 = vsub.f32 %v3522, %v3773
        %v3796 = vsub.f32 %v3611, %v3773
        %v3797 = vsub.f32 %v3700, %v3773
        %v3798 = vsub.f32 %v3258, %v3773
        %v3799 = vsub.f32 %v3347, %v3773
        %v3800 = vsub.f32 %v3436, %v3773
        %v3801 = vsub.f32 %v3525, %v3773
        %v3802 = vsub.f32 %v3614, %v3773
        %v3803 = vsub.f32 %v3703, %v3773
        %v3804 = vsub.f32 %v3260, %v3773
        %v3805 = vsub.f32 %v3349, %v3773
        %v3806 = vsub.f32 %v3438, %v3773
        %v3807 = vsub.f32 %v3527, %v3773
        %v3808 = vsub.f32 %v3616, %v3773
        %v3809 = vsub.f32 %v3705, %v3773
        %v3810 = vsub.f32 %v3263, %v3773
        %v3811 = vsub.f32 %v3352, %v3773
        %v3812 = vsub.f32 %v3441, %v3773
        %v3813 = vsub.f32 %v3530, %v3773
        %v3814 = vsub.f32 %v3619, %v3773
        %v3815 = vsub.f32 %v3708, %v3773
        %v3816 = vsub.f32 %v3265, %v3773
        %v3817 = vsub.f32 %v3354, %v3773
        %v3818 = vsub.f32 %v3443, %v3773
        %v3819 = vsub.f32 %v3532, %v3773
        %v3820 = vsub.f32 %v3621, %v3773
        %v3821 = vsub.f32 %v3710, %v3773
        %v3822 = vsub.f32 %v3268, %v3773
        %v3823 = vsub.f32 %v3357, %v3773
        %v3824 = vsub.f32 %v3446, %v3773
        %v3825 = vsub.f32 %v3535, %v3773
        %v3826 = vsub.f32 %v3624, %v3773
        %v3827 = vsub.f32 %v3713, %v3773
        %v3828 = vsub.f32 %v3270, %v3773
        %v3829 = vsub.f32 %v3359, %v3773
        %v3830 = vsub.f32 %v3448, %v3773
        %v3831 = vsub.f32 %v3537, %v3773
        %v3832 = vsub.f32 %v3626, %v3773
        %v3833 = vsub.f32 %v3715, %v3773
        %v3834 = vsub.f32 %v3273, %v3773
        %v3835 = vsub.f32 %v3362, %v3773
        %v3836 = vsub.f32 %v3451, %v3773
        %v3837 = vsub.f32 %v3540, %v3773
        %v3838 = vsub.f32 %v3629, %v3773
        %v3839 = vsub.f32 %v3718, %v3773
        %v3840 = vsub.f32 %v3275, %v3773
        %v3841 = vsub.f32 %v3364, %v3773
        %v3842 = vsub.f32 %v3453, %v3773
        %v3843 = vsub.f32 %v3542, %v3773
        %v3844 = vsub.f32 %v3631, %v3773
        %v3845 = vsub.f32 %v3720, %v3773
        %v3846 = vsub.f32 %v3278, %v3773
        %v3847 = vsub.f32 %v3367, %v3773
        %v3848 = vsub.f32 %v3456, %v3773
        %v3849 = vsub.f32 %v3545, %v3773
        %v3850 = vsub.f32 %v3634, %v3773
        %v3851 = vsub.f32 %v3723, %v3773
        %v3852 = vsub.f32 %v3280, %v3773
        %v3853 = vsub.f32 %v3369, %v3773
        %v3854 = vsub.f32 %v3458, %v3773
        %v3855 = vsub.f32 %v3547, %v3773
        %v3856 = vsub.f32 %v3636, %v3773
        %v3857 = vsub.f32 %v3725, %v3773
        %v3858 = vsub.f32 %v3283, %v3773
        %v3859 = vsub.f32 %v3372, %v3773
        %v3860 = vsub.f32 %v3461, %v3773
        %v3861 = vsub.f32 %v3550, %v3773
        %v3862 = vsub.f32 %v3639, %v3773
        %v3863 = vsub.f32 %v3728, %v3773
        %v3864 = vsub.f32 %v3285, %v3773
        %v3865 = vsub.f32 %v3374, %v3773
        %v3866 = vsub.f32 %v3463, %v3773
        %v3867 = vsub.f32 %v3552, %v3773
        %v3868 = vsub.f32 %v3641, %v3773
        %v3869 = vsub.f32 %v3730, %v3773
        %v3870 = vsub.f32 %v3288, %v3773
        %v3871 = vsub.f32 %v3377, %v3773
        %v3872 = vsub.f32 %v3466, %v3773
        %v3873 = vsub.f32 %v3555, %v3773
        %v3874 = vsub.f32 %v3644, %v3773
        %v3875 = vsub.f32 %v3733, %v3773
        %v3876 = vsub.f32 %v3290, %v3773
        %v3877 = vsub.f32 %v3379, %v3773
        %v3878 = vsub.f32 %v3468, %v3773
        %v3879 = vsub.f32 %v3557, %v3773
        %v3880 = vsub.f32 %v3646, %v3773
        %v3881 = vsub.f32 %v3735, %v3773
        %v3882 = vsub.f32 %v3293, %v3773
        %v3883 = vsub.f32 %v3382, %v3773
        %v3884 = vsub.f32 %v3471, %v3773
        %v3885 = vsub.f32 %v3560, %v3773
        %v3886 = vsub.f32 %v3649, %v3773
        %v3887 = vsub.f32 %v3738, %v3773
        %v3888 = vsub.f32 %v3295, %v3773
        %v3889 = vsub.f32 %v3384, %v3773
        %v3890 = vsub.f32 %v3473, %v3773
        %v3891 = vsub.f32 %v3562, %v3773
        %v3892 = vsub.f32 %v3651, %v3773
        %v3893 = vsub.f32 %v3740, %v3773
        %v3894 = vsub.f32 %v3298, %v3773
        %v3895 = vsub.f32 %v3387, %v3773
        %v3896 = vsub.f32 %v3476, %v3773
        %v3897 = vsub.f32 %v3565, %v3773
        %v3898 = vsub.f32 %v3654, %v3773
        %v3899 = vsub.f32 %v3743, %v3773
        %v3900 = vsub.f32 %v3300, %v3773
        %v3901 = vsub.f32 %v3389, %v3773
        %v3902 = vsub.f32 %v3478, %v3773
        %v3903 = vsub.f32 %v3567, %v3773
        %v3904 = vsub.f32 %v3656, %v3773
        %v3905 = vsub.f32 %v3745, %v3773
        %v3906 = vsub.f32 %v3303, %v3773
        %v3907 = vsub.f32 %v3392, %v3773
        %v3908 = vsub.f32 %v3481, %v3773
        %v3909 = vsub.f32 %v3570, %v3773
        %v3910 = vsub.f32 %v3659, %v3773
        %v3911 = vsub.f32 %v3748, %v3773
        %v3912 = vsub.f32 %v3305, %v3773
        %v3913 = vsub.f32 %v3394, %v3773
        %v3914 = vsub.f32 %v3483, %v3773
        %v3915 = vsub.f32 %v3572, %v3773
        %v3916 = vsub.f32 %v3661, %v3773
        %v3917 = vsub.f32 %v3750, %v3773
        %v3918 = vsub.f32 %v3308, %v3773
        %v3919 = vsub.f32 %v3397, %v3773
        %v3920 = vsub.f32 %v3486, %v3773
        %v3921 = vsub.f32 %v3575, %v3773
        %v3922 = vsub.f32 %v3664, %v3773
        %v3923 = vsub.f32 %v3753, %v3773
        %v3924 = vsub.f32 %v3310, %v3773
        %v3925 = vsub.f32 %v3399, %v3773
        %v3926 = vsub.f32 %v3488, %v3773
        %v3927 = vsub.f32 %v3577, %v3773
        %v3928 = vsub.f32 %v3666, %v3773
        %v3929 = vsub.f32 %v3755, %v3773
        %v3930 = vsub.f32 %v3313, %v3773
        %v3931 = vsub.f32 %v3402, %v3773
        %v3932 = vsub.f32 %v3491, %v3773
        %v3933 = vsub.f32 %v3580, %v3773
        %v3934 = vsub.f32 %v3669, %v3773
        %v3935 = vsub.f32 %v3758, %v3773
        %v3936 = vsub.f32 %v3315, %v3773
        %v3937 = vsub.f32 %v3404, %v3773
        %v3938 = vsub.f32 %v3493, %v3773
        %v3939 = vsub.f32 %v3582, %v3773
        %v3940 = vsub.f32 %v3671, %v3773
        %v3941 = vsub.f32 %v3760, %v3773
        %v3942 = vsub.f32 %v3318, %v3773
        %v3943 = vsub.f32 %v3407, %v3773
        %v3944 = vsub.f32 %v3496, %v3773
        %v3945 = vsub.f32 %v3585, %v3773
        %v3946 = vsub.f32 %v3674, %v3773
        %v3947 = vsub.f32 %v3763, %v3773
        %v3948 = vsub.f32 %v3320, %v3773
        %v3949 = vsub.f32 %v3409, %v3773
        %v3950 = vsub.f32 %v3498, %v3773
        %v3951 = vsub.f32 %v3587, %v3773
        %v3952 = vsub.f32 %v3676, %v3773
        %v3953 = vsub.f32 %v3765, %v3773
        %v3954 = vsub.f32 %v3323, %v3773
        %v3955 = vsub.f32 %v3412, %v3773
        %v3956 = vsub.f32 %v3501, %v3773
        %v3957 = vsub.f32 %v3590, %v3773
        %v3958 = vsub.f32 %v3679, %v3773
        %v3959 = vsub.f32 %v3768, %v3773
        %v3960 = vsub.f32 %v3325, %v3773
        %v3961 = vsub.f32 %v3414, %v3773
        %v3962 = vsub.f32 %v3503, %v3773
        %v3963 = vsub.f32 %v3592, %v3773
        %v3964 = vsub.f32 %v3681, %v3773
        %v3965 = vsub.f32 %v3770, %v3773
        %s3966 = sld [smem:[#allocation9 + $0x2]]
        %v3967 = vstv %s3966
        %v3968 = vmul.f32 %v3774, %v3967
        %v3969 = vmul.f32 %v3775, %v3967
        %v3970 = vmul.f32 %v3776, %v3967
        %v3971 = vmul.f32 %v3777, %v3967
        %v3972 = vmul.f32 %v3778, %v3967
        %v3973 = vmul.f32 %v3779, %v3967
        %v3974 = vmul.f32 %v3780, %v3967
        %v3975 = vmul.f32 %v3781, %v3967
        %v3976 = vmul.f32 %v3782, %v3967
        %v3977 = vmul.f32 %v3783, %v3967
        %v3978 = vmul.f32 %v3784, %v3967
        %v3979 = vmul.f32 %v3785, %v3967
        %v3980 = vmul.f32 %v3786, %v3967
        %v3981 = vmul.f32 %v3787, %v3967
        %v3982 = vmul.f32 %v3788, %v3967
        %v3983 = vmul.f32 %v3789, %v3967
        %v3984 = vmul.f32 %v3790, %v3967
        %v3985 = vmul.f32 %v3791, %v3967
        %v3986 = vmul.f32 %v3792, %v3967
        %v3987 = vmul.f32 %v3793, %v3967
        %v3988 = vmul.f32 %v3794, %v3967
        %v3989 = vmul.f32 %v3795, %v3967
        %v3990 = vmul.f32 %v3796, %v3967
        %v3991 = vmul.f32 %v3797, %v3967
        %v3992 = vmul.f32 %v3798, %v3967
        %v3993 = vmul.f32 %v3799, %v3967
        %v3994 = vmul.f32 %v3800, %v3967
        %v3995 = vmul.f32 %v3801, %v3967
        %v3996 = vmul.f32 %v3802, %v3967
        %v3997 = vmul.f32 %v3803, %v3967
        %v3998 = vmul.f32 %v3804, %v3967
        %v3999 = vmul.f32 %v3805, %v3967
        %v4000 = vmul.f32 %v3806, %v3967
        %v4001 = vmul.f32 %v3807, %v3967
        %v4002 = vmul.f32 %v3808, %v3967
        %v4003 = vmul.f32 %v3809, %v3967
        %v4004 = vmul.f32 %v3810, %v3967
        %v4005 = vmul.f32 %v3811, %v3967
        %v4006 = vmul.f32 %v3812, %v3967
        %v4007 = vmul.f32 %v3813, %v3967
        %v4008 = vmul.f32 %v3814, %v3967
        %v4009 = vmul.f32 %v3815, %v3967
        %v4010 = vmul.f32 %v3816, %v3967
        %v4011 = vmul.f32 %v3817, %v3967
        %v4012 = vmul.f32 %v3818, %v3967
        %v4013 = vmul.f32 %v3819, %v3967
        %v4014 = vmul.f32 %v3820, %v3967
        %v4015 = vmul.f32 %v3821, %v3967
        %v4016 = vmul.f32 %v3822, %v3967
        %v4017 = vmul.f32 %v3823, %v3967
        %v4018 = vmul.f32 %v3824, %v3967
        %v4019 = vmul.f32 %v3825, %v3967
        %v4020 = vmul.f32 %v3826, %v3967
        %v4021 = vmul.f32 %v3827, %v3967
        %v4022 = vmul.f32 %v3828, %v3967
        %v4023 = vmul.f32 %v3829, %v3967
        %v4024 = vmul.f32 %v3830, %v3967
        %v4025 = vmul.f32 %v3831, %v3967
        %v4026 = vmul.f32 %v3832, %v3967
        %v4027 = vmul.f32 %v3833, %v3967
        %v4028 = vmul.f32 %v3834, %v3967
        %v4029 = vmul.f32 %v3835, %v3967
        %v4030 = vmul.f32 %v3836, %v3967
        %v4031 = vmul.f32 %v3837, %v3967
        %v4032 = vmul.f32 %v3838, %v3967
        %v4033 = vmul.f32 %v3839, %v3967
        %v4034 = vmul.f32 %v3840, %v3967
        %v4035 = vmul.f32 %v3841, %v3967
        %v4036 = vmul.f32 %v3842, %v3967
        %v4037 = vmul.f32 %v3843, %v3967
        %v4038 = vmul.f32 %v3844, %v3967
        %v4039 = vmul.f32 %v3845, %v3967
        %v4040 = vmul.f32 %v3846, %v3967
        %v4041 = vmul.f32 %v3847, %v3967
        %v4042 = vmul.f32 %v3848, %v3967
        %v4043 = vmul.f32 %v3849, %v3967
        %v4044 = vmul.f32 %v3850, %v3967
        %v4045 = vmul.f32 %v3851, %v3967
        %v4046 = vmul.f32 %v3852, %v3967
        %v4047 = vmul.f32 %v3853, %v3967
        %v4048 = vmul.f32 %v3854, %v3967
        %v4049 = vmul.f32 %v3855, %v3967
        %v4050 = vmul.f32 %v3856, %v3967
        %v4051 = vmul.f32 %v3857, %v3967
        %v4052 = vmul.f32 %v3858, %v3967
        %v4053 = vmul.f32 %v3859, %v3967
        %v4054 = vmul.f32 %v3860, %v3967
        %v4055 = vmul.f32 %v3861, %v3967
        %v4056 = vmul.f32 %v3862, %v3967
        %v4057 = vmul.f32 %v3863, %v3967
        %v4058 = vmul.f32 %v3864, %v3967
        %v4059 = vmul.f32 %v3865, %v3967
        %v4060 = vmul.f32 %v3866, %v3967
        %v4061 = vmul.f32 %v3867, %v3967
        %v4062 = vmul.f32 %v3868, %v3967
        %v4063 = vmul.f32 %v3869, %v3967
        %v4064 = vmul.f32 %v3870, %v3967
        %v4065 = vmul.f32 %v3871, %v3967
        %v4066 = vmul.f32 %v3872, %v3967
        %v4067 = vmul.f32 %v3873, %v3967
        %v4068 = vmul.f32 %v3874, %v3967
        %v4069 = vmul.f32 %v3875, %v3967
        %v4070 = vmul.f32 %v3876, %v3967
        %v4071 = vmul.f32 %v3877, %v3967
        %v4072 = vmul.f32 %v3878, %v3967
        %v4073 = vmul.f32 %v3879, %v3967
        %v4074 = vmul.f32 %v3880, %v3967
        %v4075 = vmul.f32 %v3881, %v3967
        %v4076 = vmul.f32 %v3882, %v3967
        %v4077 = vmul.f32 %v3883, %v3967
        %v4078 = vmul.f32 %v3884, %v3967
        %v4079 = vmul.f32 %v3885, %v3967
        %v4080 = vmul.f32 %v3886, %v3967
        %v4081 = vmul.f32 %v3887, %v3967
        %v4082 = vmul.f32 %v3888, %v3967
        %v4083 = vmul.f32 %v3889, %v3967
        %v4084 = vmul.f32 %v3890, %v3967
        %v4085 = vmul.f32 %v3891, %v3967
        %v4086 = vmul.f32 %v3892, %v3967
        %v4087 = vmul.f32 %v3893, %v3967
        %v4088 = vmul.f32 %v3894, %v3967
        %v4089 = vmul.f32 %v3895, %v3967
        %v4090 = vmul.f32 %v3896, %v3967
        %v4091 = vmul.f32 %v3897, %v3967
        %v4092 = vmul.f32 %v3898, %v3967
        %v4093 = vmul.f32 %v3899, %v3967
        %v4094 = vmul.f32 %v3900, %v3967
        %v4095 = vmul.f32 %v3901, %v3967
        %v4096 = vmul.f32 %v3902, %v3967
        %v4097 = vmul.f32 %v3903, %v3967
        %v4098 = vmul.f32 %v3904, %v3967
        %v4099 = vmul.f32 %v3905, %v3967
        %v4100 = vmul.f32 %v3906, %v3967
        %v4101 = vmul.f32 %v3907, %v3967
        %v4102 = vmul.f32 %v3908, %v3967
        %v4103 = vmul.f32 %v3909, %v3967
        %v4104 = vmul.f32 %v3910, %v3967
        %v4105 = vmul.f32 %v3911, %v3967
        %v4106 = vmul.f32 %v3912, %v3967
        %v4107 = vmul.f32 %v3913, %v3967
        %v4108 = vmul.f32 %v3914, %v3967
        %v4109 = vmul.f32 %v3915, %v3967
        %v4110 = vmul.f32 %v3916, %v3967
        %v4111 = vmul.f32 %v3917, %v3967
        %v4112 = vmul.f32 %v3918, %v3967
        %v4113 = vmul.f32 %v3919, %v3967
        %v4114 = vmul.f32 %v3920, %v3967
        %v4115 = vmul.f32 %v3921, %v3967
        %v4116 = vmul.f32 %v3922, %v3967
        %v4117 = vmul.f32 %v3923, %v3967
        %v4118 = vmul.f32 %v3924, %v3967
        %v4119 = vmul.f32 %v3925, %v3967
        %v4120 = vmul.f32 %v3926, %v3967
        %v4121 = vmul.f32 %v3927, %v3967
        %v4122 = vmul.f32 %v3928, %v3967
        %v4123 = vmul.f32 %v3929, %v3967
        %v4124 = vmul.f32 %v3930, %v3967
        %v4125 = vmul.f32 %v3931, %v3967
        %v4126 = vmul.f32 %v3932, %v3967
        %v4127 = vmul.f32 %v3933, %v3967
        %v4128 = vmul.f32 %v3934, %v3967
        %v4129 = vmul.f32 %v3935, %v3967
        %v4130 = vmul.f32 %v3936, %v3967
        %v4131 = vmul.f32 %v3937, %v3967
        %v4132 = vmul.f32 %v3938, %v3967
        %v4133 = vmul.f32 %v3939, %v3967
        %v4134 = vmul.f32 %v3940, %v3967
        %v4135 = vmul.f32 %v3941, %v3967
        %v4136 = vmul.f32 %v3942, %v3967
        %v4137 = vmul.f32 %v3943, %v3967
        %v4138 = vmul.f32 %v3944, %v3967
        %v4139 = vmul.f32 %v3945, %v3967
        %v4140 = vmul.f32 %v3946, %v3967
        %v4141 = vmul.f32 %v3947, %v3967
        %v4142 = vmul.f32 %v3948, %v3967
        %v4143 = vmul.f32 %v3949, %v3967
        %v4144 = vmul.f32 %v3950, %v3967
        %v4145 = vmul.f32 %v3951, %v3967
        %v4146 = vmul.f32 %v3952, %v3967
        %v4147 = vmul.f32 %v3953, %v3967
        %v4148 = vmul.f32 %v3954, %v3967
        %v4149 = vmul.f32 %v3955, %v3967
        %v4150 = vmul.f32 %v3956, %v3967
        %v4151 = vmul.f32 %v3957, %v3967
        %v4152 = vmul.f32 %v3958, %v3967
        %v4153 = vmul.f32 %v3959, %v3967
        %v4154 = vmul.f32 %v3960, %v3967
        %v4155 = vmul.f32 %v3961, %v3967
        %v4156 = vmul.f32 %v3962, %v3967
        %v4157 = vmul.f32 %v3963, %v3967
        %v4158 = vmul.f32 %v3964, %v3967
        %v4159 = vmul.f32 %v3965, %v3967
        %s4160 = scalar_lea.vmem %s318, 3072 [#allocation11]
        %4161 = vst [vmem:[%s4160] sm:$0xff] %v3968
        %4162 = vst [vmem:[%s4160 + $0x8] sm:$0xff] %v3969
        %4163 = vst [vmem:[%s4160 + $0x10] sm:$0xff] %v3970
        %4164 = vst [vmem:[%s4160 + $0x18] sm:$0xff] %v3971
        %4165 = vst [vmem:[%s4160 + $0x20] sm:$0xff] %v3972
        %4166 = vst [vmem:[%s4160 + $0x28] sm:$0xff] %v3973
        %4167 = vst [vmem:[%s4160 + $0x30] sm:$0xff] %v3974
        %4168 = vst [vmem:[%s4160 + $0x38] sm:$0xff] %v3975
        %4169 = vst [vmem:[%s4160 + $0x40] sm:$0xff] %v3976
        %4170 = vst [vmem:[%s4160 + $0x48] sm:$0xff] %v3977
        %4171 = vst [vmem:[%s4160 + $0x50] sm:$0xff] %v3978
        %4172 = vst [vmem:[%s4160 + $0x58] sm:$0xff] %v3979
        %4173 = vst [vmem:[%s4160 + $0x60] sm:$0xff] %v3980
        %4174 = vst [vmem:[%s4160 + $0x68] sm:$0xff] %v3981
        %4175 = vst [vmem:[%s4160 + $0x70] sm:$0xff] %v3982
        %4176 = vst [vmem:[%s4160 + $0x78] sm:$0xff] %v3983
        %4177 = vst [vmem:[%s4160 + $0x80] sm:$0xff] %v3984
        %4178 = vst [vmem:[%s4160 + $0x88] sm:$0xff] %v3985
        %4179 = vst [vmem:[%s4160 + $0x90] sm:$0xff] %v3986
        %4180 = vst [vmem:[%s4160 + $0x98] sm:$0xff] %v3987
        %4181 = vst [vmem:[%s4160 + $0xa0] sm:$0xff] %v3988
        %4182 = vst [vmem:[%s4160 + $0xa8] sm:$0xff] %v3989
        %4183 = vst [vmem:[%s4160 + $0xb0] sm:$0xff] %v3990
        %4184 = vst [vmem:[%s4160 + $0xb8] sm:$0xff] %v3991
        %4185 = vst [vmem:[%s4160 + $0xc0] sm:$0xff] %v3992
        %4186 = vst [vmem:[%s4160 + $0xc8] sm:$0xff] %v3993
        %4187 = vst [vmem:[%s4160 + $0xd0] sm:$0xff] %v3994
        %4188 = vst [vmem:[%s4160 + $0xd8] sm:$0xff] %v3995
        %4189 = vst [vmem:[%s4160 + $0xe0] sm:$0xff] %v3996
        %4190 = vst [vmem:[%s4160 + $0xe8] sm:$0xff] %v3997
        %4191 = vst [vmem:[%s4160 + $0xf0] sm:$0xff] %v3998
        %4192 = vst [vmem:[%s4160 + $0xf8] sm:$0xff] %v3999
        %4193 = vst [vmem:[%s4160 + $0x100] sm:$0xff] %v4000
        %4194 = vst [vmem:[%s4160 + $0x108] sm:$0xff] %v4001
        %4195 = vst [vmem:[%s4160 + $0x110] sm:$0xff] %v4002
        %4196 = vst [vmem:[%s4160 + $0x118] sm:$0xff] %v4003
        %4197 = vst [vmem:[%s4160 + $0x120] sm:$0xff] %v4004
        %4198 = vst [vmem:[%s4160 + $0x128] sm:$0xff] %v4005
        %4199 = vst [vmem:[%s4160 + $0x130] sm:$0xff] %v4006
        %4200 = vst [vmem:[%s4160 + $0x138] sm:$0xff] %v4007
        %4201 = vst [vmem:[%s4160 + $0x140] sm:$0xff] %v4008
        %4202 = vst [vmem:[%s4160 + $0x148] sm:$0xff] %v4009
        %4203 = vst [vmem:[%s4160 + $0x150] sm:$0xff] %v4010
        %4204 = vst [vmem:[%s4160 + $0x158] sm:$0xff] %v4011
        %4205 = vst [vmem:[%s4160 + $0x160] sm:$0xff] %v4012
        %4206 = vst [vmem:[%s4160 + $0x168] sm:$0xff] %v4013
        %4207 = vst [vmem:[%s4160 + $0x170] sm:$0xff] %v4014
        %4208 = vst [vmem:[%s4160 + $0x178] sm:$0xff] %v4015
        %4209 = vst [vmem:[%s4160 + $0x180] sm:$0xff] %v4016
        %4210 = vst [vmem:[%s4160 + $0x188] sm:$0xff] %v4017
        %4211 = vst [vmem:[%s4160 + $0x190] sm:$0xff] %v4018
        %4212 = vst [vmem:[%s4160 + $0x198] sm:$0xff] %v4019
        %4213 = vst [vmem:[%s4160 + $0x1a0] sm:$0xff] %v4020
        %4214 = vst [vmem:[%s4160 + $0x1a8] sm:$0xff] %v4021
        %4215 = vst [vmem:[%s4160 + $0x1b0] sm:$0xff] %v4022
        %4216 = vst [vmem:[%s4160 + $0x1b8] sm:$0xff] %v4023
        %4217 = vst [vmem:[%s4160 + $0x1c0] sm:$0xff] %v4024
        %4218 = vst [vmem:[%s4160 + $0x1c8] sm:$0xff] %v4025
        %4219 = vst [vmem:[%s4160 + $0x1d0] sm:$0xff] %v4026
        %4220 = vst [vmem:[%s4160 + $0x1d8] sm:$0xff] %v4027
        %4221 = vst [vmem:[%s4160 + $0x1e0] sm:$0xff] %v4028
        %4222 = vst [vmem:[%s4160 + $0x1e8] sm:$0xff] %v4029
        %4223 = vst [vmem:[%s4160 + $0x1f0] sm:$0xff] %v4030
        %4224 = vst [vmem:[%s4160 + $0x1f8] sm:$0xff] %v4031
        %4225 = vst [vmem:[%s4160 + $0x200] sm:$0xff] %v4032
        %4226 = vst [vmem:[%s4160 + $0x208] sm:$0xff] %v4033
        %4227 = vst [vmem:[%s4160 + $0x210] sm:$0xff] %v4034
        %4228 = vst [vmem:[%s4160 + $0x218] sm:$0xff] %v4035
        %4229 = vst [vmem:[%s4160 + $0x220] sm:$0xff] %v4036
        %4230 = vst [vmem:[%s4160 + $0x228] sm:$0xff] %v4037
        %4231 = vst [vmem:[%s4160 + $0x230] sm:$0xff] %v4038
        %4232 = vst [vmem:[%s4160 + $0x238] sm:$0xff] %v4039
        %4233 = vst [vmem:[%s4160 + $0x240] sm:$0xff] %v4040
        %4234 = vst [vmem:[%s4160 + $0x248] sm:$0xff] %v4041
        %4235 = vst [vmem:[%s4160 + $0x250] sm:$0xff] %v4042
        %4236 = vst [vmem:[%s4160 + $0x258] sm:$0xff] %v4043
        %4237 = vst [vmem:[%s4160 + $0x260] sm:$0xff] %v4044
        %4238 = vst [vmem:[%s4160 + $0x268] sm:$0xff] %v4045
        %4239 = vst [vmem:[%s4160 + $0x270] sm:$0xff] %v4046
        %4240 = vst [vmem:[%s4160 + $0x278] sm:$0xff] %v4047
        %4241 = vst [vmem:[%s4160 + $0x280] sm:$0xff] %v4048
        %4242 = vst [vmem:[%s4160 + $0x288] sm:$0xff] %v4049
        %4243 = vst [vmem:[%s4160 + $0x290] sm:$0xff] %v4050
        %4244 = vst [vmem:[%s4160 + $0x298] sm:$0xff] %v4051
        %4245 = vst [vmem:[%s4160 + $0x2a0] sm:$0xff] %v4052
        %4246 = vst [vmem:[%s4160 + $0x2a8] sm:$0xff] %v4053
        %4247 = vst [vmem:[%s4160 + $0x2b0] sm:$0xff] %v4054
        %4248 = vst [vmem:[%s4160 + $0x2b8] sm:$0xff] %v4055
        %4249 = vst [vmem:[%s4160 + $0x2c0] sm:$0xff] %v4056
        %4250 = vst [vmem:[%s4160 + $0x2c8] sm:$0xff] %v4057
        %4251 = vst [vmem:[%s4160 + $0x2d0] sm:$0xff] %v4058
        %4252 = vst [vmem:[%s4160 + $0x2d8] sm:$0xff] %v4059
        %4253 = vst [vmem:[%s4160 + $0x2e0] sm:$0xff] %v4060
        %4254 = vst [vmem:[%s4160 + $0x2e8] sm:$0xff] %v4061
        %4255 = vst [vmem:[%s4160 + $0x2f0] sm:$0xff] %v4062
        %4256 = vst [vmem:[%s4160 + $0x2f8] sm:$0xff] %v4063
        %4257 = vst [vmem:[%s4160 + $0x300] sm:$0xff] %v4064
        %4258 = vst [vmem:[%s4160 + $0x308] sm:$0xff] %v4065
        %4259 = vst [vmem:[%s4160 + $0x310] sm:$0xff] %v4066
        %4260 = vst [vmem:[%s4160 + $0x318] sm:$0xff] %v4067
        %4261 = vst [vmem:[%s4160 + $0x320] sm:$0xff] %v4068
        %4262 = vst [vmem:[%s4160 + $0x328] sm:$0xff] %v4069
        %4263 = vst [vmem:[%s4160 + $0x330] sm:$0xff] %v4070
        %4264 = vst [vmem:[%s4160 + $0x338] sm:$0xff] %v4071
        %4265 = vst [vmem:[%s4160 + $0x340] sm:$0xff] %v4072
        %4266 = vst [vmem:[%s4160 + $0x348] sm:$0xff] %v4073
        %4267 = vst [vmem:[%s4160 + $0x350] sm:$0xff] %v4074
        %4268 = vst [vmem:[%s4160 + $0x358] sm:$0xff] %v4075
        %4269 = vst [vmem:[%s4160 + $0x360] sm:$0xff] %v4076
        %4270 = vst [vmem:[%s4160 + $0x368] sm:$0xff] %v4077
        %4271 = vst [vmem:[%s4160 + $0x370] sm:$0xff] %v4078
        %4272 = vst [vmem:[%s4160 + $0x378] sm:$0xff] %v4079
        %4273 = vst [vmem:[%s4160 + $0x380] sm:$0xff] %v4080
        %4274 = vst [vmem:[%s4160 + $0x388] sm:$0xff] %v4081
        %4275 = vst [vmem:[%s4160 + $0x390] sm:$0xff] %v4082
        %4276 = vst [vmem:[%s4160 + $0x398] sm:$0xff] %v4083
        %4277 = vst [vmem:[%s4160 + $0x3a0] sm:$0xff] %v4084
        %4278 = vst [vmem:[%s4160 + $0x3a8] sm:$0xff] %v4085
        %4279 = vst [vmem:[%s4160 + $0x3b0] sm:$0xff] %v4086
        %4280 = vst [vmem:[%s4160 + $0x3b8] sm:$0xff] %v4087
        %4281 = vst [vmem:[%s4160 + $0x3c0] sm:$0xff] %v4088
        %4282 = vst [vmem:[%s4160 + $0x3c8] sm:$0xff] %v4089
        %4283 = vst [vmem:[%s4160 + $0x3d0] sm:$0xff] %v4090
        %4284 = vst [vmem:[%s4160 + $0x3d8] sm:$0xff] %v4091
        %4285 = vst [vmem:[%s4160 + $0x3e0] sm:$0xff] %v4092
        %4286 = vst [vmem:[%s4160 + $0x3e8] sm:$0xff] %v4093
        %4287 = vst [vmem:[%s4160 + $0x3f0] sm:$0xff] %v4094
        %4288 = vst [vmem:[%s4160 + $0x3f8] sm:$0xff] %v4095
        %4289 = vst [vmem:[%s4160 + $0x400] sm:$0xff] %v4096
        %4290 = vst [vmem:[%s4160 + $0x408] sm:$0xff] %v4097
        %4291 = vst [vmem:[%s4160 + $0x410] sm:$0xff] %v4098
        %4292 = vst [vmem:[%s4160 + $0x418] sm:$0xff] %v4099
        %4293 = vst [vmem:[%s4160 + $0x420] sm:$0xff] %v4100
        %4294 = vst [vmem:[%s4160 + $0x428] sm:$0xff] %v4101
        %4295 = vst [vmem:[%s4160 + $0x430] sm:$0xff] %v4102
        %4296 = vst [vmem:[%s4160 + $0x438] sm:$0xff] %v4103
        %4297 = vst [vmem:[%s4160 + $0x440] sm:$0xff] %v4104
        %4298 = vst [vmem:[%s4160 + $0x448] sm:$0xff] %v4105
        %4299 = vst [vmem:[%s4160 + $0x450] sm:$0xff] %v4106
        %4300 = vst [vmem:[%s4160 + $0x458] sm:$0xff] %v4107
        %4301 = vst [vmem:[%s4160 + $0x460] sm:$0xff] %v4108
        %4302 = vst [vmem:[%s4160 + $0x468] sm:$0xff] %v4109
        %4303 = vst [vmem:[%s4160 + $0x470] sm:$0xff] %v4110
        %4304 = vst [vmem:[%s4160 + $0x478] sm:$0xff] %v4111
        %4305 = vst [vmem:[%s4160 + $0x480] sm:$0xff] %v4112
        %4306 = vst [vmem:[%s4160 + $0x488] sm:$0xff] %v4113
        %4307 = vst [vmem:[%s4160 + $0x490] sm:$0xff] %v4114
        %4308 = vst [vmem:[%s4160 + $0x498] sm:$0xff] %v4115
        %4309 = vst [vmem:[%s4160 + $0x4a0] sm:$0xff] %v4116
        %4310 = vst [vmem:[%s4160 + $0x4a8] sm:$0xff] %v4117
        %4311 = vst [vmem:[%s4160 + $0x4b0] sm:$0xff] %v4118
        %4312 = vst [vmem:[%s4160 + $0x4b8] sm:$0xff] %v4119
        %4313 = vst [vmem:[%s4160 + $0x4c0] sm:$0xff] %v4120
        %4314 = vst [vmem:[%s4160 + $0x4c8] sm:$0xff] %v4121
        %4315 = vst [vmem:[%s4160 + $0x4d0] sm:$0xff] %v4122
        %4316 = vst [vmem:[%s4160 + $0x4d8] sm:$0xff] %v4123
        %4317 = vst [vmem:[%s4160 + $0x4e0] sm:$0xff] %v4124
        %4318 = vst [vmem:[%s4160 + $0x4e8] sm:$0xff] %v4125
        %4319 = vst [vmem:[%s4160 + $0x4f0] sm:$0xff] %v4126
        %4320 = vst [vmem:[%s4160 + $0x4f8] sm:$0xff] %v4127
        %4321 = vst [vmem:[%s4160 + $0x500] sm:$0xff] %v4128
        %4322 = vst [vmem:[%s4160 + $0x508] sm:$0xff] %v4129
        %4323 = vst [vmem:[%s4160 + $0x510] sm:$0xff] %v4130
        %4324 = vst [vmem:[%s4160 + $0x518] sm:$0xff] %v4131
        %4325 = vst [vmem:[%s4160 + $0x520] sm:$0xff] %v4132
        %4326 = vst [vmem:[%s4160 + $0x528] sm:$0xff] %v4133
        %4327 = vst [vmem:[%s4160 + $0x530] sm:$0xff] %v4134
        %4328 = vst [vmem:[%s4160 + $0x538] sm:$0xff] %v4135
        %4329 = vst [vmem:[%s4160 + $0x540] sm:$0xff] %v4136
        %4330 = vst [vmem:[%s4160 + $0x548] sm:$0xff] %v4137
        %4331 = vst [vmem:[%s4160 + $0x550] sm:$0xff] %v4138
        %4332 = vst [vmem:[%s4160 + $0x558] sm:$0xff] %v4139
        %4333 = vst [vmem:[%s4160 + $0x560] sm:$0xff] %v4140
        %4334 = vst [vmem:[%s4160 + $0x568] sm:$0xff] %v4141
        %4335 = vst [vmem:[%s4160 + $0x570] sm:$0xff] %v4142
        %4336 = vst [vmem:[%s4160 + $0x578] sm:$0xff] %v4143
        %4337 = vst [vmem:[%s4160 + $0x580] sm:$0xff] %v4144
        %4338 = vst [vmem:[%s4160 + $0x588] sm:$0xff] %v4145
        %4339 = vst [vmem:[%s4160 + $0x590] sm:$0xff] %v4146
        %4340 = vst [vmem:[%s4160 + $0x598] sm:$0xff] %v4147
        %4341 = vst [vmem:[%s4160 + $0x5a0] sm:$0xff] %v4148
        %4342 = vst [vmem:[%s4160 + $0x5a8] sm:$0xff] %v4149
        %4343 = vst [vmem:[%s4160 + $0x5b0] sm:$0xff] %v4150
        %4344 = vst [vmem:[%s4160 + $0x5b8] sm:$0xff] %v4151
        %4345 = vst [vmem:[%s4160 + $0x5c0] sm:$0xff] %v4152
        %4346 = vst [vmem:[%s4160 + $0x5c8] sm:$0xff] %v4153
        %4347 = vst [vmem:[%s4160 + $0x5d0] sm:$0xff] %v4154
        %4348 = vst [vmem:[%s4160 + $0x5d8] sm:$0xff] %v4155
        %4349 = vst [vmem:[%s4160 + $0x5e0] sm:$0xff] %v4156
        %4350 = vst [vmem:[%s4160 + $0x5e8] sm:$0xff] %v4157
        %4351 = vst [vmem:[%s4160 + $0x5f0] sm:$0xff] %v4158
        %4352 = vst [vmem:[%s4160 + $0x5f8] sm:$0xff] %v4159
        %s4353 = sand.u32 %s162, 1
        %s4354 = scalar_lea.sflag [#allocation4], %s4353
        %s4355 = sand.u32 %s162, 1
        %s4356 = smul.addr %s4355, 4608
        %s4357 = scalar_lea.vmem [#allocation11], %s4356
        // Predicated region
        $region57: #{tpu_custom_call.1} parent=39 // pred_check
          %p4358 = pneg %p172
        $region58: #{tpu_custom_call.1} parent=39 // pred_check_branch
          %4360 = sbr.rel (%p4358) target = $region60
        $region59: #{tpu_custom_call.1} parent=39 // pred_region
          #allocation13 [shape = 'u32[6]{0}', space=smem, size = 0x18, scoped, tag = 'DMA stride descriptor']
          %s4361 = smul.u32 32, %s30
          %4363 = vsyncadd %s4354, 0
          %s4364 = smul.addr %s4361, 6
          %s4365 = smul.addr %s29, 1728
          %s4366 = sadd.s32 %s4364, %s4365
          %s4367 = smul.addr %s4366, 8
          %s4368 = scalar_lea.hbm %s5, %s4367
          %s4370 = sshll.u32 1, 14
          %s4371 = sxor.u32 4294967295, %s4370
          %s4374 = sshll.u32 7, 18
          %s4375 = sxor.u32 4294967295, %s4374
          %s4376 = sand.u32 0, %s4375
          %s4378 = sor.u32 %s4376, 0
          %s4379 = sshll.u32 %s4357, 4
          %s4380 = int_to_ptr.vmem [resolvable:$true] %s4379
          %s4381 = sshll.u32 %s4368, 4
          %s4382 = int_to_ptr.hbm [resolvable:$true] %s4381
          %4388 = sst [smem:[#allocation13]] 24576
          %s4389 = scalar_lea.smem [#allocation13], 1
          %4390 = sst [smem:[%s4389]] 73728
          %s4391 = scalar_lea.smem [#allocation13], 2
          %4392 = sst [smem:[%s4391]] 32
          %s4393 = scalar_lea.smem [#allocation13], 3
          %4394 = sst [smem:[%s4393]] 768
          %s4395 = scalar_lea.smem [#allocation13], 4
          %4396 = sst [smem:[%s4395]] 768
          %s4397 = scalar_lea.smem [#allocation13], 5
          %4398 = sst [smem:[%s4397]] 48
          %4400 = dma.general %s4380, 73728, %s4382, %s4354, [#allocation12], [#allocation13], %s4378, 0
        $region60: #{tpu_custom_call.1} parent=39 // pred_fallthru
          _
      $region40: #{tpu_custom_call.1} parent=5 // pred_fallthru
        _
      %p4401 = scmp.le.s32.totalorder 2, %s20
      // Predicated region
      $region61: #{tpu_custom_call.1} parent=5 // pred_check
        %p4402 = pneg %p4401
      $region62: #{tpu_custom_call.1} parent=5 // pred_check_branch
        %4404 = sbr.rel (%p4402) target = $region64
      $region63: #{tpu_custom_call.1} parent=5 // pred_region
        %s4405 = ssub.s32 %s20, 2
        // Predicated region
        $region65: #{tpu_custom_call.1} parent=63 // pred_check
          %p4406 = pneg %p178
        $region66: #{tpu_custom_call.1} parent=63 // pred_check_branch
          %4408 = sbr.rel (%p4406) target = $region68
        $region67: #{tpu_custom_call.1} parent=63 // pred_region
          %s4409 = sand.u32 %s163, 1
          %s4410 = scalar_lea.sflag [#allocation4], %s4409
          %s4411 = sand.u32 %s163, 1
          %s4412 = smul.addr %s4411, 4608
          %s4413 = scalar_lea.vmem [#allocation11], %s4412
          %4415 = dma.done %s4410, 73728
        $region68: #{tpu_custom_call.1} parent=63 // pred_fallthru
          _
      $region64: #{tpu_custom_call.1} parent=5 // pred_fallthru
        _
    $region6: #{tpu_custom_call.1} parent=1 // loop_footer
      %s24 = sadd.s32 1, %s20
    $region7: #{tpu_custom_call.1} parent=1 // loop_footer_branch
      %19 = sbr.rel target = $region3
    $region8: #{tpu_custom_call.1} parent=1 // loop_exit
      _
    %4416 = vsyncpa [#allocation3], 1
    %s4417 = scalar_lea.sflag [#allocation3], 1
    %4418 = vsyncpa %s4417, 1
    %4419 = vsyncpa [#allocation7], 1
    %4420 = vsyncpa [#allocation4], 1
    %s4421 = scalar_lea.sflag [#allocation4], 1
    %4422 = vsyncpa %s4421, 1
    %4423 = vsyncpa [#allocation5], 1
    %s4424 = scalar_lea.sflag [#allocation5], 1
    %4425 = vsyncpa %s4424, 1
    %4426 = vsyncpa [#allocation10], 1

</llo_original>
